<compile_context>
chip_gen: v7x
topology: tpu7x:2x2x1
jax: 0.10.0
libtpu: 0.0.40
codegen_flags: <defaults>
</compile_context>

<pallas_src>
import functools

import jax
import jax.numpy as jnp
import numpy as np
from jax.experimental import pallas as pl
from jax.experimental.pallas import tpu as pltpu


# ---------------------------------------------------------------------------
# Fused Pallas kernel: conv1 + conv2 + fused value/advantage FC + dueling
# ---------------------------------------------------------------------------

def _dqn_fused_kernel(p1_ref, w1_ref, b1_ref, w2_ref, b2_ref,
                      wh_ref, wt_ref, bh_ref, wo_ref, bo_ref,
                      hp_ref, pos_ref, o_ref, *, batch, oh, ow2, kw2):
    f32 = jnp.float32
    G = oh * batch                                   # rows per output-width position

    # conv1: y1 = relu(p1 @ w1 + b1); rows ordered (ow1, oh, b), channels on lanes.
    y1 = jnp.dot(p1_ref[...], w1_ref[...], preferred_element_type=f32)
    y1 = jnp.maximum(y1 + b1_ref[...], 0.0)          # (OW1*G, 128) f32

    # conv2 (1 x kw2): kw2 shifted (OW2*G,128)x(128,128) MXU matmuls, f32 acc.
    y1c = y1.astype(w2_ref.dtype)                    # bf16 MXU path (default anyway)
    acc2 = jnp.dot(y1c[0:ow2 * G, :], w2_ref[0], preferred_element_type=f32)
    for j in range(1, kw2):
        acc2 = acc2 + jnp.dot(y1c[j * G:j * G + ow2 * G, :], w2_ref[j],
                              preferred_element_type=f32)
    y2 = jnp.maximum(acc2 + b2_ref[...], 0.0)        # (OW2*G, 128) f32

    # Fused value|advantage hidden layer.  The K=768 reduction is split into
    # 128-wide blocks (one per spatial position) so no (B, 768) relayout is
    # needed; the two scalar features are VPU rank-1 additions to the bias.
    acc_h = (bh_ref[...]
             + hp_ref[...] * wt_ref[0:1, :]
             + pos_ref[...] * wt_ref[1:2, :])        # (B, 2*HID) f32
    for s in range(ow2 * oh):
        lhs = y2[s * batch:(s + 1) * batch, :].astype(wh_ref.dtype)
        acc_h = acc_h + jnp.dot(lhs, wh_ref[s * 128:(s + 1) * 128, :],
                                preferred_element_type=f32)
    h = jnp.maximum(acc_h, 0.0)                      # (B, 2*HID)

    # Second layer of both heads as one block-diagonal matmul, then dueling.
    out2 = jnp.dot(h, wo_ref[...], preferred_element_type=f32) + bo_ref[...]
    val = out2[:, 0:1]                               # (B, 1)
    adv = out2[:, 1:]                                # (B, A)
    o_ref[...] = (val + (adv - jnp.mean(adv, axis=1, keepdims=True))
                  ).astype(o_ref.dtype)


def _full_spec(shape):
    return pl.BlockSpec(shape, lambda: (0,) * len(shape))


# ---------------------------------------------------------------------------
# One-time parameter plumbing (outside the hot path)
# ---------------------------------------------------------------------------

def prepare_params(params, h, w, action_count):
    OH, OW2 = h - 2, w - 4
    nconv = 128 * OH * OW2
    hid = params["v1_w"].shape[0]                                    # 512

    w1 = params["conv1_w"].reshape(128, 9).T                          # (9, 128) f32
    b1 = params["conv1_b"][None, :]                                   # (1, 128)
    w2 = jnp.transpose(params["conv2_w"][:, :, 0, :], (2, 1, 0))      # (3, 128in, 128out)
    w2 = w2.astype(jnp.bfloat16)
    b2 = params["conv2_b"][None, :]                                   # (1, 128)

    # Fused hidden weight: columns [0:hid] = value head, [hid:] = advantage head.
    # Rows permuted from torch's NCHW flatten order (c*OH*OW2 + oh*OW2 + ow2) to
    # the kernel's row order ((ow2*OH + oh)*128 + c).
    w_cat = jnp.concatenate([params["v1_w"], params["a1_w"]], axis=0)  # (2*hid, D)
    w_conv = w_cat[:, :nconv].reshape(2 * hid, 128, OH, OW2)
    wh = jnp.transpose(w_conv, (3, 2, 1, 0)).reshape(nconv, 2 * hid)
    wh = wh.astype(jnp.bfloat16)          # weight-BW bound at small batch; f32 acc kept
    wt = w_cat[:, nconv:].T                                            # (2, 2*hid) f32
    bh = jnp.concatenate([params["v1_b"], params["a1_b"]])[None, :]    # (1, 2*hid)

    # Block-diagonal second layer: column 0 = value, columns 1..A = advantage.
    A = action_count
    wo = jnp.zeros((2 * hid, 1 + A), jnp.float32)
    wo = wo.at[:hid, 0].set(params["v2_w"][0])
    wo = wo.at[hid:, 1:].set(params["a2_w"].T)
    bo = jnp.concatenate([params["v2_b"], params["a2_b"]])[None, :]    # (1, 1+A)

    return {"w1": w1, "b1": b1, "w2": w2, "b2": b2, "wh": wh, "wt": wt,
            "bh": bh, "wo": wo, "bo": bo}


def init_params(key, h, w, action_count):
    """Deterministic init matching torch's default (uniform +/- 1/sqrt(fan_in))."""
    keys = jax.random.split(key, 12)

    def u(k, shape, fan_in):
        bound = 1.0 / float(fan_in) ** 0.5
        return jax.random.uniform(k, shape, jnp.float32, -bound, bound)

    oh2, ow2 = h - 2, w - 4                # after 3x3 conv then (1,3) conv
    d = 128 * oh2 * ow2 + 2                # + hasPosition + position
    return {
        "conv1_w": u(keys[0], (128, 1, 3, 3), 1 * 3 * 3),
        "conv1_b": u(keys[1], (128,), 1 * 3 * 3),
        "conv2_w": u(keys[2], (128, 128, 1, 3), 128 * 1 * 3),
        "conv2_b": u(keys[3], (128,), 128 * 1 * 3),
        "v1_w": u(keys[4], (512, d), d),
        "v1_b": u(keys[5], (512,), d),
        "v2_w": u(keys[6], (1, 512), 512),
        "v2_b": u(keys[7], (1,), 512),
        "a1_w": u(keys[8], (512, d), d),
        "a1_b": u(keys[9], (512,), d),
        "a2_w": u(keys[10], (action_count, 512), 512),
        "a2_b": u(keys[11], (action_count,), 512),
    }


# ---------------------------------------------------------------------------
# Forward pass
# ---------------------------------------------------------------------------

def dqn_conv2d_forward(prep, price_data, has_position, position):
    B, H, W = price_data.shape
    OH, OW1, OW2 = H - 2, W - 2, W - 4
    A = prep["wo"].shape[1] - 1

    x = price_data.astype(jnp.float32)
    # conv1 im2col (tiny, ~1.3 KB): rows ordered (ow1, oh, b), cols ordered (i, j).
    cols = [x[:, i:i + OH, j:j + OW1] for i in range(3) for j in range(3)]
    p1 = jnp.stack(cols, axis=-1).transpose(2, 1, 0, 3).reshape(OW1 * OH * B, 9)

    operands = (p1, prep["w1"], prep["b1"], prep["w2"], prep["b2"],
                prep["wh"], prep["wt"], prep["bh"], prep["wo"], prep["bo"],
                has_position.astype(jnp.float32), position.astype(jnp.float32))

    flops = 2 * (p1.shape[0] * 9 * 128                                  # conv1
                 + 3 * OW2 * OH * B * 128 * 128                         # conv2
                 + B * (128 * OH * OW2 + 2) * prep["wh"].shape[1]       # fc hidden
                 + B * prep["wo"].shape[0] * (1 + A))                   # fc out
    bytes_accessed = sum(int(a.size) * a.dtype.itemsize for a in operands) + B * A * 4

    return pl.pallas_call(
        functools.partial(_dqn_fused_kernel, batch=B, oh=OH, ow2=OW2, kw2=3),
        out_shape=jax.ShapeDtypeStruct((B, A), jnp.float32),
        in_specs=[_full_spec(a.shape) for a in operands],
        out_specs=_full_spec((B, A)),
        compiler_params=pltpu.CompilerParams(vmem_limit_bytes=16 * 1024 * 1024),
        cost_estimate=pl.CostEstimate(flops=flops, transcendentals=0,
                                      bytes_accessed=bytes_accessed),
    )(*operands)


# ---------------------------------------------------------------------------
# Pure-JAX reference (mirrors the torch module exactly) for correctness check
# ---------------------------------------------------------------------------

def reference_forward(params, price_data, has_position, position):
    dn = ("NCHW", "OIHW", "NCHW")
    x = price_data[:, None, :, :].astype(jnp.float32)
    y1 = jax.lax.conv_general_dilated(x, params["conv1_w"], (1, 1), "VALID",
                                      dimension_numbers=dn)
    y1 = jax.nn.relu(y1 + params["conv1_b"][None, :, None, None])
    y2 = jax.lax.conv_general_dilated(y1, params["conv2_w"], (1, 1), "VALID",
                                      dimension_numbers=dn)
    y2 = jax.nn.relu(y2 + params["conv2_b"][None, :, None, None])
    conv_out = y2.reshape(price_data.shape[0], -1)
    conv_out = jnp.concatenate([conv_out, has_position, position], axis=1)
    hv = jax.nn.relu(conv_out @ params["v1_w"].T + params["v1_b"])
    val = hv @ params["v2_w"].T + params["v2_b"]
    ha = jax.nn.relu(conv_out @ params["a1_w"].T + params["a1_b"])
    adv = ha @ params["a2_w"].T + params["a2_b"]
    return val + (adv - jnp.mean(adv, axis=1, keepdims=True))


# ---------------------------------------------------------------------------
# Main
# ---------------------------------------------------------------------------

if __name__ == "__main__":
    B, H, W = 2, 8, 5            # priceData per-sample shape (H, W)
    ACTION_COUNT = 3

    key = jax.random.PRNGKey(0)
    k_p, k_price, k_haspos, k_pos = jax.random.split(key, 4)

    params = init_params(k_p, H, W, ACTION_COUNT)
    prep = prepare_params(params, H, W, ACTION_COUNT)   # one-time weight plumbing

    price_data = jax.random.normal(k_price, (B, H, W), jnp.float32)
    has_position = (jax.random.uniform(k_haspos, (B, 1)) > 0.5).astype(jnp.float32)
    position = jax.random.normal(k_pos, (B, 1), jnp.float32)

    out = jax.jit(dqn_conv2d_forward)(prep, price_data, has_position, position)
    out = jax.block_until_ready(out)
    assert out.shape == (B, ACTION_COUNT) and out.dtype == jnp.float32

    ref = reference_forward(params, price_data, has_position, position)
    np.testing.assert_allclose(np.asarray(out), np.asarray(ref), atol=3e-2, rtol=0)
    print("KERNEL_OK")
</pallas_src>

<mosaic_0001>
module attributes {stable_mosaic.version = 11 : i64} {
  func.func @_dqn_fused_kernel(%arg0: memref<36x9xf32, #tpu.memory_space<vmem>>, %arg1: memref<9x128xf32, #tpu.memory_space<vmem>>, %arg2: memref<1x128xf32, #tpu.memory_space<vmem>>, %arg3: memref<3x128x128xbf16, #tpu.memory_space<vmem>>, %arg4: memref<1x128xf32, #tpu.memory_space<vmem>>, %arg5: memref<768x1024xbf16, #tpu.memory_space<vmem>>, %arg6: memref<2x1024xf32, #tpu.memory_space<vmem>>, %arg7: memref<1x1024xf32, #tpu.memory_space<vmem>>, %arg8: memref<1024x4xf32, #tpu.memory_space<vmem>>, %arg9: memref<1x4xf32, #tpu.memory_space<vmem>>, %arg10: memref<2x1xf32, #tpu.memory_space<vmem>>, %arg11: memref<2x1xf32, #tpu.memory_space<vmem>>, %arg12: memref<2x3xf32, #tpu.memory_space<vmem>>) attributes {dimension_semantics = [], scalar_prefetch = 0 : i64, scratch_operands = 0 : i64, tpu.core_type = #tpu.core_type<tc>} {
    %c0 = arith.constant 0 : index
    %c0_0 = arith.constant 0 : index
    %0 = vector.load %arg0[%c0, %c0_0] : memref<36x9xf32, #tpu.memory_space<vmem>>, vector<36x9xf32>
    %c0_1 = arith.constant 0 : index
    %c0_2 = arith.constant 0 : index
    %1 = vector.load %arg1[%c0_1, %c0_2] : memref<9x128xf32, #tpu.memory_space<vmem>>, vector<9x128xf32>
    %cst = arith.constant dense<0.000000e+00> : vector<36x128xf32>
    %2 = tpu.matmul %0, %1, %cst {dimension_numbers = #tpu.dot_dimension_numbers<[1], [0], [0], [1], [0, 0, 1, 1], [], []>} : vector<36x9xf32>, vector<9x128xf32>, vector<36x128xf32> -> vector<36x128xf32>
    %c0_3 = arith.constant 0 : index
    %c0_4 = arith.constant 0 : index
    %3 = vector.load %arg2[%c0_3, %c0_4] : memref<1x128xf32, #tpu.memory_space<vmem>>, vector<1x128xf32>
    %4 = vector.broadcast %3 : vector<1x128xf32> to vector<36x128xf32>
    %5 = arith.addf %2, %4 : vector<36x128xf32>
    %cst_5 = arith.constant 0.000000e+00 : f32
    %6 = vector.broadcast %cst_5 : f32 to vector<36x128xf32>
    %7 = arith.maximumf %5, %6 : vector<36x128xf32>
    %8 = arith.truncf %7 : vector<36x128xf32> to vector<36x128xbf16>
    %9 = vector.extract_strided_slice %8 {offsets = [0, 0], sizes = [12, 128], strides = [1, 1]} : vector<36x128xbf16> to vector<12x128xbf16>
    %c0_6 = arith.constant 0 : index
    %c0_7 = arith.constant 0 : index
    %c0_8 = arith.constant 0 : index
    %10 = vector.load %arg3[%c0_6, %c0_7, %c0_8] : memref<3x128x128xbf16, #tpu.memory_space<vmem>>, vector<1x128x128xbf16>
    %11 = vector.shape_cast %10 : vector<1x128x128xbf16> to vector<128x128xbf16>
    %cst_9 = arith.constant dense<0.000000e+00> : vector<12x128xf32>
    %12 = tpu.matmul %9, %11, %cst_9 {dimension_numbers = #tpu.dot_dimension_numbers<[1], [0], [0], [1], [0, 0, 1, 1], [], []>} : vector<12x128xbf16>, vector<128x128xbf16>, vector<12x128xf32> -> vector<12x128xf32>
    %13 = vector.extract_strided_slice %8 {offsets = [12, 0], sizes = [12, 128], strides = [1, 1]} : vector<36x128xbf16> to vector<12x128xbf16>
    %c1 = arith.constant 1 : index
    %c0_10 = arith.constant 0 : index
    %c0_11 = arith.constant 0 : index
    %14 = vector.load %arg3[%c1, %c0_10, %c0_11] : memref<3x128x128xbf16, #tpu.memory_space<vmem>>, vector<1x128x128xbf16>
    %15 = vector.shape_cast %14 : vector<1x128x128xbf16> to vector<128x128xbf16>
    %cst_12 = arith.constant dense<0.000000e+00> : vector<12x128xf32>
    %16 = tpu.matmul %13, %15, %cst_12 {dimension_numbers = #tpu.dot_dimension_numbers<[1], [0], [0], [1], [0, 0, 1, 1], [], []>} : vector<12x128xbf16>, vector<128x128xbf16>, vector<12x128xf32> -> vector<12x128xf32>
    %17 = arith.addf %12, %16 : vector<12x128xf32>
    %18 = vector.extract_strided_slice %8 {offsets = [24, 0], sizes = [12, 128], strides = [1, 1]} : vector<36x128xbf16> to vector<12x128xbf16>
    %c2 = arith.constant 2 : index
    %c0_13 = arith.constant 0 : index
    %c0_14 = arith.constant 0 : index
    %19 = vector.load %arg3[%c2, %c0_13, %c0_14] : memref<3x128x128xbf16, #tpu.memory_space<vmem>>, vector<1x128x128xbf16>
    %20 = vector.shape_cast %19 : vector<1x128x128xbf16> to vector<128x128xbf16>
    %cst_15 = arith.constant dense<0.000000e+00> : vector<12x128xf32>
    %21 = tpu.matmul %18, %20, %cst_15 {dimension_numbers = #tpu.dot_dimension_numbers<[1], [0], [0], [1], [0, 0, 1, 1], [], []>} : vector<12x128xbf16>, vector<128x128xbf16>, vector<12x128xf32> -> vector<12x128xf32>
    %22 = arith.addf %17, %21 : vector<12x128xf32>
    %c0_16 = arith.constant 0 : index
    %c0_17 = arith.constant 0 : index
    %23 = vector.load %arg4[%c0_16, %c0_17] : memref<1x128xf32, #tpu.memory_space<vmem>>, vector<1x128xf32>
    %24 = vector.broadcast %23 : vector<1x128xf32> to vector<12x128xf32>
    %25 = arith.addf %22, %24 : vector<12x128xf32>
    %cst_18 = arith.constant 0.000000e+00 : f32
    %26 = vector.broadcast %cst_18 : f32 to vector<12x128xf32>
    %27 = arith.maximumf %25, %26 : vector<12x128xf32>
    %c0_19 = arith.constant 0 : index
    %c0_20 = arith.constant 0 : index
    %28 = vector.load %arg7[%c0_19, %c0_20] : memref<1x1024xf32, #tpu.memory_space<vmem>>, vector<1x1024xf32>
    %c0_21 = arith.constant 0 : index
    %c0_22 = arith.constant 0 : index
    %29 = vector.load %arg10[%c0_21, %c0_22] : memref<2x1xf32, #tpu.memory_space<vmem>>, vector<2x1xf32>
    %c0_23 = arith.constant 0 : index
    %c0_24 = arith.constant 0 : index
    %30 = vector.load %arg6[%c0_23, %c0_24] : memref<2x1024xf32, #tpu.memory_space<vmem>>, vector<1x1024xf32>
    %31 = vector.broadcast %29 : vector<2x1xf32> to vector<2x1024xf32>
    %32 = vector.broadcast %30 : vector<1x1024xf32> to vector<2x1024xf32>
    %33 = arith.mulf %31, %32 : vector<2x1024xf32>
    %34 = vector.broadcast %28 : vector<1x1024xf32> to vector<2x1024xf32>
    %35 = arith.addf %34, %33 : vector<2x1024xf32>
    %c0_25 = arith.constant 0 : index
    %c0_26 = arith.constant 0 : index
    %36 = vector.load %arg11[%c0_25, %c0_26] : memref<2x1xf32, #tpu.memory_space<vmem>>, vector<2x1xf32>
    %c1_27 = arith.constant 1 : index
    %c0_28 = arith.constant 0 : index
    %37 = vector.load %arg6[%c1_27, %c0_28] : memref<2x1024xf32, #tpu.memory_space<vmem>>, vector<1x1024xf32>
    %38 = vector.broadcast %36 : vector<2x1xf32> to vector<2x1024xf32>
    %39 = vector.broadcast %37 : vector<1x1024xf32> to vector<2x1024xf32>
    %40 = arith.mulf %38, %39 : vector<2x1024xf32>
    %41 = arith.addf %35, %40 : vector<2x1024xf32>
    %42 = vector.extract_strided_slice %27 {offsets = [0, 0], sizes = [2, 128], strides = [1, 1]} : vector<12x128xf32> to vector<2x128xf32>
    %43 = arith.truncf %42 : vector<2x128xf32> to vector<2x128xbf16>
    %c0_29 = arith.constant 0 : index
    %c0_30 = arith.constant 0 : index
    %44 = vector.load %arg5[%c0_29, %c0_30] : memref<768x1024xbf16, #tpu.memory_space<vmem>>, vector<128x1024xbf16>
    %cst_31 = arith.constant dense<0.000000e+00> : vector<2x1024xf32>
    %45 = tpu.matmul %43, %44, %cst_31 {dimension_numbers = #tpu.dot_dimension_numbers<[1], [0], [0], [1], [0, 0, 1, 1], [], []>} : vector<2x128xbf16>, vector<128x1024xbf16>, vector<2x1024xf32> -> vector<2x1024xf32>
    %46 = arith.addf %41, %45 : vector<2x1024xf32>
    %47 = vector.extract_strided_slice %27 {offsets = [2, 0], sizes = [2, 128], strides = [1, 1]} : vector<12x128xf32> to vector<2x128xf32>
    %48 = arith.truncf %47 : vector<2x128xf32> to vector<2x128xbf16>
    %c128 = arith.constant 128 : index
    %c0_32 = arith.constant 0 : index
    %49 = vector.load %arg5[%c128, %c0_32] : memref<768x1024xbf16, #tpu.memory_space<vmem>>, vector<128x1024xbf16>
    %cst_33 = arith.constant dense<0.000000e+00> : vector<2x1024xf32>
    %50 = tpu.matmul %48, %49, %cst_33 {dimension_numbers = #tpu.dot_dimension_numbers<[1], [0], [0], [1], [0, 0, 1, 1], [], []>} : vector<2x128xbf16>, vector<128x1024xbf16>, vector<2x1024xf32> -> vector<2x1024xf32>
    %51 = arith.addf %46, %50 : vector<2x1024xf32>
    %52 = vector.extract_strided_slice %27 {offsets = [4, 0], sizes = [2, 128], strides = [1, 1]} : vector<12x128xf32> to vector<2x128xf32>
    %53 = arith.truncf %52 : vector<2x128xf32> to vector<2x128xbf16>
    %c256 = arith.constant 256 : index
    %c0_34 = arith.constant 0 : index
    %54 = vector.load %arg5[%c256, %c0_34] : memref<768x1024xbf16, #tpu.memory_space<vmem>>, vector<128x1024xbf16>
    %cst_35 = arith.constant dense<0.000000e+00> : vector<2x1024xf32>
    %55 = tpu.matmul %53, %54, %cst_35 {dimension_numbers = #tpu.dot_dimension_numbers<[1], [0], [0], [1], [0, 0, 1, 1], [], []>} : vector<2x128xbf16>, vector<128x1024xbf16>, vector<2x1024xf32> -> vector<2x1024xf32>
    %56 = arith.addf %51, %55 : vector<2x1024xf32>
    %57 = vector.extract_strided_slice %27 {offsets = [6, 0], sizes = [2, 128], strides = [1, 1]} : vector<12x128xf32> to vector<2x128xf32>
    %58 = arith.truncf %57 : vector<2x128xf32> to vector<2x128xbf16>
    %c384 = arith.constant 384 : index
    %c0_36 = arith.constant 0 : index
    %59 = vector.load %arg5[%c384, %c0_36] : memref<768x1024xbf16, #tpu.memory_space<vmem>>, vector<128x1024xbf16>
    %cst_37 = arith.constant dense<0.000000e+00> : vector<2x1024xf32>
    %60 = tpu.matmul %58, %59, %cst_37 {dimension_numbers = #tpu.dot_dimension_numbers<[1], [0], [0], [1], [0, 0, 1, 1], [], []>} : vector<2x128xbf16>, vector<128x1024xbf16>, vector<2x1024xf32> -> vector<2x1024xf32>
    %61 = arith.addf %56, %60 : vector<2x1024xf32>
    %62 = vector.extract_strided_slice %27 {offsets = [8, 0], sizes = [2, 128], strides = [1, 1]} : vector<12x128xf32> to vector<2x128xf32>
    %63 = arith.truncf %62 : vector<2x128xf32> to vector<2x128xbf16>
    %c512 = arith.constant 512 : index
    %c0_38 = arith.constant 0 : index
    %64 = vector.load %arg5[%c512, %c0_38] : memref<768x1024xbf16, #tpu.memory_space<vmem>>, vector<128x1024xbf16>
    %cst_39 = arith.constant dense<0.000000e+00> : vector<2x1024xf32>
    %65 = tpu.matmul %63, %64, %cst_39 {dimension_numbers = #tpu.dot_dimension_numbers<[1], [0], [0], [1], [0, 0, 1, 1], [], []>} : vector<2x128xbf16>, vector<128x1024xbf16>, vector<2x1024xf32> -> vector<2x1024xf32>
    %66 = arith.addf %61, %65 : vector<2x1024xf32>
    %67 = vector.extract_strided_slice %27 {offsets = [10, 0], sizes = [2, 128], strides = [1, 1]} : vector<12x128xf32> to vector<2x128xf32>
    %68 = arith.truncf %67 : vector<2x128xf32> to vector<2x128xbf16>
    %c640 = arith.constant 640 : index
    %c0_40 = arith.constant 0 : index
    %69 = vector.load %arg5[%c640, %c0_40] : memref<768x1024xbf16, #tpu.memory_space<vmem>>, vector<128x1024xbf16>
    %cst_41 = arith.constant dense<0.000000e+00> : vector<2x1024xf32>
    %70 = tpu.matmul %68, %69, %cst_41 {dimension_numbers = #tpu.dot_dimension_numbers<[1], [0], [0], [1], [0, 0, 1, 1], [], []>} : vector<2x128xbf16>, vector<128x1024xbf16>, vector<2x1024xf32> -> vector<2x1024xf32>
    %71 = arith.addf %66, %70 : vector<2x1024xf32>
    %cst_42 = arith.constant 0.000000e+00 : f32
    %72 = vector.broadcast %cst_42 : f32 to vector<2x1024xf32>
    %73 = arith.maximumf %71, %72 : vector<2x1024xf32>
    %c0_43 = arith.constant 0 : index
    %c0_44 = arith.constant 0 : index
    %74 = vector.load %arg8[%c0_43, %c0_44] : memref<1024x4xf32, #tpu.memory_space<vmem>>, vector<1024x4xf32>
    %cst_45 = arith.constant dense<0.000000e+00> : vector<2x4xf32>
    %75 = tpu.matmul %73, %74, %cst_45 {dimension_numbers = #tpu.dot_dimension_numbers<[1], [0], [0], [1], [0, 0, 1, 1], [], []>} : vector<2x1024xf32>, vector<1024x4xf32>, vector<2x4xf32> -> vector<2x4xf32>
    %c0_46 = arith.constant 0 : index
    %c0_47 = arith.constant 0 : index
    %76 = vector.load %arg9[%c0_46, %c0_47] : memref<1x4xf32, #tpu.memory_space<vmem>>, vector<1x4xf32>
    %77 = vector.broadcast %76 : vector<1x4xf32> to vector<2x4xf32>
    %78 = arith.addf %75, %77 : vector<2x4xf32>
    %79 = vector.extract_strided_slice %78 {offsets = [0, 0], sizes = [2, 1], strides = [1, 1]} : vector<2x4xf32> to vector<2x1xf32>
    %80 = vector.extract_strided_slice %78 {offsets = [0, 1], sizes = [2, 3], strides = [1, 1]} : vector<2x4xf32> to vector<2x3xf32>
    %cst_48 = arith.constant dense<0.000000e+00> : vector<2xf32>
    %81 = vector.multi_reduction <add>, %80, %cst_48 [1] : vector<2x3xf32> to vector<2xf32>
    %82 = vector.shape_cast %81 : vector<2xf32> to vector<2x1xf32>
    %cst_49 = arith.constant 3.000000e+00 : f32
    %83 = vector.broadcast %cst_49 : f32 to vector<2x1xf32>
    %84 = arith.divf %82, %83 : vector<2x1xf32>
    %85 = vector.broadcast %84 : vector<2x1xf32> to vector<2x3xf32>
    %86 = arith.subf %80, %85 : vector<2x3xf32>
    %87 = vector.broadcast %79 : vector<2x1xf32> to vector<2x3xf32>
    %88 = arith.addf %87, %86 : vector<2x3xf32>
    %c0_50 = arith.constant 0 : index
    %c0_51 = arith.constant 0 : index
    %89 = vector.load %arg12[%c0_50, %c0_51] : memref<2x3xf32, #tpu.memory_space<vmem>>, vector<2x3xf32>
    tpu.vector_store %arg12[%c0_50, %c0_51], %88 {strides = array<i32>} : memref<2x3xf32, #tpu.memory_space<vmem>>, vector<2x3xf32>,
    return
  }
}

</mosaic_0001>

<llo_original>
// kernel: dqn_conv2d_forward.1
$region0: #{dqn_conv2d_forward.1}
  #allocation0 [shape = 'u32[]', space=smem, size = 0x4, offset = 0x4, fixed_abs, tag = 'smem constant byte address 0x4 - core index']
  #allocation1 [shape = 'u32[144,128]{1,0:T(1,128)}', space=vmem, size = 0x12000, scoped, tag = 'internal scratch']
  %s0 = inlined_call_operand.vmem [shape: f32[36,9], index: 0, kind: input, shape index: {}]
  %s1 = inlined_call_operand.hbm [shape: f32[9,128], index: 1, kind: input, shape index: {}]
  %s2 = inlined_call_operand.hbm [shape: f32[1,128], index: 2, kind: input, shape index: {}]
  %s3 = inlined_call_operand.hbm [shape: bf16[3,128,128], index: 3, kind: input, shape index: {}]
  %s4 = inlined_call_operand.hbm [shape: f32[1,128], index: 4, kind: input, shape index: {}]
  %s5 = inlined_call_operand.hbm [shape: bf16[768,1024], index: 5, kind: input, shape index: {}]
  %s6 = inlined_call_operand.hbm [shape: f32[2,1024], index: 6, kind: input, shape index: {}]
  %s7 = inlined_call_operand.hbm [shape: f32[1,1024], index: 7, kind: input, shape index: {}]
  %s8 = inlined_call_operand.vmem [shape: f32[1024,4], index: 8, kind: input, shape index: {}]
  %s9 = inlined_call_operand.hbm [shape: f32[1,4], index: 9, kind: input, shape index: {}]
  %s10 = inlined_call_operand.vmem [shape: f32[2,1], index: 10, kind: input, shape index: {}]
  %s11 = inlined_call_operand.vmem [shape: f32[2,1], index: 11, kind: input, shape index: {}]
  %s12 = inlined_call_operand.hbm [shape: f32[2,3], index: 12, kind: output, shape index: {}]
  %s13 = sld [smem:[#allocation0]]
  $region90: #{dqn_conv2d_forward.1} parent=0
    _
  %s15 = ssub.s32 1, %s13
  %s16 = scalar_select 0, %s15, %s13
  $region1: #{dqn_conv2d_forward.1} parent=0
    #allocation2 [shape = 'u8[8192]{0}', space=vmem, size = 0x2000, scoped, tag = 'input window, operand 1, single buffered']
    #allocation3 [shape = 's32[1]{0}', space=sflag, size = 0x4, scoped, tag = 'scoped memory for dqn_conv2d_forward.1']
    #allocation4 [shape = 's32[1]{0}', space=sflag, size = 0x4, scoped, tag = 'scoped memory for dqn_conv2d_forward.1']
    #allocation5 [shape = 'u8[512]{0}', space=vmem, size = 0x400, scoped, tag = 'input window, operand 2, single buffered']
    #allocation6 [shape = 's32[1]{0}', space=sflag, size = 0x4, scoped, tag = 'scoped memory for dqn_conv2d_forward.1']
    #allocation7 [shape = 'u8[98304]{0}', space=vmem, size = 0x18000, scoped, tag = 'input window, operand 3, single buffered']
    #allocation8 [shape = 'u8[512]{0}', space=vmem, size = 0x400, scoped, tag = 'input window, operand 4, single buffered']
    #allocation9 [shape = 's32[1]{0}', space=sflag, size = 0x4, scoped, tag = 'scoped memory for dqn_conv2d_forward.1']
    #allocation10 [shape = 'u8[1572864]{0}', space=vmem, size = 0x180000, scoped, tag = 'input window, operand 5, single buffered']
    #allocation11 [shape = 'u8[8192]{0}', space=vmem, size = 0x2000, scoped, tag = 'input window, operand 6, single buffered']
    #allocation12 [shape = 's32[1]{0}', space=sflag, size = 0x4, scoped, tag = 'scoped memory for dqn_conv2d_forward.1']
    #allocation13 [shape = 'u8[4096]{0}', space=vmem, size = 0x1000, scoped, tag = 'input window, operand 7, single buffered']
    #allocation14 [shape = 'u8[512]{0}', space=vmem, size = 0x400, scoped, tag = 'input window, operand 9, single buffered']
    #allocation15 [shape = 's32[1]{0}', space=sflag, size = 0x4, scoped, tag = 'scoped memory for dqn_conv2d_forward.1']
    #allocation16 [shape = 'u8[1024]{0}', space=vmem, size = 0x400, scoped, tag = 'output window, operand 0, single buffered']
    %17 = vsyncpa [#allocation3], 0
    %18 = vsyncpa [#allocation6], 0
    %19 = vsyncpa [#allocation9], 0
    %20 = vsyncpa [#allocation12], 0
    %21 = vsyncpa [#allocation15], 0
    %22 = vsyncpa [#allocation4], 0
    // Predicated region
    $region2: #{dqn_conv2d_forward.1} parent=1 // pred_check
      _
    $region3: #{dqn_conv2d_forward.1} parent=1 // pred_check_branch
      %24 = sbr.rel (0) target = $region5
    $region4: #{dqn_conv2d_forward.1} parent=1 // pred_region
      _
    $region5: #{dqn_conv2d_forward.1} parent=1 // pred_fallthru
      _
    // Predicated region
    $region6: #{dqn_conv2d_forward.1} parent=1 // pred_check
      _
    $region7: #{dqn_conv2d_forward.1} parent=1 // pred_check_branch
      %26 = sbr.rel (0) target = $region9
    $region8: #{dqn_conv2d_forward.1} parent=1 // pred_region
      %s28 = ssub.s32 256, 256
      %29 = vsyncadd [#allocation3], %s28
      %s30 = sshll.u32 [#allocation2], 4
      %s31 = int_to_ptr.vmem [resolvable:$true] %s30
      %36 = dma.hbm_to_vmem [thread:$0]  %s1, 256, %s31, [#allocation3], 128, 128, 8
    $region9: #{dqn_conv2d_forward.1} parent=1 // pred_fallthru
      _
    // Predicated region
    $region10: #{dqn_conv2d_forward.1} parent=1 // pred_check
      _
    $region11: #{dqn_conv2d_forward.1} parent=1 // pred_check_branch
      %38 = sbr.rel (0) target = $region13
    $region12: #{dqn_conv2d_forward.1} parent=1 // pred_region
      %s40 = ssub.s32 16, 16
      %41 = vsyncadd [#allocation6], %s40
      %s43 = sshll.u32 [#allocation5], 4
      %s44 = int_to_ptr.vmem [resolvable:$true] %s43
      %46 = dma.hbm_to_vmem [thread:$0]  %s2, 16, %s44, [#allocation6]
    $region13: #{dqn_conv2d_forward.1} parent=1 // pred_fallthru
      _
    // Predicated region
    $region14: #{dqn_conv2d_forward.1} parent=1 // pred_check
      _
    $region15: #{dqn_conv2d_forward.1} parent=1 // pred_check_branch
      %48 = sbr.rel (0) target = $region17
    $region16: #{dqn_conv2d_forward.1} parent=1 // pred_region
      %s50 = ssub.s32 3072, 3072
      %51 = vsyncadd [#allocation6], %s50
      %s52 = sshll.u32 [#allocation7], 4
      %s53 = int_to_ptr.vmem [resolvable:$true] %s52
      %58 = dma.hbm_to_vmem [thread:$0]  %s3, 3072, %s53, [#allocation6], 64, 64, 4
    $region17: #{dqn_conv2d_forward.1} parent=1 // pred_fallthru
      _
    // Predicated region
    $region18: #{dqn_conv2d_forward.1} parent=1 // pred_check
      _
    $region19: #{dqn_conv2d_forward.1} parent=1 // pred_check_branch
      %60 = sbr.rel (0) target = $region21
    $region20: #{dqn_conv2d_forward.1} parent=1 // pred_region
      %s62 = ssub.s32 16, 16
      %63 = vsyncadd [#allocation9], %s62
      %s65 = sshll.u32 [#allocation8], 4
      %s66 = int_to_ptr.vmem [resolvable:$true] %s65
      %68 = dma.hbm_to_vmem [thread:$0]  %s4, 16, %s66, [#allocation9]
    $region21: #{dqn_conv2d_forward.1} parent=1 // pred_fallthru
      _
    // Predicated region
    $region22: #{dqn_conv2d_forward.1} parent=1 // pred_check
      _
    $region23: #{dqn_conv2d_forward.1} parent=1 // pred_check_branch
      %70 = sbr.rel (0) target = $region25
    $region24: #{dqn_conv2d_forward.1} parent=1 // pred_region
      %s72 = ssub.s32 49152, 49152
      %73 = vsyncadd [#allocation9], %s72
      %s74 = sshll.u32 [#allocation10], 4
      %s75 = int_to_ptr.vmem [resolvable:$true] %s74
      %80 = dma.hbm_to_vmem [thread:$0]  %s5, 49152, %s75, [#allocation9], 512, 512, 32
    $region25: #{dqn_conv2d_forward.1} parent=1 // pred_fallthru
      _
    // Predicated region
    $region26: #{dqn_conv2d_forward.1} parent=1 // pred_check
      _
    $region27: #{dqn_conv2d_forward.1} parent=1 // pred_check_branch
      %82 = sbr.rel (0) target = $region29
    $region28: #{dqn_conv2d_forward.1} parent=1 // pred_region
      %s84 = ssub.s32 256, 256
      %85 = vsyncadd [#allocation12], %s84
      %s87 = sshll.u32 [#allocation11], 4
      %s88 = int_to_ptr.vmem [resolvable:$true] %s87
      %90 = dma.hbm_to_vmem [thread:$0]  %s6, 256, %s88, [#allocation12]
    $region29: #{dqn_conv2d_forward.1} parent=1 // pred_fallthru
      _
    // Predicated region
    $region30: #{dqn_conv2d_forward.1} parent=1 // pred_check
      _
    $region31: #{dqn_conv2d_forward.1} parent=1 // pred_check_branch
      %92 = sbr.rel (0) target = $region33
    $region32: #{dqn_conv2d_forward.1} parent=1 // pred_region
      %s94 = ssub.s32 128, 128
      %95 = vsyncadd [#allocation12], %s94
      %s97 = sshll.u32 [#allocation13], 4
      %s98 = int_to_ptr.vmem [resolvable:$true] %s97
      %100 = dma.hbm_to_vmem [thread:$0]  %s7, 128, %s98, [#allocation12]
    $region33: #{dqn_conv2d_forward.1} parent=1 // pred_fallthru
      _
    // Predicated region
    $region34: #{dqn_conv2d_forward.1} parent=1 // pred_check
      _
    $region35: #{dqn_conv2d_forward.1} parent=1 // pred_check_branch
      %102 = sbr.rel (0) target = $region37
    $region36: #{dqn_conv2d_forward.1} parent=1 // pred_region
      _
    $region37: #{dqn_conv2d_forward.1} parent=1 // pred_fallthru
      _
    // Predicated region
    $region38: #{dqn_conv2d_forward.1} parent=1 // pred_check
      _
    $region39: #{dqn_conv2d_forward.1} parent=1 // pred_check_branch
      %104 = sbr.rel (0) target = $region41
    $region40: #{dqn_conv2d_forward.1} parent=1 // pred_region
      %s106 = ssub.s32 16, 16
      %107 = vsyncadd [#allocation15], %s106
      %s109 = sshll.u32 [#allocation14], 4
      %s110 = int_to_ptr.vmem [resolvable:$true] %s109
      %112 = dma.hbm_to_vmem [thread:$0]  %s9, 16, %s110, [#allocation15]
    $region41: #{dqn_conv2d_forward.1} parent=1 // pred_fallthru
      _
    // Predicated region
    $region42: #{dqn_conv2d_forward.1} parent=1 // pred_check
      _
    $region43: #{dqn_conv2d_forward.1} parent=1 // pred_check_branch
      %114 = sbr.rel (0) target = $region45
    $region44: #{dqn_conv2d_forward.1} parent=1 // pred_region
      _
    $region45: #{dqn_conv2d_forward.1} parent=1 // pred_fallthru
      _
    // Predicated region
    $region46: #{dqn_conv2d_forward.1} parent=1 // pred_check
      _
    $region47: #{dqn_conv2d_forward.1} parent=1 // pred_check_branch
      %116 = sbr.rel (0) target = $region49
    $region48: #{dqn_conv2d_forward.1} parent=1 // pred_region
      _
    $region49: #{dqn_conv2d_forward.1} parent=1 // pred_fallthru
      _
    // Predicated region
    $region50: #{dqn_conv2d_forward.1} parent=1 // pred_check
      _
    $region51: #{dqn_conv2d_forward.1} parent=1 // pred_check_branch
      %118 = sbr.rel (0) target = $region53
    $region52: #{dqn_conv2d_forward.1} parent=1 // pred_region
      %119 = dma.done [#allocation3], 256
    $region53: #{dqn_conv2d_forward.1} parent=1 // pred_fallthru
      _
    // Predicated region
    $region54: #{dqn_conv2d_forward.1} parent=1 // pred_check
      _
    $region55: #{dqn_conv2d_forward.1} parent=1 // pred_check_branch
      %121 = sbr.rel (0) target = $region57
    $region56: #{dqn_conv2d_forward.1} parent=1 // pred_region
      %122 = dma.done [#allocation6], 16
    $region57: #{dqn_conv2d_forward.1} parent=1 // pred_fallthru
      _
    // Predicated region
    $region58: #{dqn_conv2d_forward.1} parent=1 // pred_check
      _
    $region59: #{dqn_conv2d_forward.1} parent=1 // pred_check_branch
      %124 = sbr.rel (0) target = $region61
    $region60: #{dqn_conv2d_forward.1} parent=1 // pred_region
      %125 = dma.done [#allocation6], 3072
    $region61: #{dqn_conv2d_forward.1} parent=1 // pred_fallthru
      _
    // Predicated region
    $region62: #{dqn_conv2d_forward.1} parent=1 // pred_check
      _
    $region63: #{dqn_conv2d_forward.1} parent=1 // pred_check_branch
      %127 = sbr.rel (0) target = $region65
    $region64: #{dqn_conv2d_forward.1} parent=1 // pred_region
      %128 = dma.done [#allocation9], 16
    $region65: #{dqn_conv2d_forward.1} parent=1 // pred_fallthru
      _
    // Predicated region
    $region66: #{dqn_conv2d_forward.1} parent=1 // pred_check
      _
    $region67: #{dqn_conv2d_forward.1} parent=1 // pred_check_branch
      %130 = sbr.rel (0) target = $region69
    $region68: #{dqn_conv2d_forward.1} parent=1 // pred_region
      %131 = dma.done [#allocation9], 49152
    $region69: #{dqn_conv2d_forward.1} parent=1 // pred_fallthru
      _
    // Predicated region
    $region70: #{dqn_conv2d_forward.1} parent=1 // pred_check
      _
    $region71: #{dqn_conv2d_forward.1} parent=1 // pred_check_branch
      %133 = sbr.rel (0) target = $region73
    $region72: #{dqn_conv2d_forward.1} parent=1 // pred_region
      %134 = dma.done [#allocation12], 256
    $region73: #{dqn_conv2d_forward.1} parent=1 // pred_fallthru
      _
    // Predicated region
    $region74: #{dqn_conv2d_forward.1} parent=1 // pred_check
      _
    $region75: #{dqn_conv2d_forward.1} parent=1 // pred_check_branch
      %136 = sbr.rel (0) target = $region77
    $region76: #{dqn_conv2d_forward.1} parent=1 // pred_region
      %137 = dma.done [#allocation12], 128
    $region77: #{dqn_conv2d_forward.1} parent=1 // pred_fallthru
      _
    // Predicated region
    $region78: #{dqn_conv2d_forward.1} parent=1 // pred_check
      _
    $region79: #{dqn_conv2d_forward.1} parent=1 // pred_check_branch
      %139 = sbr.rel (0) target = $region81
    $region80: #{dqn_conv2d_forward.1} parent=1 // pred_region
      %140 = dma.done [#allocation15], 16
    $region81: #{dqn_conv2d_forward.1} parent=1 // pred_fallthru
      _
    %v142 = vld [vmem:[%s0] sm:$0xff]
    %v143 = vld [vmem:[%s0 + $0x8] sm:$0xff]
    %v144 = vld [vmem:[%s0 + $0x10] sm:$0xff]
    %v145 = vld [vmem:[%s0 + $0x18] sm:$0xff]
    %v146 = vld [vmem:[%s0 + $0x20] sm:$0xf]
    %v147 = vld [vmem:[#allocation2] sm:$0xff]
    %v148 = vld [vmem:[#allocation2 + $0x8] sm:$0x1]
    %v149 = vld [vmem:[#allocation5] sm:$0x1]
    %v151 = vlaneseq
    %v152 = vshrl.u32 %v151, 7
    %v153 = vsub.s32 0, %v152
    %v154 = vrot.slane %v149, %v153
    %vm156 = vcmask 72704
    %v158 = vsel %vm156, %v142, 0
    %v161 = vsel %vm156, %v143, 0
    %v164 = vsel %vm156, %v144, 0
    %v167 = vsel %vm156, %v145, 0
    %v170 = vsel %vm156, %v146, 0
    %vm172 = vcmask 1040384
    %v174 = vsel %vm172, %v148, 0
    %176 = vmatprep.subr.mxu0 0.0
    %177 = vmatpush1.msra.mxu0 %v147
    %178 = vmatprep.subr.mxu0 0.0
    %179 = vmatpush1.msra.mxu0 %v174
    %180 = vmatprep.subr.mxu0 0.0
    %181 = vmatpush1.msra.mxu0 0.0
    %182 = vmatprep.subr.mxu0 0.0
    %183 = vmatpush1.msra.mxu0 0.0
    %184 = vmatprep.subr.mxu0 0.0
    %185 = vmatpush1.msra.mxu0 0.0
    %186 = vmatprep.subr.mxu0 0.0
    %187 = vmatpush1.msra.mxu0 0.0
    %188 = vmatprep.subr.mxu0 0.0
    %189 = vmatpush1.msra.mxu0 0.0
    %190 = vmatprep.subr.mxu0 0.0
    %191 = vmatpush1.msra.mxu0 0.0
    %192 = vmatprep.subr.mxu0 0.0
    %193 = vmatpush1.msra.mxu0 0.0
    %194 = vmatprep.subr.mxu0 0.0
    %195 = vmatpush1.msra.mxu0 0.0
    %196 = vmatprep.subr.mxu0 0.0
    %197 = vmatpush1.msra.mxu0 0.0
    %198 = vmatprep.subr.mxu0 0.0
    %199 = vmatpush1.msra.mxu0 0.0
    %200 = vmatprep.subr.mxu0 0.0
    %201 = vmatpush1.msra.mxu0 0.0
    %202 = vmatprep.subr.mxu0 0.0
    %203 = vmatpush1.msra.mxu0 0.0
    %204 = vmatprep.subr.mxu0 0.0
    %205 = vmatpush1.msra.mxu0 0.0
    %206 = vmatprep.subr.mxu0 0.0
    %207 = vmatpush1.msra.mxu0 0.0
    %208 = vmatprep.subr.mxu0 0.0
    %209 = vmatpush1.msra.mxu0 0.0
    %210 = vmatprep.subr.mxu0 0.0
    %211 = vmatpush1.msra.mxu0 0.0
    %212 = vmatprep.subr.mxu0 0.0
    %213 = vmatpush1.msra.mxu0 0.0
    %214 = vmatprep.subr.mxu0 0.0
    %215 = vmatpush1.msra.mxu0 0.0
    %216 = vmatprep.subr.mxu0 0.0
    %217 = vmatpush1.msra.mxu0 0.0
    %218 = vmatprep.subr.mxu0 0.0
    %219 = vmatpush1.msra.mxu0 0.0
    %220 = vmatprep.subr.mxu0 0.0
    %221 = vmatpush1.msra.mxu0 0.0
    %222 = vmatprep.subr.mxu0 0.0
    %223 = vmatpush1.msra.mxu0 0.0
    %224 = vmatprep.subr.mxu0 0.0
    %225 = vmatpush1.msra.mxu0 0.0
    %226 = vmatprep.subr.mxu0 0.0
    %227 = vmatpush1.msra.mxu0 0.0
    %228 = vmatprep.subr.mxu0 0.0
    %229 = vmatpush1.msra.mxu0 0.0
    %230 = vmatprep.subr.mxu0 0.0
    %231 = vmatpush1.msra.mxu0 0.0
    %232 = vmatprep.subr.mxu0 0.0
    %233 = vmatpush1.msra.mxu0 0.0
    %234 = vmatprep.subr.mxu0 0.0
    %235 = vmatpush1.msra.mxu0 0.0
    %236 = vmatprep.subr.mxu0 0.0
    %237 = vmatpush1.msra.mxu0 0.0
    %238 = vmatprep.subr.mxu0 0.0
    %239 = vmatpush1.msra.mxu0 0.0
    %240 = vmatprep.mubr.f32.mxu0 0.0
    %241 = vmatmul.mubr.f32.gmra.mrb[0].mxu0 %v158
    %v242 = vpop.f32.mrb[0].mxu0
    %v243 = vadd.f32 %v154, %v242
    %v244 = vpop.f32.mrb[0].mxu0
    %245 = vmatprep.mubr.f32.mxu0 0.0
    %246 = vmatmul.mubr.f32.gmra.mrb[0].mxu0 %v161
    %v247 = vpop.f32.mrb[0].mxu0
    %v248 = vadd.f32 %v154, %v247
    %v249 = vpop.f32.mrb[0].mxu0
    %250 = vmatprep.mubr.f32.mxu0 0.0
    %251 = vmatmul.mubr.f32.gmra.mrb[0].mxu0 %v164
    %v252 = vpop.f32.mrb[0].mxu0
    %v253 = vadd.f32 %v154, %v252
    %v254 = vpop.f32.mrb[0].mxu0
    %255 = vmatprep.mubr.f32.mxu0 0.0
    %256 = vmatmul.mubr.f32.gmra.mrb[0].mxu0 %v167
    %v257 = vpop.f32.mrb[0].mxu0
    %v258 = vadd.f32 %v154, %v257
    %v259 = vpop.f32.mrb[0].mxu0
    %260 = vmatprep.mubr.f32.mxu0 0.0
    %261 = vmatmul.mubr.f32.gmra.mrb[0].mxu0 %v170
    %v262 = vpop.f32.mrb[0].mxu0
    %v263 = vadd.f32 %v154, %v262
    %v264 = vpop.f32.mrb[0].mxu0
    %265 = vdwg.mxu0
    %v266 = vmax.f32 %v243, 0.0
    %v267 = vmax.f32 %v248, 0.0
    %v268 = vmax.f32 %v253, 0.0
    %v269 = vmax.f32 %v258, 0.0
    %v270 = vmax.f32 %v263, 0.0
    %v271 = vpack.c.bf16 %v267, %v266
    %v272 = vpack.c.bf16 %v269, %v268
    %v273 = vpack.c.bf16 %v270, %v270
    %v274 = vld [vmem:[#allocation7] sm:$0xf]
    %v275 = vld [vmem:[#allocation7 + $0x4] sm:$0xf]
    %v276 = vld [vmem:[#allocation7 + $0x8] sm:$0xf]
    %v277 = vld [vmem:[#allocation7 + $0xc] sm:$0xf]
    %v278 = vld [vmem:[#allocation7 + $0x10] sm:$0xf]
    %v279 = vld [vmem:[#allocation7 + $0x14] sm:$0xf]
    %v280 = vld [vmem:[#allocation7 + $0x18] sm:$0xf]
    %v281 = vld [vmem:[#allocation7 + $0x1c] sm:$0xf]
    %v282 = vld [vmem:[#allocation7 + $0x20] sm:$0xf]
    %v283 = vld [vmem:[#allocation7 + $0x24] sm:$0xf]
    %v284 = vld [vmem:[#allocation7 + $0x28] sm:$0xf]
    %v285 = vld [vmem:[#allocation7 + $0x2c] sm:$0xf]
    %v286 = vld [vmem:[#allocation7 + $0x30] sm:$0xf]
    %v287 = vld [vmem:[#allocation7 + $0x34] sm:$0xf]
    %v288 = vld [vmem:[#allocation7 + $0x38] sm:$0xf]
    %v289 = vld [vmem:[#allocation7 + $0x3c] sm:$0xf]
    %s290 = scalar_lea.vmem [#allocation7], 64
    %v291 = vld [vmem:[%s290] sm:$0xf]
    %v292 = vld [vmem:[%s290 + $0x4] sm:$0xf]
    %v293 = vld [vmem:[%s290 + $0x8] sm:$0xf]
    %v294 = vld [vmem:[%s290 + $0xc] sm:$0xf]
    %v295 = vld [vmem:[%s290 + $0x10] sm:$0xf]
    %v296 = vld [vmem:[%s290 + $0x14] sm:$0xf]
    %v297 = vld [vmem:[%s290 + $0x18] sm:$0xf]
    %v298 = vld [vmem:[%s290 + $0x1c] sm:$0xf]
    %v299 = vld [vmem:[%s290 + $0x20] sm:$0xf]
    %v300 = vld [vmem:[%s290 + $0x24] sm:$0xf]
    %v301 = vld [vmem:[%s290 + $0x28] sm:$0xf]
    %v302 = vld [vmem:[%s290 + $0x2c] sm:$0xf]
    %v303 = vld [vmem:[%s290 + $0x30] sm:$0xf]
    %v304 = vld [vmem:[%s290 + $0x34] sm:$0xf]
    %v305 = vld [vmem:[%s290 + $0x38] sm:$0xf]
    %v306 = vld [vmem:[%s290 + $0x3c] sm:$0xf]
    %vm309 = vcmask 1041408
    %v310 = vrot.slane %v271, 6
    %v311 = vrot.slane %v272, 6
    %v312 = vsel %vm309, %v310, %v311
    %v330 = vunpack.c.l.b16 %v291
    %v331 = vunpack.c.l.b16 %v292
    %v332 = vunpack.c.l.b16 %v293
    %v333 = vunpack.c.l.b16 %v294
    %v334 = vunpack.c.l.b16 %v295
    %v335 = vunpack.c.l.b16 %v296
    %v336 = vunpack.c.l.b16 %v297
    %v337 = vunpack.c.l.b16 %v298
    %v338 = vunpack.c.l.b16 %v299
    %v339 = vunpack.c.l.b16 %v300
    %v340 = vunpack.c.l.b16 %v301
    %v341 = vunpack.c.l.b16 %v302
    %v342 = vunpack.c.l.b16 %v303
    %v343 = vunpack.c.l.b16 %v304
    %v344 = vunpack.c.l.b16 %v305
    %v345 = vunpack.c.l.b16 %v306
    %v346 = vpack.c.b16 %v331, %v330
    %v347 = vpack.c.b16 %v333, %v332
    %v348 = vpack.c.b16 %v335, %v334
    %v349 = vpack.c.b16 %v337, %v336
    %v350 = vpack.c.b16 %v339, %v338
    %v351 = vpack.c.b16 %v341, %v340
    %v352 = vpack.c.b16 %v343, %v342
    %v353 = vpack.c.b16 %v345, %v344
    %362 = vmatprep.subr.bf16.mxu0 0
    %363 = vmatpush1.bf16.msra.mxu0 %v346
    %364 = vmatprep.subr.bf16.mxu0 0
    %365 = vmatpush1.bf16.msra.mxu0 %v347
    %366 = vmatprep.subr.bf16.mxu0 0
    %367 = vmatpush1.bf16.msra.mxu0 %v348
    %368 = vmatprep.subr.bf16.mxu0 0
    %369 = vmatpush1.bf16.msra.mxu0 %v349
    %370 = vmatprep.subr.bf16.mxu0 0
    %371 = vmatpush1.bf16.msra.mxu0 %v350
    %372 = vmatprep.subr.bf16.mxu0 0
    %373 = vmatpush1.bf16.msra.mxu0 %v351
    %374 = vmatprep.subr.bf16.mxu0 0
    %375 = vmatpush1.bf16.msra.mxu0 %v352
    %376 = vmatprep.subr.bf16.mxu0 0
    %377 = vmatpush1.bf16.msra.mxu0 %v353
    %378 = vmatprep.subr.bf16.mxu0 0
    %379 = vmatpush1.bf16.msra.mxu0 0
    %380 = vmatprep.subr.bf16.mxu0 0
    %381 = vmatpush1.bf16.msra.mxu0 0
    %382 = vmatprep.subr.bf16.mxu0 0
    %383 = vmatpush1.bf16.msra.mxu0 0
    %384 = vmatprep.subr.bf16.mxu0 0
    %385 = vmatpush1.bf16.msra.mxu0 0
    %386 = vmatprep.subr.bf16.mxu0 0
    %387 = vmatpush1.bf16.msra.mxu0 0
    %388 = vmatprep.subr.bf16.mxu0 0
    %389 = vmatpush1.bf16.msra.mxu0 0
    %390 = vmatprep.subr.bf16.mxu0 0
    %391 = vmatpush1.bf16.msra.mxu0 0
    %392 = vmatprep.subr.bf16.mxu0 0
    %393 = vmatpush1.bf16.msra.mxu0 0
    %394 = vmatprep.mubr.bf16.mxu0 0
    %395 = vmatmul.mubr.bf16.gmra.mrb[0].mxu0 %v312
    %v396 = vpop.f32.mrb[0].mxu0
    %v397 = vadd.f32 0.0, %v396
    %v398 = vpop.f32.mrb[0].mxu0
    %v399 = vpop.f32.mrb[0].mxu0
    %v400 = vadd.f32 0.0, %v399
    %v401 = vpop.f32.mrb[0].mxu0
    %402 = vdwg.mxu0
    %v419 = vunpack.c.l.b16 %v274
    %v420 = vunpack.c.l.b16 %v275
    %v421 = vunpack.c.l.b16 %v276
    %v422 = vunpack.c.l.b16 %v277
    %v423 = vunpack.c.l.b16 %v278
    %v424 = vunpack.c.l.b16 %v279
    %v425 = vunpack.c.l.b16 %v280
    %v426 = vunpack.c.l.b16 %v281
    %v427 = vunpack.c.l.b16 %v282
    %v428 = vunpack.c.l.b16 %v283
    %v429 = vunpack.c.l.b16 %v284
    %v430 = vunpack.c.l.b16 %v285
    %v431 = vunpack.c.l.b16 %v286
    %v432 = vunpack.c.l.b16 %v287
    %v433 = vunpack.c.l.b16 %v288
    %v434 = vunpack.c.l.b16 %v289
    %v435 = vpack.c.b16 %v420, %v419
    %v436 = vpack.c.b16 %v422, %v421
    %v437 = vpack.c.b16 %v424, %v423
    %v438 = vpack.c.b16 %v426, %v425
    %v439 = vpack.c.b16 %v428, %v427
    %v440 = vpack.c.b16 %v430, %v429
    %v441 = vpack.c.b16 %v432, %v431
    %v442 = vpack.c.b16 %v434, %v433
    %451 = vmatprep.subr.bf16.mxu0 0
    %452 = vmatpush1.bf16.msra.mxu0 %v435
    %453 = vmatprep.subr.bf16.mxu0 0
    %454 = vmatpush1.bf16.msra.mxu0 %v436
    %455 = vmatprep.subr.bf16.mxu0 0
    %456 = vmatpush1.bf16.msra.mxu0 %v437
    %457 = vmatprep.subr.bf16.mxu0 0
    %458 = vmatpush1.bf16.msra.mxu0 %v438
    %459 = vmatprep.subr.bf16.mxu0 0
    %460 = vmatpush1.bf16.msra.mxu0 %v439
    %461 = vmatprep.subr.bf16.mxu0 0
    %462 = vmatpush1.bf16.msra.mxu0 %v440
    %463 = vmatprep.subr.bf16.mxu0 0
    %464 = vmatpush1.bf16.msra.mxu0 %v441
    %465 = vmatprep.subr.bf16.mxu0 0
    %466 = vmatpush1.bf16.msra.mxu0 %v442
    %467 = vmatprep.subr.bf16.mxu0 0
    %468 = vmatpush1.bf16.msra.mxu0 0
    %469 = vmatprep.subr.bf16.mxu0 0
    %470 = vmatpush1.bf16.msra.mxu0 0
    %471 = vmatprep.subr.bf16.mxu0 0
    %472 = vmatpush1.bf16.msra.mxu0 0
    %473 = vmatprep.subr.bf16.mxu0 0
    %474 = vmatpush1.bf16.msra.mxu0 0
    %475 = vmatprep.subr.bf16.mxu0 0
    %476 = vmatpush1.bf16.msra.mxu0 0
    %477 = vmatprep.subr.bf16.mxu0 0
    %478 = vmatpush1.bf16.msra.mxu0 0
    %479 = vmatprep.subr.bf16.mxu0 0
    %480 = vmatpush1.bf16.msra.mxu0 0
    %481 = vmatprep.subr.bf16.mxu0 0
    %482 = vmatpush1.bf16.msra.mxu0 0
    %483 = vmatprep.mubr.bf16.mxu0 0
    %484 = vmatmul.mubr.bf16.gmra.mrb[0].mxu0 %v271
    %v485 = vpop.f32.mrb[0].mxu0
    %v486 = vadd.f32 %v397, %v485
    %v487 = vpop.f32.mrb[0].mxu0
    %v488 = vpop.f32.mrb[0].mxu0
    %v489 = vadd.f32 %v400, %v488
    %v490 = vpop.f32.mrb[0].mxu0
    %491 = vdwg.mxu0
    %s492 = scalar_lea.vmem [#allocation7], 128
    %v493 = vld [vmem:[%s492] sm:$0xf]
    %v494 = vld [vmem:[%s492 + $0x4] sm:$0xf]
    %v495 = vld [vmem:[%s492 + $0x8] sm:$0xf]
    %v496 = vld [vmem:[%s492 + $0xc] sm:$0xf]
    %v497 = vld [vmem:[%s492 + $0x10] sm:$0xf]
    %v498 = vld [vmem:[%s492 + $0x14] sm:$0xf]
    %v499 = vld [vmem:[%s492 + $0x18] sm:$0xf]
    %v500 = vld [vmem:[%s492 + $0x1c] sm:$0xf]
    %v501 = vld [vmem:[%s492 + $0x20] sm:$0xf]
    %v502 = vld [vmem:[%s492 + $0x24] sm:$0xf]
    %v503 = vld [vmem:[%s492 + $0x28] sm:$0xf]
    %v504 = vld [vmem:[%s492 + $0x2c] sm:$0xf]
    %v505 = vld [vmem:[%s492 + $0x30] sm:$0xf]
    %v506 = vld [vmem:[%s492 + $0x34] sm:$0xf]
    %v507 = vld [vmem:[%s492 + $0x38] sm:$0xf]
    %v508 = vld [vmem:[%s492 + $0x3c] sm:$0xf]
    %vm510 = vcmask 1043456
    %v511 = vrot.slane %v272, 4
    %v512 = vrot.slane %v273, 4
    %v513 = vsel %vm510, %v511, %v512
    %v531 = vunpack.c.l.b16 %v493
    %v532 = vunpack.c.l.b16 %v494
    %v533 = vunpack.c.l.b16 %v495
    %v534 = vunpack.c.l.b16 %v496
    %v535 = vunpack.c.l.b16 %v497
    %v536 = vunpack.c.l.b16 %v498
    %v537 = vunpack.c.l.b16 %v499
    %v538 = vunpack.c.l.b16 %v500
    %v539 = vunpack.c.l.b16 %v501
    %v540 = vunpack.c.l.b16 %v502
    %v541 = vunpack.c.l.b16 %v503
    %v542 = vunpack.c.l.b16 %v504
    %v543 = vunpack.c.l.b16 %v505
    %v544 = vunpack.c.l.b16 %v506
    %v545 = vunpack.c.l.b16 %v507
    %v546 = vunpack.c.l.b16 %v508
    %v547 = vpack.c.b16 %v532, %v531
    %v548 = vpack.c.b16 %v534, %v533
    %v549 = vpack.c.b16 %v536, %v535
    %v550 = vpack.c.b16 %v538, %v537
    %v551 = vpack.c.b16 %v540, %v539
    %v552 = vpack.c.b16 %v542, %v541
    %v553 = vpack.c.b16 %v544, %v543
    %v554 = vpack.c.b16 %v546, %v545
    %563 = vmatprep.subr.bf16.mxu0 0
    %564 = vmatpush1.bf16.msra.mxu0 %v547
    %565 = vmatprep.subr.bf16.mxu0 0
    %566 = vmatpush1.bf16.msra.mxu0 %v548
    %567 = vmatprep.subr.bf16.mxu0 0
    %568 = vmatpush1.bf16.msra.mxu0 %v549
    %569 = vmatprep.subr.bf16.mxu0 0
    %570 = vmatpush1.bf16.msra.mxu0 %v550
    %571 = vmatprep.subr.bf16.mxu0 0
    %572 = vmatpush1.bf16.msra.mxu0 %v551
    %573 = vmatprep.subr.bf16.mxu0 0
    %574 = vmatpush1.bf16.msra.mxu0 %v552
    %575 = vmatprep.subr.bf16.mxu0 0
    %576 = vmatpush1.bf16.msra.mxu0 %v553
    %577 = vmatprep.subr.bf16.mxu0 0
    %578 = vmatpush1.bf16.msra.mxu0 %v554
    %579 = vmatprep.subr.bf16.mxu0 0
    %580 = vmatpush1.bf16.msra.mxu0 0
    %581 = vmatprep.subr.bf16.mxu0 0
    %582 = vmatpush1.bf16.msra.mxu0 0
    %583 = vmatprep.subr.bf16.mxu0 0
    %584 = vmatpush1.bf16.msra.mxu0 0
    %585 = vmatprep.subr.bf16.mxu0 0
    %586 = vmatpush1.bf16.msra.mxu0 0
    %587 = vmatprep.subr.bf16.mxu0 0
    %588 = vmatpush1.bf16.msra.mxu0 0
    %589 = vmatprep.subr.bf16.mxu0 0
    %590 = vmatpush1.bf16.msra.mxu0 0
    %591 = vmatprep.subr.bf16.mxu0 0
    %592 = vmatpush1.bf16.msra.mxu0 0
    %593 = vmatprep.subr.bf16.mxu0 0
    %594 = vmatpush1.bf16.msra.mxu0 0
    %595 = vmatprep.mubr.bf16.mxu0 0
    %596 = vmatmul.mubr.bf16.gmra.mrb[0].mxu0 %v513
    %v597 = vpop.f32.mrb[0].mxu0
    %v598 = vadd.f32 0.0, %v597
    %v599 = vpop.f32.mrb[0].mxu0
    %v600 = vpop.f32.mrb[0].mxu0
    %v601 = vadd.f32 0.0, %v600
    %v602 = vpop.f32.mrb[0].mxu0
    %603 = vdwg.mxu0
    %v604 = vadd.f32 %v486, %v598
    %v605 = vadd.f32 %v489, %v601
    %v606 = vld [vmem:[#allocation8] sm:$0x1]
    %v608 = vlaneseq
    %v609 = vshrl.u32 %v608, 7
    %v610 = vsub.s32 0, %v609
    %v611 = vrot.slane %v606, %v610
    %v613 = vadd.f32 %v604, %v611
    %v614 = vadd.f32 %v605, %v611
    %v615 = vmax.f32 %v613, 0.0
    %v616 = vmax.f32 %v614, 0.0
    %v617 = vld [vmem:[#allocation13] sm:$0xff]
    %v618 = vld [vmem:[%s10] sm:$0x3]
    %v619 = vld [vmem:[#allocation11] ss:$2 sm:$0xff]
    %621 = vset.pattern.permute.xlu0 0
    %622 = vperm.xlu0 %621, %v618
    %v623 = vpop.permute.xlu0 %622
    %v626 = vlaneseq
    %v627 = vshrl.u32 %v626, 7
    %v628 = vsub.s32 0, %v627
    %v629 = vrot.slane %v619, %v628
    %v630 = vlaneseq
    %v631 = vshrl.u32 %v630, 7
    %v632 = vsub.s32 1, %v631
    %v633 = vrot.slane %v619, %v632
    %v634 = vlaneseq
    %v635 = vshrl.u32 %v634, 7
    %v636 = vsub.s32 2, %v635
    %v637 = vrot.slane %v619, %v636
    %v638 = vlaneseq
    %v639 = vshrl.u32 %v638, 7
    %v640 = vsub.s32 3, %v639
    %v641 = vrot.slane %v619, %v640
    %v642 = vlaneseq
    %v643 = vshrl.u32 %v642, 7
    %v644 = vsub.s32 4, %v643
    %v645 = vrot.slane %v619, %v644
    %v646 = vlaneseq
    %v647 = vshrl.u32 %v646, 7
    %v648 = vsub.s32 5, %v647
    %v649 = vrot.slane %v619, %v648
    %v650 = vlaneseq
    %v651 = vshrl.u32 %v650, 7
    %v652 = vsub.s32 6, %v651
    %v653 = vrot.slane %v619, %v652
    %v654 = vlaneseq
    %v655 = vshrl.u32 %v654, 7
    %v656 = vsub.s32 7, %v655
    %v657 = vrot.slane %v619, %v656
    %v666 = vmul.f32 %v623, %v629
    %v667 = vmul.f32 %v623, %v633
    %v668 = vmul.f32 %v623, %v637
    %v669 = vmul.f32 %v623, %v641
    %v670 = vmul.f32 %v623, %v645
    %v671 = vmul.f32 %v623, %v649
    %v672 = vmul.f32 %v623, %v653
    %v673 = vmul.f32 %v623, %v657
    %v675 = vlaneseq
    %v676 = vshrl.u32 %v675, 7
    %v677 = vsub.s32 0, %v676
    %v678 = vrot.slane %v617, %v677
    %v679 = vlaneseq
    %v680 = vshrl.u32 %v679, 7
    %v681 = vsub.s32 1, %v680
    %v682 = vrot.slane %v617, %v681
    %v683 = vlaneseq
    %v684 = vshrl.u32 %v683, 7
    %v685 = vsub.s32 2, %v684
    %v686 = vrot.slane %v617, %v685
    %v687 = vlaneseq
    %v688 = vshrl.u32 %v687, 7
    %v689 = vsub.s32 3, %v688
    %v690 = vrot.slane %v617, %v689
    %v691 = vlaneseq
    %v692 = vshrl.u32 %v691, 7
    %v693 = vsub.s32 4, %v692
    %v694 = vrot.slane %v617, %v693
    %v695 = vlaneseq
    %v696 = vshrl.u32 %v695, 7
    %v697 = vsub.s32 5, %v696
    %v698 = vrot.slane %v617, %v697
    %v699 = vlaneseq
    %v700 = vshrl.u32 %v699, 7
    %v701 = vsub.s32 6, %v700
    %v702 = vrot.slane %v617, %v701
    %v703 = vlaneseq
    %v704 = vshrl.u32 %v703, 7
    %v705 = vsub.s32 7, %v704
    %v706 = vrot.slane %v617, %v705
    %v715 = vadd.f32 %v678, %v666
    %v716 = vadd.f32 %v682, %v667
    %v717 = vadd.f32 %v686, %v668
    %v718 = vadd.f32 %v690, %v669
    %v719 = vadd.f32 %v694, %v670
    %v720 = vadd.f32 %v698, %v671
    %v721 = vadd.f32 %v702, %v672
    %v722 = vadd.f32 %v706, %v673
    %v723 = vld [vmem:[%s11] sm:$0x3]
    %s724 = scalar_lea.vmem [#allocation11], 1
    %v725 = vld [vmem:[%s724] ss:$2 sm:$0xff]
    %727 = vset.pattern.permute.xlu0 0
    %728 = vperm.xlu0 %727, %v723
    %v729 = vpop.permute.xlu0 %728
    %v732 = vlaneseq
    %v733 = vshrl.u32 %v732, 7
    %v734 = vsub.s32 0, %v733
    %v735 = vrot.slane %v725, %v734
    %v736 = vlaneseq
    %v737 = vshrl.u32 %v736, 7
    %v738 = vsub.s32 1, %v737
    %v739 = vrot.slane %v725, %v738
    %v740 = vlaneseq
    %v741 = vshrl.u32 %v740, 7
    %v742 = vsub.s32 2, %v741
    %v743 = vrot.slane %v725, %v742
    %v744 = vlaneseq
    %v745 = vshrl.u32 %v744, 7
    %v746 = vsub.s32 3, %v745
    %v747 = vrot.slane %v725, %v746
    %v748 = vlaneseq
    %v749 = vshrl.u32 %v748, 7
    %v750 = vsub.s32 4, %v749
    %v751 = vrot.slane %v725, %v750
    %v752 = vlaneseq
    %v753 = vshrl.u32 %v752, 7
    %v754 = vsub.s32 5, %v753
    %v755 = vrot.slane %v725, %v754
    %v756 = vlaneseq
    %v757 = vshrl.u32 %v756, 7
    %v758 = vsub.s32 6, %v757
    %v759 = vrot.slane %v725, %v758
    %v760 = vlaneseq
    %v761 = vshrl.u32 %v760, 7
    %v762 = vsub.s32 7, %v761
    %v763 = vrot.slane %v725, %v762
    %v772 = vmul.f32 %v729, %v735
    %v773 = vmul.f32 %v729, %v739
    %v774 = vmul.f32 %v729, %v743
    %v775 = vmul.f32 %v729, %v747
    %v776 = vmul.f32 %v729, %v751
    %v777 = vmul.f32 %v729, %v755
    %v778 = vmul.f32 %v729, %v759
    %v779 = vmul.f32 %v729, %v763
    %v780 = vadd.f32 %v715, %v772
    %v781 = vadd.f32 %v716, %v773
    %v782 = vadd.f32 %v717, %v774
    %v783 = vadd.f32 %v718, %v775
    %v784 = vadd.f32 %v719, %v776
    %v785 = vadd.f32 %v720, %v777
    %v786 = vadd.f32 %v721, %v778
    %v787 = vadd.f32 %v722, %v779
    %v788 = vpack.c.bf16 %v615, %v615
    %v789 = vld [vmem:[#allocation10] sm:$0xff]
    %v790 = vld [vmem:[#allocation10 + $0x8] sm:$0xff]
    %v791 = vld [vmem:[#allocation10 + $0x10] sm:$0xff]
    %v792 = vld [vmem:[#allocation10 + $0x18] sm:$0xff]
    %v793 = vld [vmem:[#allocation10 + $0x20] sm:$0xff]
    %v794 = vld [vmem:[#allocation10 + $0x28] sm:$0xff]
    %v795 = vld [vmem:[#allocation10 + $0x30] sm:$0xff]
    %v796 = vld [vmem:[#allocation10 + $0x38] sm:$0xff]
    %v797 = vld [vmem:[#allocation10 + $0x40] sm:$0xff]
    %v798 = vld [vmem:[#allocation10 + $0x48] sm:$0xff]
    %v799 = vld [vmem:[#allocation10 + $0x50] sm:$0xff]
    %v800 = vld [vmem:[#allocation10 + $0x58] sm:$0xff]
    %v801 = vld [vmem:[#allocation10 + $0x60] sm:$0xff]
    %v802 = vld [vmem:[#allocation10 + $0x68] sm:$0xff]
    %v803 = vld [vmem:[#allocation10 + $0x70] sm:$0xff]
    %v804 = vld [vmem:[#allocation10 + $0x78] sm:$0xff]
    %v805 = vld [vmem:[#allocation10 + $0x80] sm:$0xff]
    %v806 = vld [vmem:[#allocation10 + $0x88] sm:$0xff]
    %v807 = vld [vmem:[#allocation10 + $0x90] sm:$0xff]
    %v808 = vld [vmem:[#allocation10 + $0x98] sm:$0xff]
    %v809 = vld [vmem:[#allocation10 + $0xa0] sm:$0xff]
    %v810 = vld [vmem:[#allocation10 + $0xa8] sm:$0xff]
    %v811 = vld [vmem:[#allocation10 + $0xb0] sm:$0xff]
    %v812 = vld [vmem:[#allocation10 + $0xb8] sm:$0xff]
    %v813 = vld [vmem:[#allocation10 + $0xc0] sm:$0xff]
    %v814 = vld [vmem:[#allocation10 + $0xc8] sm:$0xff]
    %v815 = vld [vmem:[#allocation10 + $0xd0] sm:$0xff]
    %v816 = vld [vmem:[#allocation10 + $0xd8] sm:$0xff]
    %v817 = vld [vmem:[#allocation10 + $0xe0] sm:$0xff]
    %v818 = vld [vmem:[#allocation10 + $0xe8] sm:$0xff]
    %v819 = vld [vmem:[#allocation10 + $0xf0] sm:$0xff]
    %v820 = vld [vmem:[#allocation10 + $0xf8] sm:$0xff]
    %v821 = vld [vmem:[#allocation10 + $0x100] sm:$0xff]
    %v822 = vld [vmem:[#allocation10 + $0x108] sm:$0xff]
    %v823 = vld [vmem:[#allocation10 + $0x110] sm:$0xff]
    %v824 = vld [vmem:[#allocation10 + $0x118] sm:$0xff]
    %v825 = vld [vmem:[#allocation10 + $0x120] sm:$0xff]
    %v826 = vld [vmem:[#allocation10 + $0x128] sm:$0xff]
    %v827 = vld [vmem:[#allocation10 + $0x130] sm:$0xff]
    %v828 = vld [vmem:[#allocation10 + $0x138] sm:$0xff]
    %v829 = vld [vmem:[#allocation10 + $0x140] sm:$0xff]
    %v830 = vld [vmem:[#allocation10 + $0x148] sm:$0xff]
    %v831 = vld [vmem:[#allocation10 + $0x150] sm:$0xff]
    %v832 = vld [vmem:[#allocation10 + $0x158] sm:$0xff]
    %v833 = vld [vmem:[#allocation10 + $0x160] sm:$0xff]
    %v834 = vld [vmem:[#allocation10 + $0x168] sm:$0xff]
    %v835 = vld [vmem:[#allocation10 + $0x170] sm:$0xff]
    %v836 = vld [vmem:[#allocation10 + $0x178] sm:$0xff]
    %v837 = vld [vmem:[#allocation10 + $0x180] sm:$0xff]
    %v838 = vld [vmem:[#allocation10 + $0x188] sm:$0xff]
    %v839 = vld [vmem:[#allocation10 + $0x190] sm:$0xff]
    %v840 = vld [vmem:[#allocation10 + $0x198] sm:$0xff]
    %v841 = vld [vmem:[#allocation10 + $0x1a0] sm:$0xff]
    %v842 = vld [vmem:[#allocation10 + $0x1a8] sm:$0xff]
    %v843 = vld [vmem:[#allocation10 + $0x1b0] sm:$0xff]
    %v844 = vld [vmem:[#allocation10 + $0x1b8] sm:$0xff]
    %v845 = vld [vmem:[#allocation10 + $0x1c0] sm:$0xff]
    %v846 = vld [vmem:[#allocation10 + $0x1c8] sm:$0xff]
    %v847 = vld [vmem:[#allocation10 + $0x1d0] sm:$0xff]
    %v848 = vld [vmem:[#allocation10 + $0x1d8] sm:$0xff]
    %v849 = vld [vmem:[#allocation10 + $0x1e0] sm:$0xff]
    %v850 = vld [vmem:[#allocation10 + $0x1e8] sm:$0xff]
    %v851 = vld [vmem:[#allocation10 + $0x1f0] sm:$0xff]
    %v852 = vld [vmem:[#allocation10 + $0x1f8] sm:$0xff]
    %v917 = vunpack.c.l.b16 %v789
    %v918 = vunpack.c.h.b16 %v789
    %v919 = vunpack.c.l.b16 %v790
    %v920 = vunpack.c.h.b16 %v790
    %v921 = vunpack.c.l.b16 %v791
    %v922 = vunpack.c.h.b16 %v791
    %v923 = vunpack.c.l.b16 %v792
    %v924 = vunpack.c.h.b16 %v792
    %v925 = vunpack.c.l.b16 %v793
    %v926 = vunpack.c.h.b16 %v793
    %v927 = vunpack.c.l.b16 %v794
    %v928 = vunpack.c.h.b16 %v794
    %v929 = vunpack.c.l.b16 %v795
    %v930 = vunpack.c.h.b16 %v795
    %v931 = vunpack.c.l.b16 %v796
    %v932 = vunpack.c.h.b16 %v796
    %v933 = vunpack.c.l.b16 %v797
    %v934 = vunpack.c.h.b16 %v797
    %v935 = vunpack.c.l.b16 %v798
    %v936 = vunpack.c.h.b16 %v798
    %v937 = vunpack.c.l.b16 %v799
    %v938 = vunpack.c.h.b16 %v799
    %v939 = vunpack.c.l.b16 %v800
    %v940 = vunpack.c.h.b16 %v800
    %v941 = vunpack.c.l.b16 %v801
    %v942 = vunpack.c.h.b16 %v801
    %v943 = vunpack.c.l.b16 %v802
    %v944 = vunpack.c.h.b16 %v802
    %v945 = vunpack.c.l.b16 %v803
    %v946 = vunpack.c.h.b16 %v803
    %v947 = vunpack.c.l.b16 %v804
    %v948 = vunpack.c.h.b16 %v804
    %v949 = vunpack.c.l.b16 %v805
    %v950 = vunpack.c.h.b16 %v805
    %v951 = vunpack.c.l.b16 %v806
    %v952 = vunpack.c.h.b16 %v806
    %v953 = vunpack.c.l.b16 %v807
    %v954 = vunpack.c.h.b16 %v807
    %v955 = vunpack.c.l.b16 %v808
    %v956 = vunpack.c.h.b16 %v808
    %v957 = vunpack.c.l.b16 %v809
    %v958 = vunpack.c.h.b16 %v809
    %v959 = vunpack.c.l.b16 %v810
    %v960 = vunpack.c.h.b16 %v810
    %v961 = vunpack.c.l.b16 %v811
    %v962 = vunpack.c.h.b16 %v811
    %v963 = vunpack.c.l.b16 %v812
    %v964 = vunpack.c.h.b16 %v812
    %v965 = vunpack.c.l.b16 %v813
    %v966 = vunpack.c.h.b16 %v813
    %v967 = vunpack.c.l.b16 %v814
    %v968 = vunpack.c.h.b16 %v814
    %v969 = vunpack.c.l.b16 %v815
    %v970 = vunpack.c.h.b16 %v815
    %v971 = vunpack.c.l.b16 %v816
    %v972 = vunpack.c.h.b16 %v816
    %v973 = vunpack.c.l.b16 %v817
    %v974 = vunpack.c.h.b16 %v817
    %v975 = vunpack.c.l.b16 %v818
    %v976 = vunpack.c.h.b16 %v818
    %v977 = vunpack.c.l.b16 %v819
    %v978 = vunpack.c.h.b16 %v819
    %v979 = vunpack.c.l.b16 %v820
    %v980 = vunpack.c.h.b16 %v820
    %v981 = vunpack.c.l.b16 %v821
    %v982 = vunpack.c.h.b16 %v821
    %v983 = vunpack.c.l.b16 %v822
    %v984 = vunpack.c.h.b16 %v822
    %v985 = vunpack.c.l.b16 %v823
    %v986 = vunpack.c.h.b16 %v823
    %v987 = vunpack.c.l.b16 %v824
    %v988 = vunpack.c.h.b16 %v824
    %v989 = vunpack.c.l.b16 %v825
    %v990 = vunpack.c.h.b16 %v825
    %v991 = vunpack.c.l.b16 %v826
    %v992 = vunpack.c.h.b16 %v826
    %v993 = vunpack.c.l.b16 %v827
    %v994 = vunpack.c.h.b16 %v827
    %v995 = vunpack.c.l.b16 %v828
    %v996 = vunpack.c.h.b16 %v828
    %v997 = vunpack.c.l.b16 %v829
    %v998 = vunpack.c.h.b16 %v829
    %v999 = vunpack.c.l.b16 %v830
    %v1000 = vunpack.c.h.b16 %v830
    %v1001 = vunpack.c.l.b16 %v831
    %v1002 = vunpack.c.h.b16 %v831
    %v1003 = vunpack.c.l.b16 %v832
    %v1004 = vunpack.c.h.b16 %v832
    %v1005 = vunpack.c.l.b16 %v833
    %v1006 = vunpack.c.h.b16 %v833
    %v1007 = vunpack.c.l.b16 %v834
    %v1008 = vunpack.c.h.b16 %v834
    %v1009 = vunpack.c.l.b16 %v835
    %v1010 = vunpack.c.h.b16 %v835
    %v1011 = vunpack.c.l.b16 %v836
    %v1012 = vunpack.c.h.b16 %v836
    %v1013 = vunpack.c.l.b16 %v837
    %v1014 = vunpack.c.h.b16 %v837
    %v1015 = vunpack.c.l.b16 %v838
    %v1016 = vunpack.c.h.b16 %v838
    %v1017 = vunpack.c.l.b16 %v839
    %v1018 = vunpack.c.h.b16 %v839
    %v1019 = vunpack.c.l.b16 %v840
    %v1020 = vunpack.c.h.b16 %v840
    %v1021 = vunpack.c.l.b16 %v841
    %v1022 = vunpack.c.h.b16 %v841
    %v1023 = vunpack.c.l.b16 %v842
    %v1024 = vunpack.c.h.b16 %v842
    %v1025 = vunpack.c.l.b16 %v843
    %v1026 = vunpack.c.h.b16 %v843
    %v1027 = vunpack.c.l.b16 %v844
    %v1028 = vunpack.c.h.b16 %v844
    %v1029 = vunpack.c.l.b16 %v845
    %v1030 = vunpack.c.h.b16 %v845
    %v1031 = vunpack.c.l.b16 %v846
    %v1032 = vunpack.c.h.b16 %v846
    %v1033 = vunpack.c.l.b16 %v847
    %v1034 = vunpack.c.h.b16 %v847
    %v1035 = vunpack.c.l.b16 %v848
    %v1036 = vunpack.c.h.b16 %v848
    %v1037 = vunpack.c.l.b16 %v849
    %v1038 = vunpack.c.h.b16 %v849
    %v1039 = vunpack.c.l.b16 %v850
    %v1040 = vunpack.c.h.b16 %v850
    %v1041 = vunpack.c.l.b16 %v851
    %v1042 = vunpack.c.h.b16 %v851
    %v1043 = vunpack.c.l.b16 %v852
    %v1044 = vunpack.c.h.b16 %v852
    %v1045 = vpack.c.b16 %v925, %v917
    %v1046 = vpack.c.b16 %v926, %v918
    %v1047 = vpack.c.b16 %v927, %v919
    %v1048 = vpack.c.b16 %v928, %v920
    %v1049 = vpack.c.b16 %v929, %v921
    %v1050 = vpack.c.b16 %v930, %v922
    %v1051 = vpack.c.b16 %v931, %v923
    %v1052 = vpack.c.b16 %v932, %v924
    %v1053 = vpack.c.b16 %v941, %v933
    %v1054 = vpack.c.b16 %v942, %v934
    %v1055 = vpack.c.b16 %v943, %v935
    %v1056 = vpack.c.b16 %v944, %v936
    %v1057 = vpack.c.b16 %v945, %v937
    %v1058 = vpack.c.b16 %v946, %v938
    %v1059 = vpack.c.b16 %v947, %v939
    %v1060 = vpack.c.b16 %v948, %v940
    %v1061 = vpack.c.b16 %v957, %v949
    %v1062 = vpack.c.b16 %v958, %v950
    %v1063 = vpack.c.b16 %v959, %v951
    %v1064 = vpack.c.b16 %v960, %v952
    %v1065 = vpack.c.b16 %v961, %v953
    %v1066 = vpack.c.b16 %v962, %v954
    %v1067 = vpack.c.b16 %v963, %v955
    %v1068 = vpack.c.b16 %v964, %v956
    %v1069 = vpack.c.b16 %v973, %v965
    %v1070 = vpack.c.b16 %v974, %v966
    %v1071 = vpack.c.b16 %v975, %v967
    %v1072 = vpack.c.b16 %v976, %v968
    %v1073 = vpack.c.b16 %v977, %v969
    %v1074 = vpack.c.b16 %v978, %v970
    %v1075 = vpack.c.b16 %v979, %v971
    %v1076 = vpack.c.b16 %v980, %v972
    %v1077 = vpack.c.b16 %v989, %v981
    %v1078 = vpack.c.b16 %v990, %v982
    %v1079 = vpack.c.b16 %v991, %v983
    %v1080 = vpack.c.b16 %v992, %v984
    %v1081 = vpack.c.b16 %v993, %v985
    %v1082 = vpack.c.b16 %v994, %v986
    %v1083 = vpack.c.b16 %v995, %v987
    %v1084 = vpack.c.b16 %v996, %v988
    %v1085 = vpack.c.b16 %v1005, %v997
    %v1086 = vpack.c.b16 %v1006, %v998
    %v1087 = vpack.c.b16 %v1007, %v999
    %v1088 = vpack.c.b16 %v1008, %v1000
    %v1089 = vpack.c.b16 %v1009, %v1001
    %v1090 = vpack.c.b16 %v1010, %v1002
    %v1091 = vpack.c.b16 %v1011, %v1003
    %v1092 = vpack.c.b16 %v1012, %v1004
    %v1093 = vpack.c.b16 %v1021, %v1013
    %v1094 = vpack.c.b16 %v1022, %v1014
    %v1095 = vpack.c.b16 %v1023, %v1015
    %v1096 = vpack.c.b16 %v1024, %v1016
    %v1097 = vpack.c.b16 %v1025, %v1017
    %v1098 = vpack.c.b16 %v1026, %v1018
    %v1099 = vpack.c.b16 %v1027, %v1019
    %v1100 = vpack.c.b16 %v1028, %v1020
    %v1101 = vpack.c.b16 %v1037, %v1029
    %v1102 = vpack.c.b16 %v1038, %v1030
    %v1103 = vpack.c.b16 %v1039, %v1031
    %v1104 = vpack.c.b16 %v1040, %v1032
    %v1105 = vpack.c.b16 %v1041, %v1033
    %v1106 = vpack.c.b16 %v1042, %v1034
    %v1107 = vpack.c.b16 %v1043, %v1035
    %v1108 = vpack.c.b16 %v1044, %v1036
    %1173 = vmatprep.subr.bf16.mxu0 %v1046
    %1174 = vmatpush1.bf16.msra.mxu0 %v1045
    %1175 = vmatprep.subr.bf16.mxu0 %v1054
    %1176 = vmatpush1.bf16.msra.mxu0 %v1053
    %1177 = vmatprep.subr.bf16.mxu0 %v1062
    %1178 = vmatpush1.bf16.msra.mxu0 %v1061
    %1179 = vmatprep.subr.bf16.mxu0 %v1070
    %1180 = vmatpush1.bf16.msra.mxu0 %v1069
    %1181 = vmatprep.subr.bf16.mxu0 %v1078
    %1182 = vmatpush1.bf16.msra.mxu0 %v1077
    %1183 = vmatprep.subr.bf16.mxu0 %v1086
    %1184 = vmatpush1.bf16.msra.mxu0 %v1085
    %1185 = vmatprep.subr.bf16.mxu0 %v1094
    %1186 = vmatpush1.bf16.msra.mxu0 %v1093
    %1187 = vmatprep.subr.bf16.mxu0 %v1102
    %1188 = vmatpush1.bf16.msra.mxu0 %v1101
    %1189 = vmatprep.subr.bf16.mxu0 0
    %1190 = vmatpush1.bf16.msra.mxu0 0
    %1191 = vmatprep.subr.bf16.mxu0 0
    %1192 = vmatpush1.bf16.msra.mxu0 0
    %1193 = vmatprep.subr.bf16.mxu0 0
    %1194 = vmatpush1.bf16.msra.mxu0 0
    %1195 = vmatprep.subr.bf16.mxu0 0
    %1196 = vmatpush1.bf16.msra.mxu0 0
    %1197 = vmatprep.subr.bf16.mxu0 0
    %1198 = vmatpush1.bf16.msra.mxu0 0
    %1199 = vmatprep.subr.bf16.mxu0 0
    %1200 = vmatpush1.bf16.msra.mxu0 0
    %1201 = vmatprep.subr.bf16.mxu0 0
    %1202 = vmatpush1.bf16.msra.mxu0 0
    %1203 = vmatprep.subr.bf16.mxu0 0
    %1204 = vmatpush1.bf16.msra.mxu0 0
    %1205 = vmatprep.mubr.bf16.mxu0 0
    %1206 = vmatmul.mubr.bf16.gmra.mrb[0].mxu0 %v788
    %v1207 = vpop.f32.mrb[0].mxu0
    %v1208 = vadd.f32 0.0, %v1207
    %v1209 = vpop.f32.mrb[0].mxu0
    %v1210 = vadd.f32 0.0, %v1209
    %v1211 = vpop.f32.mrb[0].mxu0
    %v1212 = vpop.f32.mrb[0].mxu0
    %1213 = vdwg.mxu0
    %1214 = vmatprep.subr.bf16.mxu0 %v1048
    %1215 = vmatpush1.bf16.msra.mxu0 %v1047
    %1216 = vmatprep.subr.bf16.mxu0 %v1056
    %1217 = vmatpush1.bf16.msra.mxu0 %v1055
    %1218 = vmatprep.subr.bf16.mxu0 %v1064
    %1219 = vmatpush1.bf16.msra.mxu0 %v1063
    %1220 = vmatprep.subr.bf16.mxu0 %v1072
    %1221 = vmatpush1.bf16.msra.mxu0 %v1071
    %1222 = vmatprep.subr.bf16.mxu0 %v1080
    %1223 = vmatpush1.bf16.msra.mxu0 %v1079
    %1224 = vmatprep.subr.bf16.mxu0 %v1088
    %1225 = vmatpush1.bf16.msra.mxu0 %v1087
    %1226 = vmatprep.subr.bf16.mxu0 %v1096
    %1227 = vmatpush1.bf16.msra.mxu0 %v1095
    %1228 = vmatprep.subr.bf16.mxu0 %v1104
    %1229 = vmatpush1.bf16.msra.mxu0 %v1103
    %1230 = vmatprep.subr.bf16.mxu0 0
    %1231 = vmatpush1.bf16.msra.mxu0 0
    %1232 = vmatprep.subr.bf16.mxu0 0
    %1233 = vmatpush1.bf16.msra.mxu0 0
    %1234 = vmatprep.subr.bf16.mxu0 0
    %1235 = vmatpush1.bf16.msra.mxu0 0
    %1236 = vmatprep.subr.bf16.mxu0 0
    %1237 = vmatpush1.bf16.msra.mxu0 0
    %1238 = vmatprep.subr.bf16.mxu0 0
    %1239 = vmatpush1.bf16.msra.mxu0 0
    %1240 = vmatprep.subr.bf16.mxu0 0
    %1241 = vmatpush1.bf16.msra.mxu0 0
    %1242 = vmatprep.subr.bf16.mxu0 0
    %1243 = vmatpush1.bf16.msra.mxu0 0
    %1244 = vmatprep.subr.bf16.mxu0 0
    %1245 = vmatpush1.bf16.msra.mxu0 0
    %1246 = vmatprep.mubr.bf16.mxu0 0
    %1247 = vmatmul.mubr.bf16.gmra.mrb[0].mxu0 %v788
    %v1248 = vpop.f32.mrb[0].mxu0
    %v1249 = vadd.f32 0.0, %v1248
    %v1250 = vpop.f32.mrb[0].mxu0
    %v1251 = vadd.f32 0.0, %v1250
    %v1252 = vpop.f32.mrb[0].mxu0
    %v1253 = vpop.f32.mrb[0].mxu0
    %1254 = vdwg.mxu0
    %1255 = vmatprep.subr.bf16.mxu0 %v1050
    %1256 = vmatpush1.bf16.msra.mxu0 %v1049
    %1257 = vmatprep.subr.bf16.mxu0 %v1058
    %1258 = vmatpush1.bf16.msra.mxu0 %v1057
    %1259 = vmatprep.subr.bf16.mxu0 %v1066
    %1260 = vmatpush1.bf16.msra.mxu0 %v1065
    %1261 = vmatprep.subr.bf16.mxu0 %v1074
    %1262 = vmatpush1.bf16.msra.mxu0 %v1073
    %1263 = vmatprep.subr.bf16.mxu0 %v1082
    %1264 = vmatpush1.bf16.msra.mxu0 %v1081
    %1265 = vmatprep.subr.bf16.mxu0 %v1090
    %1266 = vmatpush1.bf16.msra.mxu0 %v1089
    %1267 = vmatprep.subr.bf16.mxu0 %v1098
    %1268 = vmatpush1.bf16.msra.mxu0 %v1097
    %1269 = vmatprep.subr.bf16.mxu0 %v1106
    %1270 = vmatpush1.bf16.msra.mxu0 %v1105
    %1271 = vmatprep.subr.bf16.mxu0 0
    %1272 = vmatpush1.bf16.msra.mxu0 0
    %1273 = vmatprep.subr.bf16.mxu0 0
    %1274 = vmatpush1.bf16.msra.mxu0 0
    %1275 = vmatprep.subr.bf16.mxu0 0
    %1276 = vmatpush1.bf16.msra.mxu0 0
    %1277 = vmatprep.subr.bf16.mxu0 0
    %1278 = vmatpush1.bf16.msra.mxu0 0
    %1279 = vmatprep.subr.bf16.mxu0 0
    %1280 = vmatpush1.bf16.msra.mxu0 0
    %1281 = vmatprep.subr.bf16.mxu0 0
    %1282 = vmatpush1.bf16.msra.mxu0 0
    %1283 = vmatprep.subr.bf16.mxu0 0
    %1284 = vmatpush1.bf16.msra.mxu0 0
    %1285 = vmatprep.subr.bf16.mxu0 0
    %1286 = vmatpush1.bf16.msra.mxu0 0
    %1287 = vmatprep.mubr.bf16.mxu0 0
    %1288 = vmatmul.mubr.bf16.gmra.mrb[0].mxu0 %v788
    %v1289 = vpop.f32.mrb[0].mxu0
    %v1290 = vadd.f32 0.0, %v1289
    %v1291 = vpop.f32.mrb[0].mxu0
    %v1292 = vadd.f32 0.0, %v1291
    %v1293 = vpop.f32.mrb[0].mxu0
    %v1294 = vpop.f32.mrb[0].mxu0
    %1295 = vdwg.mxu0
    %1296 = vmatprep.subr.bf16.mxu0 %v1052
    %1297 = vmatpush1.bf16.msra.mxu0 %v1051
    %1298 = vmatprep.subr.bf16.mxu0 %v1060
    %1299 = vmatpush1.bf16.msra.mxu0 %v1059
    %1300 = vmatprep.subr.bf16.mxu0 %v1068
    %1301 = vmatpush1.bf16.msra.mxu0 %v1067
    %1302 = vmatprep.subr.bf16.mxu0 %v1076
    %1303 = vmatpush1.bf16.msra.mxu0 %v1075
    %1304 = vmatprep.subr.bf16.mxu0 %v1084
    %1305 = vmatpush1.bf16.msra.mxu0 %v1083
    %1306 = vmatprep.subr.bf16.mxu0 %v1092
    %1307 = vmatpush1.bf16.msra.mxu0 %v1091
    %1308 = vmatprep.subr.bf16.mxu0 %v1100
    %1309 = vmatpush1.bf16.msra.mxu0 %v1099
    %1310 = vmatprep.subr.bf16.mxu0 %v1108
    %1311 = vmatpush1.bf16.msra.mxu0 %v1107
    %1312 = vmatprep.subr.bf16.mxu0 0
    %1313 = vmatpush1.bf16.msra.mxu0 0
    %1314 = vmatprep.subr.bf16.mxu0 0
    %1315 = vmatpush1.bf16.msra.mxu0 0
    %1316 = vmatprep.subr.bf16.mxu0 0
    %1317 = vmatpush1.bf16.msra.mxu0 0
    %1318 = vmatprep.subr.bf16.mxu0 0
    %1319 = vmatpush1.bf16.msra.mxu0 0
    %1320 = vmatprep.subr.bf16.mxu0 0
    %1321 = vmatpush1.bf16.msra.mxu0 0
    %1322 = vmatprep.subr.bf16.mxu0 0
    %1323 = vmatpush1.bf16.msra.mxu0 0
    %1324 = vmatprep.subr.bf16.mxu0 0
    %1325 = vmatpush1.bf16.msra.mxu0 0
    %1326 = vmatprep.subr.bf16.mxu0 0
    %1327 = vmatpush1.bf16.msra.mxu0 0
    %1328 = vmatprep.mubr.bf16.mxu0 0
    %1329 = vmatmul.mubr.bf16.gmra.mrb[0].mxu0 %v788
    %v1330 = vpop.f32.mrb[0].mxu0
    %v1331 = vadd.f32 0.0, %v1330
    %v1332 = vpop.f32.mrb[0].mxu0
    %v1333 = vadd.f32 0.0, %v1332
    %v1334 = vpop.f32.mrb[0].mxu0
    %v1335 = vpop.f32.mrb[0].mxu0
    %1336 = vdwg.mxu0
    %v1337 = vadd.f32 %v780, %v1208
    %v1338 = vadd.f32 %v781, %v1210
    %v1339 = vadd.f32 %v782, %v1249
    %v1340 = vadd.f32 %v783, %v1251
    %v1341 = vadd.f32 %v784, %v1290
    %v1342 = vadd.f32 %v785, %v1292
    %v1343 = vadd.f32 %v786, %v1331
    %v1344 = vadd.f32 %v787, %v1333
    %v1345 = vld [vmem:[#allocation10 + $0x200] sm:$0xff]
    %v1346 = vld [vmem:[#allocation10 + $0x208] sm:$0xff]
    %v1347 = vld [vmem:[#allocation10 + $0x210] sm:$0xff]
    %v1348 = vld [vmem:[#allocation10 + $0x218] sm:$0xff]
    %v1349 = vld [vmem:[#allocation10 + $0x220] sm:$0xff]
    %v1350 = vld [vmem:[#allocation10 + $0x228] sm:$0xff]
    %v1351 = vld [vmem:[#allocation10 + $0x230] sm:$0xff]
    %v1352 = vld [vmem:[#allocation10 + $0x238] sm:$0xff]
    %v1353 = vld [vmem:[#allocation10 + $0x240] sm:$0xff]
    %v1354 = vld [vmem:[#allocation10 + $0x248] sm:$0xff]
    %v1355 = vld [vmem:[#allocation10 + $0x250] sm:$0xff]
    %v1356 = vld [vmem:[#allocation10 + $0x258] sm:$0xff]
    %v1357 = vld [vmem:[#allocation10 + $0x260] sm:$0xff]
    %v1358 = vld [vmem:[#allocation10 + $0x268] sm:$0xff]
    %v1359 = vld [vmem:[#allocation10 + $0x270] sm:$0xff]
    %v1360 = vld [vmem:[#allocation10 + $0x278] sm:$0xff]
    %v1361 = vld [vmem:[#allocation10 + $0x280] sm:$0xff]
    %v1362 = vld [vmem:[#allocation10 + $0x288] sm:$0xff]
    %v1363 = vld [vmem:[#allocation10 + $0x290] sm:$0xff]
    %v1364 = vld [vmem:[#allocation10 + $0x298] sm:$0xff]
    %v1365 = vld [vmem:[#allocation10 + $0x2a0] sm:$0xff]
    %v1366 = vld [vmem:[#allocation10 + $0x2a8] sm:$0xff]
    %v1367 = vld [vmem:[#allocation10 + $0x2b0] sm:$0xff]
    %v1368 = vld [vmem:[#allocation10 + $0x2b8] sm:$0xff]
    %v1369 = vld [vmem:[#allocation10 + $0x2c0] sm:$0xff]
    %v1370 = vld [vmem:[#allocation10 + $0x2c8] sm:$0xff]
    %v1371 = vld [vmem:[#allocation10 + $0x2d0] sm:$0xff]
    %v1372 = vld [vmem:[#allocation10 + $0x2d8] sm:$0xff]
    %v1373 = vld [vmem:[#allocation10 + $0x2e0] sm:$0xff]
    %v1374 = vld [vmem:[#allocation10 + $0x2e8] sm:$0xff]
    %v1375 = vld [vmem:[#allocation10 + $0x2f0] sm:$0xff]
    %v1376 = vld [vmem:[#allocation10 + $0x2f8] sm:$0xff]
    %v1377 = vld [vmem:[#allocation10 + $0x300] sm:$0xff]
    %v1378 = vld [vmem:[#allocation10 + $0x308] sm:$0xff]
    %v1379 = vld [vmem:[#allocation10 + $0x310] sm:$0xff]
    %v1380 = vld [vmem:[#allocation10 + $0x318] sm:$0xff]
    %v1381 = vld [vmem:[#allocation10 + $0x320] sm:$0xff]
    %v1382 = vld [vmem:[#allocation10 + $0x328] sm:$0xff]
    %v1383 = vld [vmem:[#allocation10 + $0x330] sm:$0xff]
    %v1384 = vld [vmem:[#allocation10 + $0x338] sm:$0xff]
    %v1385 = vld [vmem:[#allocation10 + $0x340] sm:$0xff]
    %v1386 = vld [vmem:[#allocation10 + $0x348] sm:$0xff]
    %v1387 = vld [vmem:[#allocation10 + $0x350] sm:$0xff]
    %v1388 = vld [vmem:[#allocation10 + $0x358] sm:$0xff]
    %v1389 = vld [vmem:[#allocation10 + $0x360] sm:$0xff]
    %v1390 = vld [vmem:[#allocation10 + $0x368] sm:$0xff]
    %v1391 = vld [vmem:[#allocation10 + $0x370] sm:$0xff]
    %v1392 = vld [vmem:[#allocation10 + $0x378] sm:$0xff]
    %v1393 = vld [vmem:[#allocation10 + $0x380] sm:$0xff]
    %v1394 = vld [vmem:[#allocation10 + $0x388] sm:$0xff]
    %v1395 = vld [vmem:[#allocation10 + $0x390] sm:$0xff]
    %v1396 = vld [vmem:[#allocation10 + $0x398] sm:$0xff]
    %v1397 = vld [vmem:[#allocation10 + $0x3a0] sm:$0xff]
    %v1398 = vld [vmem:[#allocation10 + $0x3a8] sm:$0xff]
    %v1399 = vld [vmem:[#allocation10 + $0x3b0] sm:$0xff]
    %v1400 = vld [vmem:[#allocation10 + $0x3b8] sm:$0xff]
    %v1401 = vld [vmem:[#allocation10 + $0x3c0] sm:$0xff]
    %v1402 = vld [vmem:[#allocation10 + $0x3c8] sm:$0xff]
    %v1403 = vld [vmem:[#allocation10 + $0x3d0] sm:$0xff]
    %v1404 = vld [vmem:[#allocation10 + $0x3d8] sm:$0xff]
    %v1405 = vld [vmem:[#allocation10 + $0x3e0] sm:$0xff]
    %v1406 = vld [vmem:[#allocation10 + $0x3e8] sm:$0xff]
    %v1407 = vld [vmem:[#allocation10 + $0x3f0] sm:$0xff]
    %v1408 = vld [vmem:[#allocation10 + $0x3f8] sm:$0xff]
    %v1410 = vrot.slane %v788, 1
    %v1476 = vunpack.c.l.b16 %v1345
    %v1477 = vunpack.c.h.b16 %v1345
    %v1478 = vunpack.c.l.b16 %v1346
    %v1479 = vunpack.c.h.b16 %v1346
    %v1480 = vunpack.c.l.b16 %v1347
    %v1481 = vunpack.c.h.b16 %v1347
    %v1482 = vunpack.c.l.b16 %v1348
    %v1483 = vunpack.c.h.b16 %v1348
    %v1484 = vunpack.c.l.b16 %v1349
    %v1485 = vunpack.c.h.b16 %v1349
    %v1486 = vunpack.c.l.b16 %v1350
    %v1487 = vunpack.c.h.b16 %v1350
    %v1488 = vunpack.c.l.b16 %v1351
    %v1489 = vunpack.c.h.b16 %v1351
    %v1490 = vunpack.c.l.b16 %v1352
    %v1491 = vunpack.c.h.b16 %v1352
    %v1492 = vunpack.c.l.b16 %v1353
    %v1493 = vunpack.c.h.b16 %v1353
    %v1494 = vunpack.c.l.b16 %v1354
    %v1495 = vunpack.c.h.b16 %v1354
    %v1496 = vunpack.c.l.b16 %v1355
    %v1497 = vunpack.c.h.b16 %v1355
    %v1498 = vunpack.c.l.b16 %v1356
    %v1499 = vunpack.c.h.b16 %v1356
    %v1500 = vunpack.c.l.b16 %v1357
    %v1501 = vunpack.c.h.b16 %v1357
    %v1502 = vunpack.c.l.b16 %v1358
    %v1503 = vunpack.c.h.b16 %v1358
    %v1504 = vunpack.c.l.b16 %v1359
    %v1505 = vunpack.c.h.b16 %v1359
    %v1506 = vunpack.c.l.b16 %v1360
    %v1507 = vunpack.c.h.b16 %v1360
    %v1508 = vunpack.c.l.b16 %v1361
    %v1509 = vunpack.c.h.b16 %v1361
    %v1510 = vunpack.c.l.b16 %v1362
    %v1511 = vunpack.c.h.b16 %v1362
    %v1512 = vunpack.c.l.b16 %v1363
    %v1513 = vunpack.c.h.b16 %v1363
    %v1514 = vunpack.c.l.b16 %v1364
    %v1515 = vunpack.c.h.b16 %v1364
    %v1516 = vunpack.c.l.b16 %v1365
    %v1517 = vunpack.c.h.b16 %v1365
    %v1518 = vunpack.c.l.b16 %v1366
    %v1519 = vunpack.c.h.b16 %v1366
    %v1520 = vunpack.c.l.b16 %v1367
    %v1521 = vunpack.c.h.b16 %v1367
    %v1522 = vunpack.c.l.b16 %v1368
    %v1523 = vunpack.c.h.b16 %v1368
    %v1524 = vunpack.c.l.b16 %v1369
    %v1525 = vunpack.c.h.b16 %v1369
    %v1526 = vunpack.c.l.b16 %v1370
    %v1527 = vunpack.c.h.b16 %v1370
    %v1528 = vunpack.c.l.b16 %v1371
    %v1529 = vunpack.c.h.b16 %v1371
    %v1530 = vunpack.c.l.b16 %v1372
    %v1531 = vunpack.c.h.b16 %v1372
    %v1532 = vunpack.c.l.b16 %v1373
    %v1533 = vunpack.c.h.b16 %v1373
    %v1534 = vunpack.c.l.b16 %v1374
    %v1535 = vunpack.c.h.b16 %v1374
    %v1536 = vunpack.c.l.b16 %v1375
    %v1537 = vunpack.c.h.b16 %v1375
    %v1538 = vunpack.c.l.b16 %v1376
    %v1539 = vunpack.c.h.b16 %v1376
    %v1540 = vunpack.c.l.b16 %v1377
    %v1541 = vunpack.c.h.b16 %v1377
    %v1542 = vunpack.c.l.b16 %v1378
    %v1543 = vunpack.c.h.b16 %v1378
    %v1544 = vunpack.c.l.b16 %v1379
    %v1545 = vunpack.c.h.b16 %v1379
    %v1546 = vunpack.c.l.b16 %v1380
    %v1547 = vunpack.c.h.b16 %v1380
    %v1548 = vunpack.c.l.b16 %v1381
    %v1549 = vunpack.c.h.b16 %v1381
    %v1550 = vunpack.c.l.b16 %v1382
    %v1551 = vunpack.c.h.b16 %v1382
    %v1552 = vunpack.c.l.b16 %v1383
    %v1553 = vunpack.c.h.b16 %v1383
    %v1554 = vunpack.c.l.b16 %v1384
    %v1555 = vunpack.c.h.b16 %v1384
    %v1556 = vunpack.c.l.b16 %v1385
    %v1557 = vunpack.c.h.b16 %v1385
    %v1558 = vunpack.c.l.b16 %v1386
    %v1559 = vunpack.c.h.b16 %v1386
    %v1560 = vunpack.c.l.b16 %v1387
    %v1561 = vunpack.c.h.b16 %v1387
    %v1562 = vunpack.c.l.b16 %v1388
    %v1563 = vunpack.c.h.b16 %v1388
    %v1564 = vunpack.c.l.b16 %v1389
    %v1565 = vunpack.c.h.b16 %v1389
    %v1566 = vunpack.c.l.b16 %v1390
    %v1567 = vunpack.c.h.b16 %v1390
    %v1568 = vunpack.c.l.b16 %v1391
    %v1569 = vunpack.c.h.b16 %v1391
    %v1570 = vunpack.c.l.b16 %v1392
    %v1571 = vunpack.c.h.b16 %v1392
    %v1572 = vunpack.c.l.b16 %v1393
    %v1573 = vunpack.c.h.b16 %v1393
    %v1574 = vunpack.c.l.b16 %v1394
    %v1575 = vunpack.c.h.b16 %v1394
    %v1576 = vunpack.c.l.b16 %v1395
    %v1577 = vunpack.c.h.b16 %v1395
    %v1578 = vunpack.c.l.b16 %v1396
    %v1579 = vunpack.c.h.b16 %v1396
    %v1580 = vunpack.c.l.b16 %v1397
    %v1581 = vunpack.c.h.b16 %v1397
    %v1582 = vunpack.c.l.b16 %v1398
    %v1583 = vunpack.c.h.b16 %v1398
    %v1584 = vunpack.c.l.b16 %v1399
    %v1585 = vunpack.c.h.b16 %v1399
    %v1586 = vunpack.c.l.b16 %v1400
    %v1587 = vunpack.c.h.b16 %v1400
    %v1588 = vunpack.c.l.b16 %v1401
    %v1589 = vunpack.c.h.b16 %v1401
    %v1590 = vunpack.c.l.b16 %v1402
    %v1591 = vunpack.c.h.b16 %v1402
    %v1592 = vunpack.c.l.b16 %v1403
    %v1593 = vunpack.c.h.b16 %v1403
    %v1594 = vunpack.c.l.b16 %v1404
    %v1595 = vunpack.c.h.b16 %v1404
    %v1596 = vunpack.c.l.b16 %v1405
    %v1597 = vunpack.c.h.b16 %v1405
    %v1598 = vunpack.c.l.b16 %v1406
    %v1599 = vunpack.c.h.b16 %v1406
    %v1600 = vunpack.c.l.b16 %v1407
    %v1601 = vunpack.c.h.b16 %v1407
    %v1602 = vunpack.c.l.b16 %v1408
    %v1603 = vunpack.c.h.b16 %v1408
    %v1604 = vpack.c.b16 %v1484, %v1476
    %v1605 = vpack.c.b16 %v1485, %v1477
    %v1606 = vpack.c.b16 %v1486, %v1478
    %v1607 = vpack.c.b16 %v1487, %v1479
    %v1608 = vpack.c.b16 %v1488, %v1480
    %v1609 = vpack.c.b16 %v1489, %v1481
    %v1610 = vpack.c.b16 %v1490, %v1482
    %v1611 = vpack.c.b16 %v1491, %v1483
    %v1612 = vpack.c.b16 %v1500, %v1492
    %v1613 = vpack.c.b16 %v1501, %v1493
    %v1614 = vpack.c.b16 %v1502, %v1494
    %v1615 = vpack.c.b16 %v1503, %v1495
    %v1616 = vpack.c.b16 %v1504, %v1496
    %v1617 = vpack.c.b16 %v1505, %v1497
    %v1618 = vpack.c.b16 %v1506, %v1498
    %v1619 = vpack.c.b16 %v1507, %v1499
    %v1620 = vpack.c.b16 %v1516, %v1508
    %v1621 = vpack.c.b16 %v1517, %v1509
    %v1622 = vpack.c.b16 %v1518, %v1510
    %v1623 = vpack.c.b16 %v1519, %v1511
    %v1624 = vpack.c.b16 %v1520, %v1512
    %v1625 = vpack.c.b16 %v1521, %v1513
    %v1626 = vpack.c.b16 %v1522, %v1514
    %v1627 = vpack.c.b16 %v1523, %v1515
    %v1628 = vpack.c.b16 %v1532, %v1524
    %v1629 = vpack.c.b16 %v1533, %v1525
    %v1630 = vpack.c.b16 %v1534, %v1526
    %v1631 = vpack.c.b16 %v1535, %v1527
    %v1632 = vpack.c.b16 %v1536, %v1528
    %v1633 = vpack.c.b16 %v1537, %v1529
    %v1634 = vpack.c.b16 %v1538, %v1530
    %v1635 = vpack.c.b16 %v1539, %v1531
    %v1636 = vpack.c.b16 %v1548, %v1540
    %v1637 = vpack.c.b16 %v1549, %v1541
    %v1638 = vpack.c.b16 %v1550, %v1542
    %v1639 = vpack.c.b16 %v1551, %v1543
    %v1640 = vpack.c.b16 %v1552, %v1544
    %v1641 = vpack.c.b16 %v1553, %v1545
    %v1642 = vpack.c.b16 %v1554, %v1546
    %v1643 = vpack.c.b16 %v1555, %v1547
    %v1644 = vpack.c.b16 %v1564, %v1556
    %v1645 = vpack.c.b16 %v1565, %v1557
    %v1646 = vpack.c.b16 %v1566, %v1558
    %v1647 = vpack.c.b16 %v1567, %v1559
    %v1648 = vpack.c.b16 %v1568, %v1560
    %v1649 = vpack.c.b16 %v1569, %v1561
    %v1650 = vpack.c.b16 %v1570, %v1562
    %v1651 = vpack.c.b16 %v1571, %v1563
    %v1652 = vpack.c.b16 %v1580, %v1572
    %v1653 = vpack.c.b16 %v1581, %v1573
    %v1654 = vpack.c.b16 %v1582, %v1574
    %v1655 = vpack.c.b16 %v1583, %v1575
    %v1656 = vpack.c.b16 %v1584, %v1576
    %v1657 = vpack.c.b16 %v1585, %v1577
    %v1658 = vpack.c.b16 %v1586, %v1578
    %v1659 = vpack.c.b16 %v1587, %v1579
    %v1660 = vpack.c.b16 %v1596, %v1588
    %v1661 = vpack.c.b16 %v1597, %v1589
    %v1662 = vpack.c.b16 %v1598, %v1590
    %v1663 = vpack.c.b16 %v1599, %v1591
    %v1664 = vpack.c.b16 %v1600, %v1592
    %v1665 = vpack.c.b16 %v1601, %v1593
    %v1666 = vpack.c.b16 %v1602, %v1594
    %v1667 = vpack.c.b16 %v1603, %v1595
    %1732 = vmatprep.subr.bf16.mxu0 %v1605
    %1733 = vmatpush1.bf16.msra.mxu0 %v1604
    %1734 = vmatprep.subr.bf16.mxu0 %v1613
    %1735 = vmatpush1.bf16.msra.mxu0 %v1612
    %1736 = vmatprep.subr.bf16.mxu0 %v1621
    %1737 = vmatpush1.bf16.msra.mxu0 %v1620
    %1738 = vmatprep.subr.bf16.mxu0 %v1629
    %1739 = vmatpush1.bf16.msra.mxu0 %v1628
    %1740 = vmatprep.subr.bf16.mxu0 %v1637
    %1741 = vmatpush1.bf16.msra.mxu0 %v1636
    %1742 = vmatprep.subr.bf16.mxu0 %v1645
    %1743 = vmatpush1.bf16.msra.mxu0 %v1644
    %1744 = vmatprep.subr.bf16.mxu0 %v1653
    %1745 = vmatpush1.bf16.msra.mxu0 %v1652
    %1746 = vmatprep.subr.bf16.mxu0 %v1661
    %1747 = vmatpush1.bf16.msra.mxu0 %v1660
    %1748 = vmatprep.subr.bf16.mxu0 0
    %1749 = vmatpush1.bf16.msra.mxu0 0
    %1750 = vmatprep.subr.bf16.mxu0 0
    %1751 = vmatpush1.bf16.msra.mxu0 0
    %1752 = vmatprep.subr.bf16.mxu0 0
    %1753 = vmatpush1.bf16.msra.mxu0 0
    %1754 = vmatprep.subr.bf16.mxu0 0
    %1755 = vmatpush1.bf16.msra.mxu0 0
    %1756 = vmatprep.subr.bf16.mxu0 0
    %1757 = vmatpush1.bf16.msra.mxu0 0
    %1758 = vmatprep.subr.bf16.mxu0 0
    %1759 = vmatpush1.bf16.msra.mxu0 0
    %1760 = vmatprep.subr.bf16.mxu0 0
    %1761 = vmatpush1.bf16.msra.mxu0 0
    %1762 = vmatprep.subr.bf16.mxu0 0
    %1763 = vmatpush1.bf16.msra.mxu0 0
    %1764 = vmatprep.mubr.bf16.mxu0 0
    %1765 = vmatmul.mubr.bf16.gmra.mrb[0].mxu0 %v1410
    %v1766 = vpop.f32.mrb[0].mxu0
    %v1767 = vadd.f32 0.0, %v1766
    %v1768 = vpop.f32.mrb[0].mxu0
    %v1769 = vadd.f32 0.0, %v1768
    %v1770 = vpop.f32.mrb[0].mxu0
    %v1771 = vpop.f32.mrb[0].mxu0
    %1772 = vdwg.mxu0
    %1773 = vmatprep.subr.bf16.mxu0 %v1607
    %1774 = vmatpush1.bf16.msra.mxu0 %v1606
    %1775 = vmatprep.subr.bf16.mxu0 %v1615
    %1776 = vmatpush1.bf16.msra.mxu0 %v1614
    %1777 = vmatprep.subr.bf16.mxu0 %v1623
    %1778 = vmatpush1.bf16.msra.mxu0 %v1622
    %1779 = vmatprep.subr.bf16.mxu0 %v1631
    %1780 = vmatpush1.bf16.msra.mxu0 %v1630
    %1781 = vmatprep.subr.bf16.mxu0 %v1639
    %1782 = vmatpush1.bf16.msra.mxu0 %v1638
    %1783 = vmatprep.subr.bf16.mxu0 %v1647
    %1784 = vmatpush1.bf16.msra.mxu0 %v1646
    %1785 = vmatprep.subr.bf16.mxu0 %v1655
    %1786 = vmatpush1.bf16.msra.mxu0 %v1654
    %1787 = vmatprep.subr.bf16.mxu0 %v1663
    %1788 = vmatpush1.bf16.msra.mxu0 %v1662
    %1789 = vmatprep.subr.bf16.mxu0 0
    %1790 = vmatpush1.bf16.msra.mxu0 0
    %1791 = vmatprep.subr.bf16.mxu0 0
    %1792 = vmatpush1.bf16.msra.mxu0 0
    %1793 = vmatprep.subr.bf16.mxu0 0
    %1794 = vmatpush1.bf16.msra.mxu0 0
    %1795 = vmatprep.subr.bf16.mxu0 0
    %1796 = vmatpush1.bf16.msra.mxu0 0
    %1797 = vmatprep.subr.bf16.mxu0 0
    %1798 = vmatpush1.bf16.msra.mxu0 0
    %1799 = vmatprep.subr.bf16.mxu0 0
    %1800 = vmatpush1.bf16.msra.mxu0 0
    %1801 = vmatprep.subr.bf16.mxu0 0
    %1802 = vmatpush1.bf16.msra.mxu0 0
    %1803 = vmatprep.subr.bf16.mxu0 0
    %1804 = vmatpush1.bf16.msra.mxu0 0
    %1805 = vmatprep.mubr.bf16.mxu0 0
    %1806 = vmatmul.mubr.bf16.gmra.mrb[0].mxu0 %v1410
    %v1807 = vpop.f32.mrb[0].mxu0
    %v1808 = vadd.f32 0.0, %v1807
    %v1809 = vpop.f32.mrb[0].mxu0
    %v1810 = vadd.f32 0.0, %v1809
    %v1811 = vpop.f32.mrb[0].mxu0
    %v1812 = vpop.f32.mrb[0].mxu0
    %1813 = vdwg.mxu0
    %1814 = vmatprep.subr.bf16.mxu0 %v1609
    %1815 = vmatpush1.bf16.msra.mxu0 %v1608
    %1816 = vmatprep.subr.bf16.mxu0 %v1617
    %1817 = vmatpush1.bf16.msra.mxu0 %v1616
    %1818 = vmatprep.subr.bf16.mxu0 %v1625
    %1819 = vmatpush1.bf16.msra.mxu0 %v1624
    %1820 = vmatprep.subr.bf16.mxu0 %v1633
    %1821 = vmatpush1.bf16.msra.mxu0 %v1632
    %1822 = vmatprep.subr.bf16.mxu0 %v1641
    %1823 = vmatpush1.bf16.msra.mxu0 %v1640
    %1824 = vmatprep.subr.bf16.mxu0 %v1649
    %1825 = vmatpush1.bf16.msra.mxu0 %v1648
    %1826 = vmatprep.subr.bf16.mxu0 %v1657
    %1827 = vmatpush1.bf16.msra.mxu0 %v1656
    %1828 = vmatprep.subr.bf16.mxu0 %v1665
    %1829 = vmatpush1.bf16.msra.mxu0 %v1664
    %1830 = vmatprep.subr.bf16.mxu0 0
    %1831 = vmatpush1.bf16.msra.mxu0 0
    %1832 = vmatprep.subr.bf16.mxu0 0
    %1833 = vmatpush1.bf16.msra.mxu0 0
    %1834 = vmatprep.subr.bf16.mxu0 0
    %1835 = vmatpush1.bf16.msra.mxu0 0
    %1836 = vmatprep.subr.bf16.mxu0 0
    %1837 = vmatpush1.bf16.msra.mxu0 0
    %1838 = vmatprep.subr.bf16.mxu0 0
    %1839 = vmatpush1.bf16.msra.mxu0 0
    %1840 = vmatprep.subr.bf16.mxu0 0
    %1841 = vmatpush1.bf16.msra.mxu0 0
    %1842 = vmatprep.subr.bf16.mxu0 0
    %1843 = vmatpush1.bf16.msra.mxu0 0
    %1844 = vmatprep.subr.bf16.mxu0 0
    %1845 = vmatpush1.bf16.msra.mxu0 0
    %1846 = vmatprep.mubr.bf16.mxu0 0
    %1847 = vmatmul.mubr.bf16.gmra.mrb[0].mxu0 %v1410
    %v1848 = vpop.f32.mrb[0].mxu0
    %v1849 = vadd.f32 0.0, %v1848
    %v1850 = vpop.f32.mrb[0].mxu0
    %v1851 = vadd.f32 0.0, %v1850
    %v1852 = vpop.f32.mrb[0].mxu0
    %v1853 = vpop.f32.mrb[0].mxu0
    %1854 = vdwg.mxu0
    %1855 = vmatprep.subr.bf16.mxu0 %v1611
    %1856 = vmatpush1.bf16.msra.mxu0 %v1610
    %1857 = vmatprep.subr.bf16.mxu0 %v1619
    %1858 = vmatpush1.bf16.msra.mxu0 %v1618
    %1859 = vmatprep.subr.bf16.mxu0 %v1627
    %1860 = vmatpush1.bf16.msra.mxu0 %v1626
    %1861 = vmatprep.subr.bf16.mxu0 %v1635
    %1862 = vmatpush1.bf16.msra.mxu0 %v1634
    %1863 = vmatprep.subr.bf16.mxu0 %v1643
    %1864 = vmatpush1.bf16.msra.mxu0 %v1642
    %1865 = vmatprep.subr.bf16.mxu0 %v1651
    %1866 = vmatpush1.bf16.msra.mxu0 %v1650
    %1867 = vmatprep.subr.bf16.mxu0 %v1659
    %1868 = vmatpush1.bf16.msra.mxu0 %v1658
    %1869 = vmatprep.subr.bf16.mxu0 %v1667
    %1870 = vmatpush1.bf16.msra.mxu0 %v1666
    %1871 = vmatprep.subr.bf16.mxu0 0
    %1872 = vmatpush1.bf16.msra.mxu0 0
    %1873 = vmatprep.subr.bf16.mxu0 0
    %1874 = vmatpush1.bf16.msra.mxu0 0
    %1875 = vmatprep.subr.bf16.mxu0 0
    %1876 = vmatpush1.bf16.msra.mxu0 0
    %1877 = vmatprep.subr.bf16.mxu0 0
    %1878 = vmatpush1.bf16.msra.mxu0 0
    %1879 = vmatprep.subr.bf16.mxu0 0
    %1880 = vmatpush1.bf16.msra.mxu0 0
    %1881 = vmatprep.subr.bf16.mxu0 0
    %1882 = vmatpush1.bf16.msra.mxu0 0
    %1883 = vmatprep.subr.bf16.mxu0 0
    %1884 = vmatpush1.bf16.msra.mxu0 0
    %1885 = vmatprep.subr.bf16.mxu0 0
    %1886 = vmatpush1.bf16.msra.mxu0 0
    %1887 = vmatprep.mubr.bf16.mxu0 0
    %1888 = vmatmul.mubr.bf16.gmra.mrb[0].mxu0 %v1410
    %v1889 = vpop.f32.mrb[0].mxu0
    %v1890 = vadd.f32 0.0, %v1889
    %v1891 = vpop.f32.mrb[0].mxu0
    %v1892 = vadd.f32 0.0, %v1891
    %v1893 = vpop.f32.mrb[0].mxu0
    %v1894 = vpop.f32.mrb[0].mxu0
    %1895 = vdwg.mxu0
    %v1896 = vadd.f32 %v1337, %v1767
    %v1897 = vadd.f32 %v1338, %v1769
    %v1898 = vadd.f32 %v1339, %v1808
    %v1899 = vadd.f32 %v1340, %v1810
    %v1900 = vadd.f32 %v1341, %v1849
    %v1901 = vadd.f32 %v1342, %v1851
    %v1902 = vadd.f32 %v1343, %v1890
    %v1903 = vadd.f32 %v1344, %v1892
    %v1904 = vld [vmem:[#allocation10 + $0x400] sm:$0xff]
    %v1905 = vld [vmem:[#allocation10 + $0x408] sm:$0xff]
    %v1906 = vld [vmem:[#allocation10 + $0x410] sm:$0xff]
    %v1907 = vld [vmem:[#allocation10 + $0x418] sm:$0xff]
    %v1908 = vld [vmem:[#allocation10 + $0x420] sm:$0xff]
    %v1909 = vld [vmem:[#allocation10 + $0x428] sm:$0xff]
    %v1910 = vld [vmem:[#allocation10 + $0x430] sm:$0xff]
    %v1911 = vld [vmem:[#allocation10 + $0x438] sm:$0xff]
    %v1912 = vld [vmem:[#allocation10 + $0x440] sm:$0xff]
    %v1913 = vld [vmem:[#allocation10 + $0x448] sm:$0xff]
    %v1914 = vld [vmem:[#allocation10 + $0x450] sm:$0xff]
    %v1915 = vld [vmem:[#allocation10 + $0x458] sm:$0xff]
    %v1916 = vld [vmem:[#allocation10 + $0x460] sm:$0xff]
    %v1917 = vld [vmem:[#allocation10 + $0x468] sm:$0xff]
    %v1918 = vld [vmem:[#allocation10 + $0x470] sm:$0xff]
    %v1919 = vld [vmem:[#allocation10 + $0x478] sm:$0xff]
    %v1920 = vld [vmem:[#allocation10 + $0x480] sm:$0xff]
    %v1921 = vld [vmem:[#allocation10 + $0x488] sm:$0xff]
    %v1922 = vld [vmem:[#allocation10 + $0x490] sm:$0xff]
    %v1923 = vld [vmem:[#allocation10 + $0x498] sm:$0xff]
    %v1924 = vld [vmem:[#allocation10 + $0x4a0] sm:$0xff]
    %v1925 = vld [vmem:[#allocation10 + $0x4a8] sm:$0xff]
    %v1926 = vld [vmem:[#allocation10 + $0x4b0] sm:$0xff]
    %v1927 = vld [vmem:[#allocation10 + $0x4b8] sm:$0xff]
    %v1928 = vld [vmem:[#allocation10 + $0x4c0] sm:$0xff]
    %v1929 = vld [vmem:[#allocation10 + $0x4c8] sm:$0xff]
    %v1930 = vld [vmem:[#allocation10 + $0x4d0] sm:$0xff]
    %v1931 = vld [vmem:[#allocation10 + $0x4d8] sm:$0xff]
    %v1932 = vld [vmem:[#allocation10 + $0x4e0] sm:$0xff]
    %v1933 = vld [vmem:[#allocation10 + $0x4e8] sm:$0xff]
    %v1934 = vld [vmem:[#allocation10 + $0x4f0] sm:$0xff]
    %v1935 = vld [vmem:[#allocation10 + $0x4f8] sm:$0xff]
    %v1936 = vld [vmem:[#allocation10 + $0x500] sm:$0xff]
    %v1937 = vld [vmem:[#allocation10 + $0x508] sm:$0xff]
    %v1938 = vld [vmem:[#allocation10 + $0x510] sm:$0xff]
    %v1939 = vld [vmem:[#allocation10 + $0x518] sm:$0xff]
    %v1940 = vld [vmem:[#allocation10 + $0x520] sm:$0xff]
    %v1941 = vld [vmem:[#allocation10 + $0x528] sm:$0xff]
    %v1942 = vld [vmem:[#allocation10 + $0x530] sm:$0xff]
    %v1943 = vld [vmem:[#allocation10 + $0x538] sm:$0xff]
    %v1944 = vld [vmem:[#allocation10 + $0x540] sm:$0xff]
    %v1945 = vld [vmem:[#allocation10 + $0x548] sm:$0xff]
    %v1946 = vld [vmem:[#allocation10 + $0x550] sm:$0xff]
    %v1947 = vld [vmem:[#allocation10 + $0x558] sm:$0xff]
    %v1948 = vld [vmem:[#allocation10 + $0x560] sm:$0xff]
    %v1949 = vld [vmem:[#allocation10 + $0x568] sm:$0xff]
    %v1950 = vld [vmem:[#allocation10 + $0x570] sm:$0xff]
    %v1951 = vld [vmem:[#allocation10 + $0x578] sm:$0xff]
    %v1952 = vld [vmem:[#allocation10 + $0x580] sm:$0xff]
    %v1953 = vld [vmem:[#allocation10 + $0x588] sm:$0xff]
    %v1954 = vld [vmem:[#allocation10 + $0x590] sm:$0xff]
    %v1955 = vld [vmem:[#allocation10 + $0x598] sm:$0xff]
    %v1956 = vld [vmem:[#allocation10 + $0x5a0] sm:$0xff]
    %v1957 = vld [vmem:[#allocation10 + $0x5a8] sm:$0xff]
    %v1958 = vld [vmem:[#allocation10 + $0x5b0] sm:$0xff]
    %v1959 = vld [vmem:[#allocation10 + $0x5b8] sm:$0xff]
    %v1960 = vld [vmem:[#allocation10 + $0x5c0] sm:$0xff]
    %v1961 = vld [vmem:[#allocation10 + $0x5c8] sm:$0xff]
    %v1962 = vld [vmem:[#allocation10 + $0x5d0] sm:$0xff]
    %v1963 = vld [vmem:[#allocation10 + $0x5d8] sm:$0xff]
    %v1964 = vld [vmem:[#allocation10 + $0x5e0] sm:$0xff]
    %v1965 = vld [vmem:[#allocation10 + $0x5e8] sm:$0xff]
    %v1966 = vld [vmem:[#allocation10 + $0x5f0] sm:$0xff]
    %v1967 = vld [vmem:[#allocation10 + $0x5f8] sm:$0xff]
    %v1968 = vrot.slane %v788, 2
    %v2034 = vunpack.c.l.b16 %v1904
    %v2035 = vunpack.c.h.b16 %v1904
    %v2036 = vunpack.c.l.b16 %v1905
    %v2037 = vunpack.c.h.b16 %v1905
    %v2038 = vunpack.c.l.b16 %v1906
    %v2039 = vunpack.c.h.b16 %v1906
    %v2040 = vunpack.c.l.b16 %v1907
    %v2041 = vunpack.c.h.b16 %v1907
    %v2042 = vunpack.c.l.b16 %v1908
    %v2043 = vunpack.c.h.b16 %v1908
    %v2044 = vunpack.c.l.b16 %v1909
    %v2045 = vunpack.c.h.b16 %v1909
    %v2046 = vunpack.c.l.b16 %v1910
    %v2047 = vunpack.c.h.b16 %v1910
    %v2048 = vunpack.c.l.b16 %v1911
    %v2049 = vunpack.c.h.b16 %v1911
    %v2050 = vunpack.c.l.b16 %v1912
    %v2051 = vunpack.c.h.b16 %v1912
    %v2052 = vunpack.c.l.b16 %v1913
    %v2053 = vunpack.c.h.b16 %v1913
    %v2054 = vunpack.c.l.b16 %v1914
    %v2055 = vunpack.c.h.b16 %v1914
    %v2056 = vunpack.c.l.b16 %v1915
    %v2057 = vunpack.c.h.b16 %v1915
    %v2058 = vunpack.c.l.b16 %v1916
    %v2059 = vunpack.c.h.b16 %v1916
    %v2060 = vunpack.c.l.b16 %v1917
    %v2061 = vunpack.c.h.b16 %v1917
    %v2062 = vunpack.c.l.b16 %v1918
    %v2063 = vunpack.c.h.b16 %v1918
    %v2064 = vunpack.c.l.b16 %v1919
    %v2065 = vunpack.c.h.b16 %v1919
    %v2066 = vunpack.c.l.b16 %v1920
    %v2067 = vunpack.c.h.b16 %v1920
    %v2068 = vunpack.c.l.b16 %v1921
    %v2069 = vunpack.c.h.b16 %v1921
    %v2070 = vunpack.c.l.b16 %v1922
    %v2071 = vunpack.c.h.b16 %v1922
    %v2072 = vunpack.c.l.b16 %v1923
    %v2073 = vunpack.c.h.b16 %v1923
    %v2074 = vunpack.c.l.b16 %v1924
    %v2075 = vunpack.c.h.b16 %v1924
    %v2076 = vunpack.c.l.b16 %v1925
    %v2077 = vunpack.c.h.b16 %v1925
    %v2078 = vunpack.c.l.b16 %v1926
    %v2079 = vunpack.c.h.b16 %v1926
    %v2080 = vunpack.c.l.b16 %v1927
    %v2081 = vunpack.c.h.b16 %v1927
    %v2082 = vunpack.c.l.b16 %v1928
    %v2083 = vunpack.c.h.b16 %v1928
    %v2084 = vunpack.c.l.b16 %v1929
    %v2085 = vunpack.c.h.b16 %v1929
    %v2086 = vunpack.c.l.b16 %v1930
    %v2087 = vunpack.c.h.b16 %v1930
    %v2088 = vunpack.c.l.b16 %v1931
    %v2089 = vunpack.c.h.b16 %v1931
    %v2090 = vunpack.c.l.b16 %v1932
    %v2091 = vunpack.c.h.b16 %v1932
    %v2092 = vunpack.c.l.b16 %v1933
    %v2093 = vunpack.c.h.b16 %v1933
    %v2094 = vunpack.c.l.b16 %v1934
    %v2095 = vunpack.c.h.b16 %v1934
    %v2096 = vunpack.c.l.b16 %v1935
    %v2097 = vunpack.c.h.b16 %v1935
    %v2098 = vunpack.c.l.b16 %v1936
    %v2099 = vunpack.c.h.b16 %v1936
    %v2100 = vunpack.c.l.b16 %v1937
    %v2101 = vunpack.c.h.b16 %v1937
    %v2102 = vunpack.c.l.b16 %v1938
    %v2103 = vunpack.c.h.b16 %v1938
    %v2104 = vunpack.c.l.b16 %v1939
    %v2105 = vunpack.c.h.b16 %v1939
    %v2106 = vunpack.c.l.b16 %v1940
    %v2107 = vunpack.c.h.b16 %v1940
    %v2108 = vunpack.c.l.b16 %v1941
    %v2109 = vunpack.c.h.b16 %v1941
    %v2110 = vunpack.c.l.b16 %v1942
    %v2111 = vunpack.c.h.b16 %v1942
    %v2112 = vunpack.c.l.b16 %v1943
    %v2113 = vunpack.c.h.b16 %v1943
    %v2114 = vunpack.c.l.b16 %v1944
    %v2115 = vunpack.c.h.b16 %v1944
    %v2116 = vunpack.c.l.b16 %v1945
    %v2117 = vunpack.c.h.b16 %v1945
    %v2118 = vunpack.c.l.b16 %v1946
    %v2119 = vunpack.c.h.b16 %v1946
    %v2120 = vunpack.c.l.b16 %v1947
    %v2121 = vunpack.c.h.b16 %v1947
    %v2122 = vunpack.c.l.b16 %v1948
    %v2123 = vunpack.c.h.b16 %v1948
    %v2124 = vunpack.c.l.b16 %v1949
    %v2125 = vunpack.c.h.b16 %v1949
    %v2126 = vunpack.c.l.b16 %v1950
    %v2127 = vunpack.c.h.b16 %v1950
    %v2128 = vunpack.c.l.b16 %v1951
    %v2129 = vunpack.c.h.b16 %v1951
    %v2130 = vunpack.c.l.b16 %v1952
    %v2131 = vunpack.c.h.b16 %v1952
    %v2132 = vunpack.c.l.b16 %v1953
    %v2133 = vunpack.c.h.b16 %v1953
    %v2134 = vunpack.c.l.b16 %v1954
    %v2135 = vunpack.c.h.b16 %v1954
    %v2136 = vunpack.c.l.b16 %v1955
    %v2137 = vunpack.c.h.b16 %v1955
    %v2138 = vunpack.c.l.b16 %v1956
    %v2139 = vunpack.c.h.b16 %v1956
    %v2140 = vunpack.c.l.b16 %v1957
    %v2141 = vunpack.c.h.b16 %v1957
    %v2142 = vunpack.c.l.b16 %v1958
    %v2143 = vunpack.c.h.b16 %v1958
    %v2144 = vunpack.c.l.b16 %v1959
    %v2145 = vunpack.c.h.b16 %v1959
    %v2146 = vunpack.c.l.b16 %v1960
    %v2147 = vunpack.c.h.b16 %v1960
    %v2148 = vunpack.c.l.b16 %v1961
    %v2149 = vunpack.c.h.b16 %v1961
    %v2150 = vunpack.c.l.b16 %v1962
    %v2151 = vunpack.c.h.b16 %v1962
    %v2152 = vunpack.c.l.b16 %v1963
    %v2153 = vunpack.c.h.b16 %v1963
    %v2154 = vunpack.c.l.b16 %v1964
    %v2155 = vunpack.c.h.b16 %v1964
    %v2156 = vunpack.c.l.b16 %v1965
    %v2157 = vunpack.c.h.b16 %v1965
    %v2158 = vunpack.c.l.b16 %v1966
    %v2159 = vunpack.c.h.b16 %v1966
    %v2160 = vunpack.c.l.b16 %v1967
    %v2161 = vunpack.c.h.b16 %v1967
    %v2162 = vpack.c.b16 %v2042, %v2034
    %v2163 = vpack.c.b16 %v2043, %v2035
    %v2164 = vpack.c.b16 %v2044, %v2036
    %v2165 = vpack.c.b16 %v2045, %v2037
    %v2166 = vpack.c.b16 %v2046, %v2038
    %v2167 = vpack.c.b16 %v2047, %v2039
    %v2168 = vpack.c.b16 %v2048, %v2040
    %v2169 = vpack.c.b16 %v2049, %v2041
    %v2170 = vpack.c.b16 %v2058, %v2050
    %v2171 = vpack.c.b16 %v2059, %v2051
    %v2172 = vpack.c.b16 %v2060, %v2052
    %v2173 = vpack.c.b16 %v2061, %v2053
    %v2174 = vpack.c.b16 %v2062, %v2054
    %v2175 = vpack.c.b16 %v2063, %v2055
    %v2176 = vpack.c.b16 %v2064, %v2056
    %v2177 = vpack.c.b16 %v2065, %v2057
    %v2178 = vpack.c.b16 %v2074, %v2066
    %v2179 = vpack.c.b16 %v2075, %v2067
    %v2180 = vpack.c.b16 %v2076, %v2068
    %v2181 = vpack.c.b16 %v2077, %v2069
    %v2182 = vpack.c.b16 %v2078, %v2070
    %v2183 = vpack.c.b16 %v2079, %v2071
    %v2184 = vpack.c.b16 %v2080, %v2072
    %v2185 = vpack.c.b16 %v2081, %v2073
    %v2186 = vpack.c.b16 %v2090, %v2082
    %v2187 = vpack.c.b16 %v2091, %v2083
    %v2188 = vpack.c.b16 %v2092, %v2084
    %v2189 = vpack.c.b16 %v2093, %v2085
    %v2190 = vpack.c.b16 %v2094, %v2086
    %v2191 = vpack.c.b16 %v2095, %v2087
    %v2192 = vpack.c.b16 %v2096, %v2088
    %v2193 = vpack.c.b16 %v2097, %v2089
    %v2194 = vpack.c.b16 %v2106, %v2098
    %v2195 = vpack.c.b16 %v2107, %v2099
    %v2196 = vpack.c.b16 %v2108, %v2100
    %v2197 = vpack.c.b16 %v2109, %v2101
    %v2198 = vpack.c.b16 %v2110, %v2102
    %v2199 = vpack.c.b16 %v2111, %v2103
    %v2200 = vpack.c.b16 %v2112, %v2104
    %v2201 = vpack.c.b16 %v2113, %v2105
    %v2202 = vpack.c.b16 %v2122, %v2114
    %v2203 = vpack.c.b16 %v2123, %v2115
    %v2204 = vpack.c.b16 %v2124, %v2116
    %v2205 = vpack.c.b16 %v2125, %v2117
    %v2206 = vpack.c.b16 %v2126, %v2118
    %v2207 = vpack.c.b16 %v2127, %v2119
    %v2208 = vpack.c.b16 %v2128, %v2120
    %v2209 = vpack.c.b16 %v2129, %v2121
    %v2210 = vpack.c.b16 %v2138, %v2130
    %v2211 = vpack.c.b16 %v2139, %v2131
    %v2212 = vpack.c.b16 %v2140, %v2132
    %v2213 = vpack.c.b16 %v2141, %v2133
    %v2214 = vpack.c.b16 %v2142, %v2134
    %v2215 = vpack.c.b16 %v2143, %v2135
    %v2216 = vpack.c.b16 %v2144, %v2136
    %v2217 = vpack.c.b16 %v2145, %v2137
    %v2218 = vpack.c.b16 %v2154, %v2146
    %v2219 = vpack.c.b16 %v2155, %v2147
    %v2220 = vpack.c.b16 %v2156, %v2148
    %v2221 = vpack.c.b16 %v2157, %v2149
    %v2222 = vpack.c.b16 %v2158, %v2150
    %v2223 = vpack.c.b16 %v2159, %v2151
    %v2224 = vpack.c.b16 %v2160, %v2152
    %v2225 = vpack.c.b16 %v2161, %v2153
    %2290 = vmatprep.subr.bf16.mxu0 %v2163
    %2291 = vmatpush1.bf16.msra.mxu0 %v2162
    %2292 = vmatprep.subr.bf16.mxu0 %v2171
    %2293 = vmatpush1.bf16.msra.mxu0 %v2170
    %2294 = vmatprep.subr.bf16.mxu0 %v2179
    %2295 = vmatpush1.bf16.msra.mxu0 %v2178
    %2296 = vmatprep.subr.bf16.mxu0 %v2187
    %2297 = vmatpush1.bf16.msra.mxu0 %v2186
    %2298 = vmatprep.subr.bf16.mxu0 %v2195
    %2299 = vmatpush1.bf16.msra.mxu0 %v2194
    %2300 = vmatprep.subr.bf16.mxu0 %v2203
    %2301 = vmatpush1.bf16.msra.mxu0 %v2202
    %2302 = vmatprep.subr.bf16.mxu0 %v2211
    %2303 = vmatpush1.bf16.msra.mxu0 %v2210
    %2304 = vmatprep.subr.bf16.mxu0 %v2219
    %2305 = vmatpush1.bf16.msra.mxu0 %v2218
    %2306 = vmatprep.subr.bf16.mxu0 0
    %2307 = vmatpush1.bf16.msra.mxu0 0
    %2308 = vmatprep.subr.bf16.mxu0 0
    %2309 = vmatpush1.bf16.msra.mxu0 0
    %2310 = vmatprep.subr.bf16.mxu0 0
    %2311 = vmatpush1.bf16.msra.mxu0 0
    %2312 = vmatprep.subr.bf16.mxu0 0
    %2313 = vmatpush1.bf16.msra.mxu0 0
    %2314 = vmatprep.subr.bf16.mxu0 0
    %2315 = vmatpush1.bf16.msra.mxu0 0
    %2316 = vmatprep.subr.bf16.mxu0 0
    %2317 = vmatpush1.bf16.msra.mxu0 0
    %2318 = vmatprep.subr.bf16.mxu0 0
    %2319 = vmatpush1.bf16.msra.mxu0 0
    %2320 = vmatprep.subr.bf16.mxu0 0
    %2321 = vmatpush1.bf16.msra.mxu0 0
    %2322 = vmatprep.mubr.bf16.mxu0 0
    %2323 = vmatmul.mubr.bf16.gmra.mrb[0].mxu0 %v1968
    %v2324 = vpop.f32.mrb[0].mxu0
    %v2325 = vadd.f32 0.0, %v2324
    %v2326 = vpop.f32.mrb[0].mxu0
    %v2327 = vadd.f32 0.0, %v2326
    %v2328 = vpop.f32.mrb[0].mxu0
    %v2329 = vpop.f32.mrb[0].mxu0
    %2330 = vdwg.mxu0
    %2331 = vmatprep.subr.bf16.mxu0 %v2165
    %2332 = vmatpush1.bf16.msra.mxu0 %v2164
    %2333 = vmatprep.subr.bf16.mxu0 %v2173
    %2334 = vmatpush1.bf16.msra.mxu0 %v2172
    %2335 = vmatprep.subr.bf16.mxu0 %v2181
    %2336 = vmatpush1.bf16.msra.mxu0 %v2180
    %2337 = vmatprep.subr.bf16.mxu0 %v2189
    %2338 = vmatpush1.bf16.msra.mxu0 %v2188
    %2339 = vmatprep.subr.bf16.mxu0 %v2197
    %2340 = vmatpush1.bf16.msra.mxu0 %v2196
    %2341 = vmatprep.subr.bf16.mxu0 %v2205
    %2342 = vmatpush1.bf16.msra.mxu0 %v2204
    %2343 = vmatprep.subr.bf16.mxu0 %v2213
    %2344 = vmatpush1.bf16.msra.mxu0 %v2212
    %2345 = vmatprep.subr.bf16.mxu0 %v2221
    %2346 = vmatpush1.bf16.msra.mxu0 %v2220
    %2347 = vmatprep.subr.bf16.mxu0 0
    %2348 = vmatpush1.bf16.msra.mxu0 0
    %2349 = vmatprep.subr.bf16.mxu0 0
    %2350 = vmatpush1.bf16.msra.mxu0 0
    %2351 = vmatprep.subr.bf16.mxu0 0
    %2352 = vmatpush1.bf16.msra.mxu0 0
    %2353 = vmatprep.subr.bf16.mxu0 0
    %2354 = vmatpush1.bf16.msra.mxu0 0
    %2355 = vmatprep.subr.bf16.mxu0 0
    %2356 = vmatpush1.bf16.msra.mxu0 0
    %2357 = vmatprep.subr.bf16.mxu0 0
    %2358 = vmatpush1.bf16.msra.mxu0 0
    %2359 = vmatprep.subr.bf16.mxu0 0
    %2360 = vmatpush1.bf16.msra.mxu0 0
    %2361 = vmatprep.subr.bf16.mxu0 0
    %2362 = vmatpush1.bf16.msra.mxu0 0
    %2363 = vmatprep.mubr.bf16.mxu0 0
    %2364 = vmatmul.mubr.bf16.gmra.mrb[0].mxu0 %v1968
    %v2365 = vpop.f32.mrb[0].mxu0
    %v2366 = vadd.f32 0.0, %v2365
    %v2367 = vpop.f32.mrb[0].mxu0
    %v2368 = vadd.f32 0.0, %v2367
    %v2369 = vpop.f32.mrb[0].mxu0
    %v2370 = vpop.f32.mrb[0].mxu0
    %2371 = vdwg.mxu0
    %2372 = vmatprep.subr.bf16.mxu0 %v2167
    %2373 = vmatpush1.bf16.msra.mxu0 %v2166
    %2374 = vmatprep.subr.bf16.mxu0 %v2175
    %2375 = vmatpush1.bf16.msra.mxu0 %v2174
    %2376 = vmatprep.subr.bf16.mxu0 %v2183
    %2377 = vmatpush1.bf16.msra.mxu0 %v2182
    %2378 = vmatprep.subr.bf16.mxu0 %v2191
    %2379 = vmatpush1.bf16.msra.mxu0 %v2190
    %2380 = vmatprep.subr.bf16.mxu0 %v2199
    %2381 = vmatpush1.bf16.msra.mxu0 %v2198
    %2382 = vmatprep.subr.bf16.mxu0 %v2207
    %2383 = vmatpush1.bf16.msra.mxu0 %v2206
    %2384 = vmatprep.subr.bf16.mxu0 %v2215
    %2385 = vmatpush1.bf16.msra.mxu0 %v2214
    %2386 = vmatprep.subr.bf16.mxu0 %v2223
    %2387 = vmatpush1.bf16.msra.mxu0 %v2222
    %2388 = vmatprep.subr.bf16.mxu0 0
    %2389 = vmatpush1.bf16.msra.mxu0 0
    %2390 = vmatprep.subr.bf16.mxu0 0
    %2391 = vmatpush1.bf16.msra.mxu0 0
    %2392 = vmatprep.subr.bf16.mxu0 0
    %2393 = vmatpush1.bf16.msra.mxu0 0
    %2394 = vmatprep.subr.bf16.mxu0 0
    %2395 = vmatpush1.bf16.msra.mxu0 0
    %2396 = vmatprep.subr.bf16.mxu0 0
    %2397 = vmatpush1.bf16.msra.mxu0 0
    %2398 = vmatprep.subr.bf16.mxu0 0
    %2399 = vmatpush1.bf16.msra.mxu0 0
    %2400 = vmatprep.subr.bf16.mxu0 0
    %2401 = vmatpush1.bf16.msra.mxu0 0
    %2402 = vmatprep.subr.bf16.mxu0 0
    %2403 = vmatpush1.bf16.msra.mxu0 0
    %2404 = vmatprep.mubr.bf16.mxu0 0
    %2405 = vmatmul.mubr.bf16.gmra.mrb[0].mxu0 %v1968
    %v2406 = vpop.f32.mrb[0].mxu0
    %v2407 = vadd.f32 0.0, %v2406
    %v2408 = vpop.f32.mrb[0].mxu0
    %v2409 = vadd.f32 0.0, %v2408
    %v2410 = vpop.f32.mrb[0].mxu0
    %v2411 = vpop.f32.mrb[0].mxu0
    %2412 = vdwg.mxu0
    %2413 = vmatprep.subr.bf16.mxu0 %v2169
    %2414 = vmatpush1.bf16.msra.mxu0 %v2168
    %2415 = vmatprep.subr.bf16.mxu0 %v2177
    %2416 = vmatpush1.bf16.msra.mxu0 %v2176
    %2417 = vmatprep.subr.bf16.mxu0 %v2185
    %2418 = vmatpush1.bf16.msra.mxu0 %v2184
    %2419 = vmatprep.subr.bf16.mxu0 %v2193
    %2420 = vmatpush1.bf16.msra.mxu0 %v2192
    %2421 = vmatprep.subr.bf16.mxu0 %v2201
    %2422 = vmatpush1.bf16.msra.mxu0 %v2200
    %2423 = vmatprep.subr.bf16.mxu0 %v2209
    %2424 = vmatpush1.bf16.msra.mxu0 %v2208
    %2425 = vmatprep.subr.bf16.mxu0 %v2217
    %2426 = vmatpush1.bf16.msra.mxu0 %v2216
    %2427 = vmatprep.subr.bf16.mxu0 %v2225
    %2428 = vmatpush1.bf16.msra.mxu0 %v2224
    %2429 = vmatprep.subr.bf16.mxu0 0
    %2430 = vmatpush1.bf16.msra.mxu0 0
    %2431 = vmatprep.subr.bf16.mxu0 0
    %2432 = vmatpush1.bf16.msra.mxu0 0
    %2433 = vmatprep.subr.bf16.mxu0 0
    %2434 = vmatpush1.bf16.msra.mxu0 0
    %2435 = vmatprep.subr.bf16.mxu0 0
    %2436 = vmatpush1.bf16.msra.mxu0 0
    %2437 = vmatprep.subr.bf16.mxu0 0
    %2438 = vmatpush1.bf16.msra.mxu0 0
    %2439 = vmatprep.subr.bf16.mxu0 0
    %2440 = vmatpush1.bf16.msra.mxu0 0
    %2441 = vmatprep.subr.bf16.mxu0 0
    %2442 = vmatpush1.bf16.msra.mxu0 0
    %2443 = vmatprep.subr.bf16.mxu0 0
    %2444 = vmatpush1.bf16.msra.mxu0 0
    %2445 = vmatprep.mubr.bf16.mxu0 0
    %2446 = vmatmul.mubr.bf16.gmra.mrb[0].mxu0 %v1968
    %v2447 = vpop.f32.mrb[0].mxu0
    %v2448 = vadd.f32 0.0, %v2447
    %v2449 = vpop.f32.mrb[0].mxu0
    %v2450 = vadd.f32 0.0, %v2449
    %v2451 = vpop.f32.mrb[0].mxu0
    %v2452 = vpop.f32.mrb[0].mxu0
    %2453 = vdwg.mxu0
    %v2454 = vadd.f32 %v1896, %v2325
    %v2455 = vadd.f32 %v1897, %v2327
    %v2456 = vadd.f32 %v1898, %v2366
    %v2457 = vadd.f32 %v1899, %v2368
    %v2458 = vadd.f32 %v1900, %v2407
    %v2459 = vadd.f32 %v1901, %v2409
    %v2460 = vadd.f32 %v1902, %v2448
    %v2461 = vadd.f32 %v1903, %v2450
    %v2462 = vld [vmem:[#allocation10 + $0x600] sm:$0xff]
    %v2463 = vld [vmem:[#allocation10 + $0x608] sm:$0xff]
    %v2464 = vld [vmem:[#allocation10 + $0x610] sm:$0xff]
    %v2465 = vld [vmem:[#allocation10 + $0x618] sm:$0xff]
    %v2466 = vld [vmem:[#allocation10 + $0x620] sm:$0xff]
    %v2467 = vld [vmem:[#allocation10 + $0x628] sm:$0xff]
    %v2468 = vld [vmem:[#allocation10 + $0x630] sm:$0xff]
    %v2469 = vld [vmem:[#allocation10 + $0x638] sm:$0xff]
    %v2470 = vld [vmem:[#allocation10 + $0x640] sm:$0xff]
    %v2471 = vld [vmem:[#allocation10 + $0x648] sm:$0xff]
    %v2472 = vld [vmem:[#allocation10 + $0x650] sm:$0xff]
    %v2473 = vld [vmem:[#allocation10 + $0x658] sm:$0xff]
    %v2474 = vld [vmem:[#allocation10 + $0x660] sm:$0xff]
    %v2475 = vld [vmem:[#allocation10 + $0x668] sm:$0xff]
    %v2476 = vld [vmem:[#allocation10 + $0x670] sm:$0xff]
    %v2477 = vld [vmem:[#allocation10 + $0x678] sm:$0xff]
    %v2478 = vld [vmem:[#allocation10 + $0x680] sm:$0xff]
    %v2479 = vld [vmem:[#allocation10 + $0x688] sm:$0xff]
    %v2480 = vld [vmem:[#allocation10 + $0x690] sm:$0xff]
    %v2481 = vld [vmem:[#allocation10 + $0x698] sm:$0xff]
    %v2482 = vld [vmem:[#allocation10 + $0x6a0] sm:$0xff]
    %v2483 = vld [vmem:[#allocation10 + $0x6a8] sm:$0xff]
    %v2484 = vld [vmem:[#allocation10 + $0x6b0] sm:$0xff]
    %v2485 = vld [vmem:[#allocation10 + $0x6b8] sm:$0xff]
    %v2486 = vld [vmem:[#allocation10 + $0x6c0] sm:$0xff]
    %v2487 = vld [vmem:[#allocation10 + $0x6c8] sm:$0xff]
    %v2488 = vld [vmem:[#allocation10 + $0x6d0] sm:$0xff]
    %v2489 = vld [vmem:[#allocation10 + $0x6d8] sm:$0xff]
    %v2490 = vld [vmem:[#allocation10 + $0x6e0] sm:$0xff]
    %v2491 = vld [vmem:[#allocation10 + $0x6e8] sm:$0xff]
    %v2492 = vld [vmem:[#allocation10 + $0x6f0] sm:$0xff]
    %v2493 = vld [vmem:[#allocation10 + $0x6f8] sm:$0xff]
    %v2494 = vld [vmem:[#allocation10 + $0x700] sm:$0xff]
    %v2495 = vld [vmem:[#allocation10 + $0x708] sm:$0xff]
    %v2496 = vld [vmem:[#allocation10 + $0x710] sm:$0xff]
    %v2497 = vld [vmem:[#allocation10 + $0x718] sm:$0xff]
    %v2498 = vld [vmem:[#allocation10 + $0x720] sm:$0xff]
    %v2499 = vld [vmem:[#allocation10 + $0x728] sm:$0xff]
    %v2500 = vld [vmem:[#allocation10 + $0x730] sm:$0xff]
    %v2501 = vld [vmem:[#allocation10 + $0x738] sm:$0xff]
    %v2502 = vld [vmem:[#allocation10 + $0x740] sm:$0xff]
    %v2503 = vld [vmem:[#allocation10 + $0x748] sm:$0xff]
    %v2504 = vld [vmem:[#allocation10 + $0x750] sm:$0xff]
    %v2505 = vld [vmem:[#allocation10 + $0x758] sm:$0xff]
    %v2506 = vld [vmem:[#allocation10 + $0x760] sm:$0xff]
    %v2507 = vld [vmem:[#allocation10 + $0x768] sm:$0xff]
    %v2508 = vld [vmem:[#allocation10 + $0x770] sm:$0xff]
    %v2509 = vld [vmem:[#allocation10 + $0x778] sm:$0xff]
    %v2510 = vld [vmem:[#allocation10 + $0x780] sm:$0xff]
    %v2511 = vld [vmem:[#allocation10 + $0x788] sm:$0xff]
    %v2512 = vld [vmem:[#allocation10 + $0x790] sm:$0xff]
    %v2513 = vld [vmem:[#allocation10 + $0x798] sm:$0xff]
    %v2514 = vld [vmem:[#allocation10 + $0x7a0] sm:$0xff]
    %v2515 = vld [vmem:[#allocation10 + $0x7a8] sm:$0xff]
    %v2516 = vld [vmem:[#allocation10 + $0x7b0] sm:$0xff]
    %v2517 = vld [vmem:[#allocation10 + $0x7b8] sm:$0xff]
    %v2518 = vld [vmem:[#allocation10 + $0x7c0] sm:$0xff]
    %v2519 = vld [vmem:[#allocation10 + $0x7c8] sm:$0xff]
    %v2520 = vld [vmem:[#allocation10 + $0x7d0] sm:$0xff]
    %v2521 = vld [vmem:[#allocation10 + $0x7d8] sm:$0xff]
    %v2522 = vld [vmem:[#allocation10 + $0x7e0] sm:$0xff]
    %v2523 = vld [vmem:[#allocation10 + $0x7e8] sm:$0xff]
    %v2524 = vld [vmem:[#allocation10 + $0x7f0] sm:$0xff]
    %v2525 = vld [vmem:[#allocation10 + $0x7f8] sm:$0xff]
    %v2526 = vrot.slane %v788, 3
    %v2592 = vunpack.c.l.b16 %v2462
    %v2593 = vunpack.c.h.b16 %v2462
    %v2594 = vunpack.c.l.b16 %v2463
    %v2595 = vunpack.c.h.b16 %v2463
    %v2596 = vunpack.c.l.b16 %v2464
    %v2597 = vunpack.c.h.b16 %v2464
    %v2598 = vunpack.c.l.b16 %v2465
    %v2599 = vunpack.c.h.b16 %v2465
    %v2600 = vunpack.c.l.b16 %v2466
    %v2601 = vunpack.c.h.b16 %v2466
    %v2602 = vunpack.c.l.b16 %v2467
    %v2603 = vunpack.c.h.b16 %v2467
    %v2604 = vunpack.c.l.b16 %v2468
    %v2605 = vunpack.c.h.b16 %v2468
    %v2606 = vunpack.c.l.b16 %v2469
    %v2607 = vunpack.c.h.b16 %v2469
    %v2608 = vunpack.c.l.b16 %v2470
    %v2609 = vunpack.c.h.b16 %v2470
    %v2610 = vunpack.c.l.b16 %v2471
    %v2611 = vunpack.c.h.b16 %v2471
    %v2612 = vunpack.c.l.b16 %v2472
    %v2613 = vunpack.c.h.b16 %v2472
    %v2614 = vunpack.c.l.b16 %v2473
    %v2615 = vunpack.c.h.b16 %v2473
    %v2616 = vunpack.c.l.b16 %v2474
    %v2617 = vunpack.c.h.b16 %v2474
    %v2618 = vunpack.c.l.b16 %v2475
    %v2619 = vunpack.c.h.b16 %v2475
    %v2620 = vunpack.c.l.b16 %v2476
    %v2621 = vunpack.c.h.b16 %v2476
    %v2622 = vunpack.c.l.b16 %v2477
    %v2623 = vunpack.c.h.b16 %v2477
    %v2624 = vunpack.c.l.b16 %v2478
    %v2625 = vunpack.c.h.b16 %v2478
    %v2626 = vunpack.c.l.b16 %v2479
    %v2627 = vunpack.c.h.b16 %v2479
    %v2628 = vunpack.c.l.b16 %v2480
    %v2629 = vunpack.c.h.b16 %v2480
    %v2630 = vunpack.c.l.b16 %v2481
    %v2631 = vunpack.c.h.b16 %v2481
    %v2632 = vunpack.c.l.b16 %v2482
    %v2633 = vunpack.c.h.b16 %v2482
    %v2634 = vunpack.c.l.b16 %v2483
    %v2635 = vunpack.c.h.b16 %v2483
    %v2636 = vunpack.c.l.b16 %v2484
    %v2637 = vunpack.c.h.b16 %v2484
    %v2638 = vunpack.c.l.b16 %v2485
    %v2639 = vunpack.c.h.b16 %v2485
    %v2640 = vunpack.c.l.b16 %v2486
    %v2641 = vunpack.c.h.b16 %v2486
    %v2642 = vunpack.c.l.b16 %v2487
    %v2643 = vunpack.c.h.b16 %v2487
    %v2644 = vunpack.c.l.b16 %v2488
    %v2645 = vunpack.c.h.b16 %v2488
    %v2646 = vunpack.c.l.b16 %v2489
    %v2647 = vunpack.c.h.b16 %v2489
    %v2648 = vunpack.c.l.b16 %v2490
    %v2649 = vunpack.c.h.b16 %v2490
    %v2650 = vunpack.c.l.b16 %v2491
    %v2651 = vunpack.c.h.b16 %v2491
    %v2652 = vunpack.c.l.b16 %v2492
    %v2653 = vunpack.c.h.b16 %v2492
    %v2654 = vunpack.c.l.b16 %v2493
    %v2655 = vunpack.c.h.b16 %v2493
    %v2656 = vunpack.c.l.b16 %v2494
    %v2657 = vunpack.c.h.b16 %v2494
    %v2658 = vunpack.c.l.b16 %v2495
    %v2659 = vunpack.c.h.b16 %v2495
    %v2660 = vunpack.c.l.b16 %v2496
    %v2661 = vunpack.c.h.b16 %v2496
    %v2662 = vunpack.c.l.b16 %v2497
    %v2663 = vunpack.c.h.b16 %v2497
    %v2664 = vunpack.c.l.b16 %v2498
    %v2665 = vunpack.c.h.b16 %v2498
    %v2666 = vunpack.c.l.b16 %v2499
    %v2667 = vunpack.c.h.b16 %v2499
    %v2668 = vunpack.c.l.b16 %v2500
    %v2669 = vunpack.c.h.b16 %v2500
    %v2670 = vunpack.c.l.b16 %v2501
    %v2671 = vunpack.c.h.b16 %v2501
    %v2672 = vunpack.c.l.b16 %v2502
    %v2673 = vunpack.c.h.b16 %v2502
    %v2674 = vunpack.c.l.b16 %v2503
    %v2675 = vunpack.c.h.b16 %v2503
    %v2676 = vunpack.c.l.b16 %v2504
    %v2677 = vunpack.c.h.b16 %v2504
    %v2678 = vunpack.c.l.b16 %v2505
    %v2679 = vunpack.c.h.b16 %v2505
    %v2680 = vunpack.c.l.b16 %v2506
    %v2681 = vunpack.c.h.b16 %v2506
    %v2682 = vunpack.c.l.b16 %v2507
    %v2683 = vunpack.c.h.b16 %v2507
    %v2684 = vunpack.c.l.b16 %v2508
    %v2685 = vunpack.c.h.b16 %v2508
    %v2686 = vunpack.c.l.b16 %v2509
    %v2687 = vunpack.c.h.b16 %v2509
    %v2688 = vunpack.c.l.b16 %v2510
    %v2689 = vunpack.c.h.b16 %v2510
    %v2690 = vunpack.c.l.b16 %v2511
    %v2691 = vunpack.c.h.b16 %v2511
    %v2692 = vunpack.c.l.b16 %v2512
    %v2693 = vunpack.c.h.b16 %v2512
    %v2694 = vunpack.c.l.b16 %v2513
    %v2695 = vunpack.c.h.b16 %v2513
    %v2696 = vunpack.c.l.b16 %v2514
    %v2697 = vunpack.c.h.b16 %v2514
    %v2698 = vunpack.c.l.b16 %v2515
    %v2699 = vunpack.c.h.b16 %v2515
    %v2700 = vunpack.c.l.b16 %v2516
    %v2701 = vunpack.c.h.b16 %v2516
    %v2702 = vunpack.c.l.b16 %v2517
    %v2703 = vunpack.c.h.b16 %v2517
    %v2704 = vunpack.c.l.b16 %v2518
    %v2705 = vunpack.c.h.b16 %v2518
    %v2706 = vunpack.c.l.b16 %v2519
    %v2707 = vunpack.c.h.b16 %v2519
    %v2708 = vunpack.c.l.b16 %v2520
    %v2709 = vunpack.c.h.b16 %v2520
    %v2710 = vunpack.c.l.b16 %v2521
    %v2711 = vunpack.c.h.b16 %v2521
    %v2712 = vunpack.c.l.b16 %v2522
    %v2713 = vunpack.c.h.b16 %v2522
    %v2714 = vunpack.c.l.b16 %v2523
    %v2715 = vunpack.c.h.b16 %v2523
    %v2716 = vunpack.c.l.b16 %v2524
    %v2717 = vunpack.c.h.b16 %v2524
    %v2718 = vunpack.c.l.b16 %v2525
    %v2719 = vunpack.c.h.b16 %v2525
    %v2720 = vpack.c.b16 %v2600, %v2592
    %v2721 = vpack.c.b16 %v2601, %v2593
    %v2722 = vpack.c.b16 %v2602, %v2594
    %v2723 = vpack.c.b16 %v2603, %v2595
    %v2724 = vpack.c.b16 %v2604, %v2596
    %v2725 = vpack.c.b16 %v2605, %v2597
    %v2726 = vpack.c.b16 %v2606, %v2598
    %v2727 = vpack.c.b16 %v2607, %v2599
    %v2728 = vpack.c.b16 %v2616, %v2608
    %v2729 = vpack.c.b16 %v2617, %v2609
    %v2730 = vpack.c.b16 %v2618, %v2610
    %v2731 = vpack.c.b16 %v2619, %v2611
    %v2732 = vpack.c.b16 %v2620, %v2612
    %v2733 = vpack.c.b16 %v2621, %v2613
    %v2734 = vpack.c.b16 %v2622, %v2614
    %v2735 = vpack.c.b16 %v2623, %v2615
    %v2736 = vpack.c.b16 %v2632, %v2624
    %v2737 = vpack.c.b16 %v2633, %v2625
    %v2738 = vpack.c.b16 %v2634, %v2626
    %v2739 = vpack.c.b16 %v2635, %v2627
    %v2740 = vpack.c.b16 %v2636, %v2628
    %v2741 = vpack.c.b16 %v2637, %v2629
    %v2742 = vpack.c.b16 %v2638, %v2630
    %v2743 = vpack.c.b16 %v2639, %v2631
    %v2744 = vpack.c.b16 %v2648, %v2640
    %v2745 = vpack.c.b16 %v2649, %v2641
    %v2746 = vpack.c.b16 %v2650, %v2642
    %v2747 = vpack.c.b16 %v2651, %v2643
    %v2748 = vpack.c.b16 %v2652, %v2644
    %v2749 = vpack.c.b16 %v2653, %v2645
    %v2750 = vpack.c.b16 %v2654, %v2646
    %v2751 = vpack.c.b16 %v2655, %v2647
    %v2752 = vpack.c.b16 %v2664, %v2656
    %v2753 = vpack.c.b16 %v2665, %v2657
    %v2754 = vpack.c.b16 %v2666, %v2658
    %v2755 = vpack.c.b16 %v2667, %v2659
    %v2756 = vpack.c.b16 %v2668, %v2660
    %v2757 = vpack.c.b16 %v2669, %v2661
    %v2758 = vpack.c.b16 %v2670, %v2662
    %v2759 = vpack.c.b16 %v2671, %v2663
    %v2760 = vpack.c.b16 %v2680, %v2672
    %v2761 = vpack.c.b16 %v2681, %v2673
    %v2762 = vpack.c.b16 %v2682, %v2674
    %v2763 = vpack.c.b16 %v2683, %v2675
    %v2764 = vpack.c.b16 %v2684, %v2676
    %v2765 = vpack.c.b16 %v2685, %v2677
    %v2766 = vpack.c.b16 %v2686, %v2678
    %v2767 = vpack.c.b16 %v2687, %v2679
    %v2768 = vpack.c.b16 %v2696, %v2688
    %v2769 = vpack.c.b16 %v2697, %v2689
    %v2770 = vpack.c.b16 %v2698, %v2690
    %v2771 = vpack.c.b16 %v2699, %v2691
    %v2772 = vpack.c.b16 %v2700, %v2692
    %v2773 = vpack.c.b16 %v2701, %v2693
    %v2774 = vpack.c.b16 %v2702, %v2694
    %v2775 = vpack.c.b16 %v2703, %v2695
    %v2776 = vpack.c.b16 %v2712, %v2704
    %v2777 = vpack.c.b16 %v2713, %v2705
    %v2778 = vpack.c.b16 %v2714, %v2706
    %v2779 = vpack.c.b16 %v2715, %v2707
    %v2780 = vpack.c.b16 %v2716, %v2708
    %v2781 = vpack.c.b16 %v2717, %v2709
    %v2782 = vpack.c.b16 %v2718, %v2710
    %v2783 = vpack.c.b16 %v2719, %v2711
    %2848 = vmatprep.subr.bf16.mxu0 %v2721
    %2849 = vmatpush1.bf16.msra.mxu0 %v2720
    %2850 = vmatprep.subr.bf16.mxu0 %v2729
    %2851 = vmatpush1.bf16.msra.mxu0 %v2728
    %2852 = vmatprep.subr.bf16.mxu0 %v2737
    %2853 = vmatpush1.bf16.msra.mxu0 %v2736
    %2854 = vmatprep.subr.bf16.mxu0 %v2745
    %2855 = vmatpush1.bf16.msra.mxu0 %v2744
    %2856 = vmatprep.subr.bf16.mxu0 %v2753
    %2857 = vmatpush1.bf16.msra.mxu0 %v2752
    %2858 = vmatprep.subr.bf16.mxu0 %v2761
    %2859 = vmatpush1.bf16.msra.mxu0 %v2760
    %2860 = vmatprep.subr.bf16.mxu0 %v2769
    %2861 = vmatpush1.bf16.msra.mxu0 %v2768
    %2862 = vmatprep.subr.bf16.mxu0 %v2777
    %2863 = vmatpush1.bf16.msra.mxu0 %v2776
    %2864 = vmatprep.subr.bf16.mxu0 0
    %2865 = vmatpush1.bf16.msra.mxu0 0
    %2866 = vmatprep.subr.bf16.mxu0 0
    %2867 = vmatpush1.bf16.msra.mxu0 0
    %2868 = vmatprep.subr.bf16.mxu0 0
    %2869 = vmatpush1.bf16.msra.mxu0 0
    %2870 = vmatprep.subr.bf16.mxu0 0
    %2871 = vmatpush1.bf16.msra.mxu0 0
    %2872 = vmatprep.subr.bf16.mxu0 0
    %2873 = vmatpush1.bf16.msra.mxu0 0
    %2874 = vmatprep.subr.bf16.mxu0 0
    %2875 = vmatpush1.bf16.msra.mxu0 0
    %2876 = vmatprep.subr.bf16.mxu0 0
    %2877 = vmatpush1.bf16.msra.mxu0 0
    %2878 = vmatprep.subr.bf16.mxu0 0
    %2879 = vmatpush1.bf16.msra.mxu0 0
    %2880 = vmatprep.mubr.bf16.mxu0 0
    %2881 = vmatmul.mubr.bf16.gmra.mrb[0].mxu0 %v2526
    %v2882 = vpop.f32.mrb[0].mxu0
    %v2883 = vadd.f32 0.0, %v2882
    %v2884 = vpop.f32.mrb[0].mxu0
    %v2885 = vadd.f32 0.0, %v2884
    %v2886 = vpop.f32.mrb[0].mxu0
    %v2887 = vpop.f32.mrb[0].mxu0
    %2888 = vdwg.mxu0
    %2889 = vmatprep.subr.bf16.mxu0 %v2723
    %2890 = vmatpush1.bf16.msra.mxu0 %v2722
    %2891 = vmatprep.subr.bf16.mxu0 %v2731
    %2892 = vmatpush1.bf16.msra.mxu0 %v2730
    %2893 = vmatprep.subr.bf16.mxu0 %v2739
    %2894 = vmatpush1.bf16.msra.mxu0 %v2738
    %2895 = vmatprep.subr.bf16.mxu0 %v2747
    %2896 = vmatpush1.bf16.msra.mxu0 %v2746
    %2897 = vmatprep.subr.bf16.mxu0 %v2755
    %2898 = vmatpush1.bf16.msra.mxu0 %v2754
    %2899 = vmatprep.subr.bf16.mxu0 %v2763
    %2900 = vmatpush1.bf16.msra.mxu0 %v2762
    %2901 = vmatprep.subr.bf16.mxu0 %v2771
    %2902 = vmatpush1.bf16.msra.mxu0 %v2770
    %2903 = vmatprep.subr.bf16.mxu0 %v2779
    %2904 = vmatpush1.bf16.msra.mxu0 %v2778
    %2905 = vmatprep.subr.bf16.mxu0 0
    %2906 = vmatpush1.bf16.msra.mxu0 0
    %2907 = vmatprep.subr.bf16.mxu0 0
    %2908 = vmatpush1.bf16.msra.mxu0 0
    %2909 = vmatprep.subr.bf16.mxu0 0
    %2910 = vmatpush1.bf16.msra.mxu0 0
    %2911 = vmatprep.subr.bf16.mxu0 0
    %2912 = vmatpush1.bf16.msra.mxu0 0
    %2913 = vmatprep.subr.bf16.mxu0 0
    %2914 = vmatpush1.bf16.msra.mxu0 0
    %2915 = vmatprep.subr.bf16.mxu0 0
    %2916 = vmatpush1.bf16.msra.mxu0 0
    %2917 = vmatprep.subr.bf16.mxu0 0
    %2918 = vmatpush1.bf16.msra.mxu0 0
    %2919 = vmatprep.subr.bf16.mxu0 0
    %2920 = vmatpush1.bf16.msra.mxu0 0
    %2921 = vmatprep.mubr.bf16.mxu0 0
    %2922 = vmatmul.mubr.bf16.gmra.mrb[0].mxu0 %v2526
    %v2923 = vpop.f32.mrb[0].mxu0
    %v2924 = vadd.f32 0.0, %v2923
    %v2925 = vpop.f32.mrb[0].mxu0
    %v2926 = vadd.f32 0.0, %v2925
    %v2927 = vpop.f32.mrb[0].mxu0
    %v2928 = vpop.f32.mrb[0].mxu0
    %2929 = vdwg.mxu0
    %2930 = vmatprep.subr.bf16.mxu0 %v2725
    %2931 = vmatpush1.bf16.msra.mxu0 %v2724
    %2932 = vmatprep.subr.bf16.mxu0 %v2733
    %2933 = vmatpush1.bf16.msra.mxu0 %v2732
    %2934 = vmatprep.subr.bf16.mxu0 %v2741
    %2935 = vmatpush1.bf16.msra.mxu0 %v2740
    %2936 = vmatprep.subr.bf16.mxu0 %v2749
    %2937 = vmatpush1.bf16.msra.mxu0 %v2748
    %2938 = vmatprep.subr.bf16.mxu0 %v2757
    %2939 = vmatpush1.bf16.msra.mxu0 %v2756
    %2940 = vmatprep.subr.bf16.mxu0 %v2765
    %2941 = vmatpush1.bf16.msra.mxu0 %v2764
    %2942 = vmatprep.subr.bf16.mxu0 %v2773
    %2943 = vmatpush1.bf16.msra.mxu0 %v2772
    %2944 = vmatprep.subr.bf16.mxu0 %v2781
    %2945 = vmatpush1.bf16.msra.mxu0 %v2780
    %2946 = vmatprep.subr.bf16.mxu0 0
    %2947 = vmatpush1.bf16.msra.mxu0 0
    %2948 = vmatprep.subr.bf16.mxu0 0
    %2949 = vmatpush1.bf16.msra.mxu0 0
    %2950 = vmatprep.subr.bf16.mxu0 0
    %2951 = vmatpush1.bf16.msra.mxu0 0
    %2952 = vmatprep.subr.bf16.mxu0 0
    %2953 = vmatpush1.bf16.msra.mxu0 0
    %2954 = vmatprep.subr.bf16.mxu0 0
    %2955 = vmatpush1.bf16.msra.mxu0 0
    %2956 = vmatprep.subr.bf16.mxu0 0
    %2957 = vmatpush1.bf16.msra.mxu0 0
    %2958 = vmatprep.subr.bf16.mxu0 0
    %2959 = vmatpush1.bf16.msra.mxu0 0
    %2960 = vmatprep.subr.bf16.mxu0 0
    %2961 = vmatpush1.bf16.msra.mxu0 0
    %2962 = vmatprep.mubr.bf16.mxu0 0
    %2963 = vmatmul.mubr.bf16.gmra.mrb[0].mxu0 %v2526
    %v2964 = vpop.f32.mrb[0].mxu0
    %v2965 = vadd.f32 0.0, %v2964
    %v2966 = vpop.f32.mrb[0].mxu0
    %v2967 = vadd.f32 0.0, %v2966
    %v2968 = vpop.f32.mrb[0].mxu0
    %v2969 = vpop.f32.mrb[0].mxu0
    %2970 = vdwg.mxu0
    %2971 = vmatprep.subr.bf16.mxu0 %v2727
    %2972 = vmatpush1.bf16.msra.mxu0 %v2726
    %2973 = vmatprep.subr.bf16.mxu0 %v2735
    %2974 = vmatpush1.bf16.msra.mxu0 %v2734
    %2975 = vmatprep.subr.bf16.mxu0 %v2743
    %2976 = vmatpush1.bf16.msra.mxu0 %v2742
    %2977 = vmatprep.subr.bf16.mxu0 %v2751
    %2978 = vmatpush1.bf16.msra.mxu0 %v2750
    %2979 = vmatprep.subr.bf16.mxu0 %v2759
    %2980 = vmatpush1.bf16.msra.mxu0 %v2758
    %2981 = vmatprep.subr.bf16.mxu0 %v2767
    %2982 = vmatpush1.bf16.msra.mxu0 %v2766
    %2983 = vmatprep.subr.bf16.mxu0 %v2775
    %2984 = vmatpush1.bf16.msra.mxu0 %v2774
    %2985 = vmatprep.subr.bf16.mxu0 %v2783
    %2986 = vmatpush1.bf16.msra.mxu0 %v2782
    %2987 = vmatprep.subr.bf16.mxu0 0
    %2988 = vmatpush1.bf16.msra.mxu0 0
    %2989 = vmatprep.subr.bf16.mxu0 0
    %2990 = vmatpush1.bf16.msra.mxu0 0
    %2991 = vmatprep.subr.bf16.mxu0 0
    %2992 = vmatpush1.bf16.msra.mxu0 0
    %2993 = vmatprep.subr.bf16.mxu0 0
    %2994 = vmatpush1.bf16.msra.mxu0 0
    %2995 = vmatprep.subr.bf16.mxu0 0
    %2996 = vmatpush1.bf16.msra.mxu0 0
    %2997 = vmatprep.subr.bf16.mxu0 0
    %2998 = vmatpush1.bf16.msra.mxu0 0
    %2999 = vmatprep.subr.bf16.mxu0 0
    %3000 = vmatpush1.bf16.msra.mxu0 0
    %3001 = vmatprep.subr.bf16.mxu0 0
    %3002 = vmatpush1.bf16.msra.mxu0 0
    %3003 = vmatprep.mubr.bf16.mxu0 0
    %3004 = vmatmul.mubr.bf16.gmra.mrb[0].mxu0 %v2526
    %v3005 = vpop.f32.mrb[0].mxu0
    %v3006 = vadd.f32 0.0, %v3005
    %v3007 = vpop.f32.mrb[0].mxu0
    %v3008 = vadd.f32 0.0, %v3007
    %v3009 = vpop.f32.mrb[0].mxu0
    %v3010 = vpop.f32.mrb[0].mxu0
    %3011 = vdwg.mxu0
    %v3012 = vadd.f32 %v2454, %v2883
    %v3013 = vadd.f32 %v2455, %v2885
    %v3014 = vadd.f32 %v2456, %v2924
    %v3015 = vadd.f32 %v2457, %v2926
    %v3016 = vadd.f32 %v2458, %v2965
    %v3017 = vadd.f32 %v2459, %v2967
    %v3018 = vadd.f32 %v2460, %v3006
    %v3019 = vadd.f32 %v2461, %v3008
    %v3020 = vpack.c.bf16 %v616, %v616
    %v3021 = vld [vmem:[#allocation10 + $0x800] sm:$0xff]
    %v3022 = vld [vmem:[#allocation10 + $0x808] sm:$0xff]
    %v3023 = vld [vmem:[#allocation10 + $0x810] sm:$0xff]
    %v3024 = vld [vmem:[#allocation10 + $0x818] sm:$0xff]
    %v3025 = vld [vmem:[#allocation10 + $0x820] sm:$0xff]
    %v3026 = vld [vmem:[#allocation10 + $0x828] sm:$0xff]
    %v3027 = vld [vmem:[#allocation10 + $0x830] sm:$0xff]
    %v3028 = vld [vmem:[#allocation10 + $0x838] sm:$0xff]
    %v3029 = vld [vmem:[#allocation10 + $0x840] sm:$0xff]
    %v3030 = vld [vmem:[#allocation10 + $0x848] sm:$0xff]
    %v3031 = vld [vmem:[#allocation10 + $0x850] sm:$0xff]
    %v3032 = vld [vmem:[#allocation10 + $0x858] sm:$0xff]
    %v3033 = vld [vmem:[#allocation10 + $0x860] sm:$0xff]
    %v3034 = vld [vmem:[#allocation10 + $0x868] sm:$0xff]
    %v3035 = vld [vmem:[#allocation10 + $0x870] sm:$0xff]
    %v3036 = vld [vmem:[#allocation10 + $0x878] sm:$0xff]
    %v3037 = vld [vmem:[#allocation10 + $0x880] sm:$0xff]
    %v3038 = vld [vmem:[#allocation10 + $0x888] sm:$0xff]
    %v3039 = vld [vmem:[#allocation10 + $0x890] sm:$0xff]
    %v3040 = vld [vmem:[#allocation10 + $0x898] sm:$0xff]
    %v3041 = vld [vmem:[#allocation10 + $0x8a0] sm:$0xff]
    %v3042 = vld [vmem:[#allocation10 + $0x8a8] sm:$0xff]
    %v3043 = vld [vmem:[#allocation10 + $0x8b0] sm:$0xff]
    %v3044 = vld [vmem:[#allocation10 + $0x8b8] sm:$0xff]
    %v3045 = vld [vmem:[#allocation10 + $0x8c0] sm:$0xff]
    %v3046 = vld [vmem:[#allocation10 + $0x8c8] sm:$0xff]
    %v3047 = vld [vmem:[#allocation10 + $0x8d0] sm:$0xff]
    %v3048 = vld [vmem:[#allocation10 + $0x8d8] sm:$0xff]
    %v3049 = vld [vmem:[#allocation10 + $0x8e0] sm:$0xff]
    %v3050 = vld [vmem:[#allocation10 + $0x8e8] sm:$0xff]
    %v3051 = vld [vmem:[#allocation10 + $0x8f0] sm:$0xff]
    %v3052 = vld [vmem:[#allocation10 + $0x8f8] sm:$0xff]
    %v3053 = vld [vmem:[#allocation10 + $0x900] sm:$0xff]
    %v3054 = vld [vmem:[#allocation10 + $0x908] sm:$0xff]
    %v3055 = vld [vmem:[#allocation10 + $0x910] sm:$0xff]
    %v3056 = vld [vmem:[#allocation10 + $0x918] sm:$0xff]
    %v3057 = vld [vmem:[#allocation10 + $0x920] sm:$0xff]
    %v3058 = vld [vmem:[#allocation10 + $0x928] sm:$0xff]
    %v3059 = vld [vmem:[#allocation10 + $0x930] sm:$0xff]
    %v3060 = vld [vmem:[#allocation10 + $0x938] sm:$0xff]
    %v3061 = vld [vmem:[#allocation10 + $0x940] sm:$0xff]
    %v3062 = vld [vmem:[#allocation10 + $0x948] sm:$0xff]
    %v3063 = vld [vmem:[#allocation10 + $0x950] sm:$0xff]
    %v3064 = vld [vmem:[#allocation10 + $0x958] sm:$0xff]
    %v3065 = vld [vmem:[#allocation10 + $0x960] sm:$0xff]
    %v3066 = vld [vmem:[#allocation10 + $0x968] sm:$0xff]
    %v3067 = vld [vmem:[#allocation10 + $0x970] sm:$0xff]
    %v3068 = vld [vmem:[#allocation10 + $0x978] sm:$0xff]
    %v3069 = vld [vmem:[#allocation10 + $0x980] sm:$0xff]
    %v3070 = vld [vmem:[#allocation10 + $0x988] sm:$0xff]
    %v3071 = vld [vmem:[#allocation10 + $0x990] sm:$0xff]
    %v3072 = vld [vmem:[#allocation10 + $0x998] sm:$0xff]
    %v3073 = vld [vmem:[#allocation10 + $0x9a0] sm:$0xff]
    %v3074 = vld [vmem:[#allocation10 + $0x9a8] sm:$0xff]
    %v3075 = vld [vmem:[#allocation10 + $0x9b0] sm:$0xff]
    %v3076 = vld [vmem:[#allocation10 + $0x9b8] sm:$0xff]
    %v3077 = vld [vmem:[#allocation10 + $0x9c0] sm:$0xff]
    %v3078 = vld [vmem:[#allocation10 + $0x9c8] sm:$0xff]
    %v3079 = vld [vmem:[#allocation10 + $0x9d0] sm:$0xff]
    %v3080 = vld [vmem:[#allocation10 + $0x9d8] sm:$0xff]
    %v3081 = vld [vmem:[#allocation10 + $0x9e0] sm:$0xff]
    %v3082 = vld [vmem:[#allocation10 + $0x9e8] sm:$0xff]
    %v3083 = vld [vmem:[#allocation10 + $0x9f0] sm:$0xff]
    %v3084 = vld [vmem:[#allocation10 + $0x9f8] sm:$0xff]
    %v3149 = vunpack.c.l.b16 %v3021
    %v3150 = vunpack.c.h.b16 %v3021
    %v3151 = vunpack.c.l.b16 %v3022
    %v3152 = vunpack.c.h.b16 %v3022
    %v3153 = vunpack.c.l.b16 %v3023
    %v3154 = vunpack.c.h.b16 %v3023
    %v3155 = vunpack.c.l.b16 %v3024
    %v3156 = vunpack.c.h.b16 %v3024
    %v3157 = vunpack.c.l.b16 %v3025
    %v3158 = vunpack.c.h.b16 %v3025
    %v3159 = vunpack.c.l.b16 %v3026
    %v3160 = vunpack.c.h.b16 %v3026
    %v3161 = vunpack.c.l.b16 %v3027
    %v3162 = vunpack.c.h.b16 %v3027
    %v3163 = vunpack.c.l.b16 %v3028
    %v3164 = vunpack.c.h.b16 %v3028
    %v3165 = vunpack.c.l.b16 %v3029
    %v3166 = vunpack.c.h.b16 %v3029
    %v3167 = vunpack.c.l.b16 %v3030
    %v3168 = vunpack.c.h.b16 %v3030
    %v3169 = vunpack.c.l.b16 %v3031
    %v3170 = vunpack.c.h.b16 %v3031
    %v3171 = vunpack.c.l.b16 %v3032
    %v3172 = vunpack.c.h.b16 %v3032
    %v3173 = vunpack.c.l.b16 %v3033
    %v3174 = vunpack.c.h.b16 %v3033
    %v3175 = vunpack.c.l.b16 %v3034
    %v3176 = vunpack.c.h.b16 %v3034
    %v3177 = vunpack.c.l.b16 %v3035
    %v3178 = vunpack.c.h.b16 %v3035
    %v3179 = vunpack.c.l.b16 %v3036
    %v3180 = vunpack.c.h.b16 %v3036
    %v3181 = vunpack.c.l.b16 %v3037
    %v3182 = vunpack.c.h.b16 %v3037
    %v3183 = vunpack.c.l.b16 %v3038
    %v3184 = vunpack.c.h.b16 %v3038
    %v3185 = vunpack.c.l.b16 %v3039
    %v3186 = vunpack.c.h.b16 %v3039
    %v3187 = vunpack.c.l.b16 %v3040
    %v3188 = vunpack.c.h.b16 %v3040
    %v3189 = vunpack.c.l.b16 %v3041
    %v3190 = vunpack.c.h.b16 %v3041
    %v3191 = vunpack.c.l.b16 %v3042
    %v3192 = vunpack.c.h.b16 %v3042
    %v3193 = vunpack.c.l.b16 %v3043
    %v3194 = vunpack.c.h.b16 %v3043
    %v3195 = vunpack.c.l.b16 %v3044
    %v3196 = vunpack.c.h.b16 %v3044
    %v3197 = vunpack.c.l.b16 %v3045
    %v3198 = vunpack.c.h.b16 %v3045
    %v3199 = vunpack.c.l.b16 %v3046
    %v3200 = vunpack.c.h.b16 %v3046
    %v3201 = vunpack.c.l.b16 %v3047
    %v3202 = vunpack.c.h.b16 %v3047
    %v3203 = vunpack.c.l.b16 %v3048
    %v3204 = vunpack.c.h.b16 %v3048
    %v3205 = vunpack.c.l.b16 %v3049
    %v3206 = vunpack.c.h.b16 %v3049
    %v3207 = vunpack.c.l.b16 %v3050
    %v3208 = vunpack.c.h.b16 %v3050
    %v3209 = vunpack.c.l.b16 %v3051
    %v3210 = vunpack.c.h.b16 %v3051
    %v3211 = vunpack.c.l.b16 %v3052
    %v3212 = vunpack.c.h.b16 %v3052
    %v3213 = vunpack.c.l.b16 %v3053
    %v3214 = vunpack.c.h.b16 %v3053
    %v3215 = vunpack.c.l.b16 %v3054
    %v3216 = vunpack.c.h.b16 %v3054
    %v3217 = vunpack.c.l.b16 %v3055
    %v3218 = vunpack.c.h.b16 %v3055
    %v3219 = vunpack.c.l.b16 %v3056
    %v3220 = vunpack.c.h.b16 %v3056
    %v3221 = vunpack.c.l.b16 %v3057
    %v3222 = vunpack.c.h.b16 %v3057
    %v3223 = vunpack.c.l.b16 %v3058
    %v3224 = vunpack.c.h.b16 %v3058
    %v3225 = vunpack.c.l.b16 %v3059
    %v3226 = vunpack.c.h.b16 %v3059
    %v3227 = vunpack.c.l.b16 %v3060
    %v3228 = vunpack.c.h.b16 %v3060
    %v3229 = vunpack.c.l.b16 %v3061
    %v3230 = vunpack.c.h.b16 %v3061
    %v3231 = vunpack.c.l.b16 %v3062
    %v3232 = vunpack.c.h.b16 %v3062
    %v3233 = vunpack.c.l.b16 %v3063
    %v3234 = vunpack.c.h.b16 %v3063
    %v3235 = vunpack.c.l.b16 %v3064
    %v3236 = vunpack.c.h.b16 %v3064
    %v3237 = vunpack.c.l.b16 %v3065
    %v3238 = vunpack.c.h.b16 %v3065
    %v3239 = vunpack.c.l.b16 %v3066
    %v3240 = vunpack.c.h.b16 %v3066
    %v3241 = vunpack.c.l.b16 %v3067
    %v3242 = vunpack.c.h.b16 %v3067
    %v3243 = vunpack.c.l.b16 %v3068
    %v3244 = vunpack.c.h.b16 %v3068
    %v3245 = vunpack.c.l.b16 %v3069
    %v3246 = vunpack.c.h.b16 %v3069
    %v3247 = vunpack.c.l.b16 %v3070
    %v3248 = vunpack.c.h.b16 %v3070
    %v3249 = vunpack.c.l.b16 %v3071
    %v3250 = vunpack.c.h.b16 %v3071
    %v3251 = vunpack.c.l.b16 %v3072
    %v3252 = vunpack.c.h.b16 %v3072
    %v3253 = vunpack.c.l.b16 %v3073
    %v3254 = vunpack.c.h.b16 %v3073
    %v3255 = vunpack.c.l.b16 %v3074
    %v3256 = vunpack.c.h.b16 %v3074
    %v3257 = vunpack.c.l.b16 %v3075
    %v3258 = vunpack.c.h.b16 %v3075
    %v3259 = vunpack.c.l.b16 %v3076
    %v3260 = vunpack.c.h.b16 %v3076
    %v3261 = vunpack.c.l.b16 %v3077
    %v3262 = vunpack.c.h.b16 %v3077
    %v3263 = vunpack.c.l.b16 %v3078
    %v3264 = vunpack.c.h.b16 %v3078
    %v3265 = vunpack.c.l.b16 %v3079
    %v3266 = vunpack.c.h.b16 %v3079
    %v3267 = vunpack.c.l.b16 %v3080
    %v3268 = vunpack.c.h.b16 %v3080
    %v3269 = vunpack.c.l.b16 %v3081
    %v3270 = vunpack.c.h.b16 %v3081
    %v3271 = vunpack.c.l.b16 %v3082
    %v3272 = vunpack.c.h.b16 %v3082
    %v3273 = vunpack.c.l.b16 %v3083
    %v3274 = vunpack.c.h.b16 %v3083
    %v3275 = vunpack.c.l.b16 %v3084
    %v3276 = vunpack.c.h.b16 %v3084
    %v3277 = vpack.c.b16 %v3157, %v3149
    %v3278 = vpack.c.b16 %v3158, %v3150
    %v3279 = vpack.c.b16 %v3159, %v3151
    %v3280 = vpack.c.b16 %v3160, %v3152
    %v3281 = vpack.c.b16 %v3161, %v3153
    %v3282 = vpack.c.b16 %v3162, %v3154
    %v3283 = vpack.c.b16 %v3163, %v3155
    %v3284 = vpack.c.b16 %v3164, %v3156
    %v3285 = vpack.c.b16 %v3173, %v3165
    %v3286 = vpack.c.b16 %v3174, %v3166
    %v3287 = vpack.c.b16 %v3175, %v3167
    %v3288 = vpack.c.b16 %v3176, %v3168
    %v3289 = vpack.c.b16 %v3177, %v3169
    %v3290 = vpack.c.b16 %v3178, %v3170
    %v3291 = vpack.c.b16 %v3179, %v3171
    %v3292 = vpack.c.b16 %v3180, %v3172
    %v3293 = vpack.c.b16 %v3189, %v3181
    %v3294 = vpack.c.b16 %v3190, %v3182
    %v3295 = vpack.c.b16 %v3191, %v3183
    %v3296 = vpack.c.b16 %v3192, %v3184
    %v3297 = vpack.c.b16 %v3193, %v3185
    %v3298 = vpack.c.b16 %v3194, %v3186
    %v3299 = vpack.c.b16 %v3195, %v3187
    %v3300 = vpack.c.b16 %v3196, %v3188
    %v3301 = vpack.c.b16 %v3205, %v3197
    %v3302 = vpack.c.b16 %v3206, %v3198
    %v3303 = vpack.c.b16 %v3207, %v3199
    %v3304 = vpack.c.b16 %v3208, %v3200
    %v3305 = vpack.c.b16 %v3209, %v3201
    %v3306 = vpack.c.b16 %v3210, %v3202
    %v3307 = vpack.c.b16 %v3211, %v3203
    %v3308 = vpack.c.b16 %v3212, %v3204
    %v3309 = vpack.c.b16 %v3221, %v3213
    %v3310 = vpack.c.b16 %v3222, %v3214
    %v3311 = vpack.c.b16 %v3223, %v3215
    %v3312 = vpack.c.b16 %v3224, %v3216
    %v3313 = vpack.c.b16 %v3225, %v3217
    %v3314 = vpack.c.b16 %v3226, %v3218
    %v3315 = vpack.c.b16 %v3227, %v3219
    %v3316 = vpack.c.b16 %v3228, %v3220
    %v3317 = vpack.c.b16 %v3237, %v3229
    %v3318 = vpack.c.b16 %v3238, %v3230
    %v3319 = vpack.c.b16 %v3239, %v3231
    %v3320 = vpack.c.b16 %v3240, %v3232
    %v3321 = vpack.c.b16 %v3241, %v3233
    %v3322 = vpack.c.b16 %v3242, %v3234
    %v3323 = vpack.c.b16 %v3243, %v3235
    %v3324 = vpack.c.b16 %v3244, %v3236
    %v3325 = vpack.c.b16 %v3253, %v3245
    %v3326 = vpack.c.b16 %v3254, %v3246
    %v3327 = vpack.c.b16 %v3255, %v3247
    %v3328 = vpack.c.b16 %v3256, %v3248
    %v3329 = vpack.c.b16 %v3257, %v3249
    %v3330 = vpack.c.b16 %v3258, %v3250
    %v3331 = vpack.c.b16 %v3259, %v3251
    %v3332 = vpack.c.b16 %v3260, %v3252
    %v3333 = vpack.c.b16 %v3269, %v3261
    %v3334 = vpack.c.b16 %v3270, %v3262
    %v3335 = vpack.c.b16 %v3271, %v3263
    %v3336 = vpack.c.b16 %v3272, %v3264
    %v3337 = vpack.c.b16 %v3273, %v3265
    %v3338 = vpack.c.b16 %v3274, %v3266
    %v3339 = vpack.c.b16 %v3275, %v3267
    %v3340 = vpack.c.b16 %v3276, %v3268
    %3405 = vmatprep.subr.bf16.mxu0 %v3278
    %3406 = vmatpush1.bf16.msra.mxu0 %v3277
    %3407 = vmatprep.subr.bf16.mxu0 %v3286
    %3408 = vmatpush1.bf16.msra.mxu0 %v3285
    %3409 = vmatprep.subr.bf16.mxu0 %v3294
    %3410 = vmatpush1.bf16.msra.mxu0 %v3293
    %3411 = vmatprep.subr.bf16.mxu0 %v3302
    %3412 = vmatpush1.bf16.msra.mxu0 %v3301
    %3413 = vmatprep.subr.bf16.mxu0 %v3310
    %3414 = vmatpush1.bf16.msra.mxu0 %v3309
    %3415 = vmatprep.subr.bf16.mxu0 %v3318
    %3416 = vmatpush1.bf16.msra.mxu0 %v3317
    %3417 = vmatprep.subr.bf16.mxu0 %v3326
    %3418 = vmatpush1.bf16.msra.mxu0 %v3325
    %3419 = vmatprep.subr.bf16.mxu0 %v3334
    %3420 = vmatpush1.bf16.msra.mxu0 %v3333
    %3421 = vmatprep.subr.bf16.mxu0 0
    %3422 = vmatpush1.bf16.msra.mxu0 0
    %3423 = vmatprep.subr.bf16.mxu0 0
    %3424 = vmatpush1.bf16.msra.mxu0 0
    %3425 = vmatprep.subr.bf16.mxu0 0
    %3426 = vmatpush1.bf16.msra.mxu0 0
    %3427 = vmatprep.subr.bf16.mxu0 0
    %3428 = vmatpush1.bf16.msra.mxu0 0
    %3429 = vmatprep.subr.bf16.mxu0 0
    %3430 = vmatpush1.bf16.msra.mxu0 0
    %3431 = vmatprep.subr.bf16.mxu0 0
    %3432 = vmatpush1.bf16.msra.mxu0 0
    %3433 = vmatprep.subr.bf16.mxu0 0
    %3434 = vmatpush1.bf16.msra.mxu0 0
    %3435 = vmatprep.subr.bf16.mxu0 0
    %3436 = vmatpush1.bf16.msra.mxu0 0
    %3437 = vmatprep.mubr.bf16.mxu0 0
    %3438 = vmatmul.mubr.bf16.gmra.mrb[0].mxu0 %v3020
    %v3439 = vpop.f32.mrb[0].mxu0
    %v3440 = vadd.f32 0.0, %v3439
    %v3441 = vpop.f32.mrb[0].mxu0
    %v3442 = vadd.f32 0.0, %v3441
    %v3443 = vpop.f32.mrb[0].mxu0
    %v3444 = vpop.f32.mrb[0].mxu0
    %3445 = vdwg.mxu0
    %3446 = vmatprep.subr.bf16.mxu0 %v3280
    %3447 = vmatpush1.bf16.msra.mxu0 %v3279
    %3448 = vmatprep.subr.bf16.mxu0 %v3288
    %3449 = vmatpush1.bf16.msra.mxu0 %v3287
    %3450 = vmatprep.subr.bf16.mxu0 %v3296
    %3451 = vmatpush1.bf16.msra.mxu0 %v3295
    %3452 = vmatprep.subr.bf16.mxu0 %v3304
    %3453 = vmatpush1.bf16.msra.mxu0 %v3303
    %3454 = vmatprep.subr.bf16.mxu0 %v3312
    %3455 = vmatpush1.bf16.msra.mxu0 %v3311
    %3456 = vmatprep.subr.bf16.mxu0 %v3320
    %3457 = vmatpush1.bf16.msra.mxu0 %v3319
    %3458 = vmatprep.subr.bf16.mxu0 %v3328
    %3459 = vmatpush1.bf16.msra.mxu0 %v3327
    %3460 = vmatprep.subr.bf16.mxu0 %v3336
    %3461 = vmatpush1.bf16.msra.mxu0 %v3335
    %3462 = vmatprep.subr.bf16.mxu0 0
    %3463 = vmatpush1.bf16.msra.mxu0 0
    %3464 = vmatprep.subr.bf16.mxu0 0
    %3465 = vmatpush1.bf16.msra.mxu0 0
    %3466 = vmatprep.subr.bf16.mxu0 0
    %3467 = vmatpush1.bf16.msra.mxu0 0
    %3468 = vmatprep.subr.bf16.mxu0 0
    %3469 = vmatpush1.bf16.msra.mxu0 0
    %3470 = vmatprep.subr.bf16.mxu0 0
    %3471 = vmatpush1.bf16.msra.mxu0 0
    %3472 = vmatprep.subr.bf16.mxu0 0
    %3473 = vmatpush1.bf16.msra.mxu0 0
    %3474 = vmatprep.subr.bf16.mxu0 0
    %3475 = vmatpush1.bf16.msra.mxu0 0
    %3476 = vmatprep.subr.bf16.mxu0 0
    %3477 = vmatpush1.bf16.msra.mxu0 0
    %3478 = vmatprep.mubr.bf16.mxu0 0
    %3479 = vmatmul.mubr.bf16.gmra.mrb[0].mxu0 %v3020
    %v3480 = vpop.f32.mrb[0].mxu0
    %v3481 = vadd.f32 0.0, %v3480
    %v3482 = vpop.f32.mrb[0].mxu0
    %v3483 = vadd.f32 0.0, %v3482
    %v3484 = vpop.f32.mrb[0].mxu0
    %v3485 = vpop.f32.mrb[0].mxu0
    %3486 = vdwg.mxu0
    %3487 = vmatprep.subr.bf16.mxu0 %v3282
    %3488 = vmatpush1.bf16.msra.mxu0 %v3281
    %3489 = vmatprep.subr.bf16.mxu0 %v3290
    %3490 = vmatpush1.bf16.msra.mxu0 %v3289
    %3491 = vmatprep.subr.bf16.mxu0 %v3298
    %3492 = vmatpush1.bf16.msra.mxu0 %v3297
    %3493 = vmatprep.subr.bf16.mxu0 %v3306
    %3494 = vmatpush1.bf16.msra.mxu0 %v3305
    %3495 = vmatprep.subr.bf16.mxu0 %v3314
    %3496 = vmatpush1.bf16.msra.mxu0 %v3313
    %3497 = vmatprep.subr.bf16.mxu0 %v3322
    %3498 = vmatpush1.bf16.msra.mxu0 %v3321
    %3499 = vmatprep.subr.bf16.mxu0 %v3330
    %3500 = vmatpush1.bf16.msra.mxu0 %v3329
    %3501 = vmatprep.subr.bf16.mxu0 %v3338
    %3502 = vmatpush1.bf16.msra.mxu0 %v3337
    %3503 = vmatprep.subr.bf16.mxu0 0
    %3504 = vmatpush1.bf16.msra.mxu0 0
    %3505 = vmatprep.subr.bf16.mxu0 0
    %3506 = vmatpush1.bf16.msra.mxu0 0
    %3507 = vmatprep.subr.bf16.mxu0 0
    %3508 = vmatpush1.bf16.msra.mxu0 0
    %3509 = vmatprep.subr.bf16.mxu0 0
    %3510 = vmatpush1.bf16.msra.mxu0 0
    %3511 = vmatprep.subr.bf16.mxu0 0
    %3512 = vmatpush1.bf16.msra.mxu0 0
    %3513 = vmatprep.subr.bf16.mxu0 0
    %3514 = vmatpush1.bf16.msra.mxu0 0
    %3515 = vmatprep.subr.bf16.mxu0 0
    %3516 = vmatpush1.bf16.msra.mxu0 0
    %3517 = vmatprep.subr.bf16.mxu0 0
    %3518 = vmatpush1.bf16.msra.mxu0 0
    %3519 = vmatprep.mubr.bf16.mxu0 0
    %3520 = vmatmul.mubr.bf16.gmra.mrb[0].mxu0 %v3020
    %v3521 = vpop.f32.mrb[0].mxu0
    %v3522 = vadd.f32 0.0, %v3521
    %v3523 = vpop.f32.mrb[0].mxu0
    %v3524 = vadd.f32 0.0, %v3523
    %v3525 = vpop.f32.mrb[0].mxu0
    %v3526 = vpop.f32.mrb[0].mxu0
    %3527 = vdwg.mxu0
    %3528 = vmatprep.subr.bf16.mxu0 %v3284
    %3529 = vmatpush1.bf16.msra.mxu0 %v3283
    %3530 = vmatprep.subr.bf16.mxu0 %v3292
    %3531 = vmatpush1.bf16.msra.mxu0 %v3291
    %3532 = vmatprep.subr.bf16.mxu0 %v3300
    %3533 = vmatpush1.bf16.msra.mxu0 %v3299
    %3534 = vmatprep.subr.bf16.mxu0 %v3308
    %3535 = vmatpush1.bf16.msra.mxu0 %v3307
    %3536 = vmatprep.subr.bf16.mxu0 %v3316
    %3537 = vmatpush1.bf16.msra.mxu0 %v3315
    %3538 = vmatprep.subr.bf16.mxu0 %v3324
    %3539 = vmatpush1.bf16.msra.mxu0 %v3323
    %3540 = vmatprep.subr.bf16.mxu0 %v3332
    %3541 = vmatpush1.bf16.msra.mxu0 %v3331
    %3542 = vmatprep.subr.bf16.mxu0 %v3340
    %3543 = vmatpush1.bf16.msra.mxu0 %v3339
    %3544 = vmatprep.subr.bf16.mxu0 0
    %3545 = vmatpush1.bf16.msra.mxu0 0
    %3546 = vmatprep.subr.bf16.mxu0 0
    %3547 = vmatpush1.bf16.msra.mxu0 0
    %3548 = vmatprep.subr.bf16.mxu0 0
    %3549 = vmatpush1.bf16.msra.mxu0 0
    %3550 = vmatprep.subr.bf16.mxu0 0
    %3551 = vmatpush1.bf16.msra.mxu0 0
    %3552 = vmatprep.subr.bf16.mxu0 0
    %3553 = vmatpush1.bf16.msra.mxu0 0
    %3554 = vmatprep.subr.bf16.mxu0 0
    %3555 = vmatpush1.bf16.msra.mxu0 0
    %3556 = vmatprep.subr.bf16.mxu0 0
    %3557 = vmatpush1.bf16.msra.mxu0 0
    %3558 = vmatprep.subr.bf16.mxu0 0
    %3559 = vmatpush1.bf16.msra.mxu0 0
    %3560 = vmatprep.mubr.bf16.mxu0 0
    %3561 = vmatmul.mubr.bf16.gmra.mrb[0].mxu0 %v3020
    %v3562 = vpop.f32.mrb[0].mxu0
    %v3563 = vadd.f32 0.0, %v3562
    %v3564 = vpop.f32.mrb[0].mxu0
    %v3565 = vadd.f32 0.0, %v3564
    %v3566 = vpop.f32.mrb[0].mxu0
    %v3567 = vpop.f32.mrb[0].mxu0
    %3568 = vdwg.mxu0
    %v3569 = vadd.f32 %v3012, %v3440
    %v3570 = vadd.f32 %v3013, %v3442
    %v3571 = vadd.f32 %v3014, %v3481
    %v3572 = vadd.f32 %v3015, %v3483
    %v3573 = vadd.f32 %v3016, %v3522
    %v3574 = vadd.f32 %v3017, %v3524
    %v3575 = vadd.f32 %v3018, %v3563
    %v3576 = vadd.f32 %v3019, %v3565
    %v3577 = vld [vmem:[#allocation10 + $0xa00] sm:$0xff]
    %v3578 = vld [vmem:[#allocation10 + $0xa08] sm:$0xff]
    %v3579 = vld [vmem:[#allocation10 + $0xa10] sm:$0xff]
    %v3580 = vld [vmem:[#allocation10 + $0xa18] sm:$0xff]
    %v3581 = vld [vmem:[#allocation10 + $0xa20] sm:$0xff]
    %v3582 = vld [vmem:[#allocation10 + $0xa28] sm:$0xff]
    %v3583 = vld [vmem:[#allocation10 + $0xa30] sm:$0xff]
    %v3584 = vld [vmem:[#allocation10 + $0xa38] sm:$0xff]
    %v3585 = vld [vmem:[#allocation10 + $0xa40] sm:$0xff]
    %v3586 = vld [vmem:[#allocation10 + $0xa48] sm:$0xff]
    %v3587 = vld [vmem:[#allocation10 + $0xa50] sm:$0xff]
    %v3588 = vld [vmem:[#allocation10 + $0xa58] sm:$0xff]
    %v3589 = vld [vmem:[#allocation10 + $0xa60] sm:$0xff]
    %v3590 = vld [vmem:[#allocation10 + $0xa68] sm:$0xff]
    %v3591 = vld [vmem:[#allocation10 + $0xa70] sm:$0xff]
    %v3592 = vld [vmem:[#allocation10 + $0xa78] sm:$0xff]
    %v3593 = vld [vmem:[#allocation10 + $0xa80] sm:$0xff]
    %v3594 = vld [vmem:[#allocation10 + $0xa88] sm:$0xff]
    %v3595 = vld [vmem:[#allocation10 + $0xa90] sm:$0xff]
    %v3596 = vld [vmem:[#allocation10 + $0xa98] sm:$0xff]
    %v3597 = vld [vmem:[#allocation10 + $0xaa0] sm:$0xff]
    %v3598 = vld [vmem:[#allocation10 + $0xaa8] sm:$0xff]
    %v3599 = vld [vmem:[#allocation10 + $0xab0] sm:$0xff]
    %v3600 = vld [vmem:[#allocation10 + $0xab8] sm:$0xff]
    %v3601 = vld [vmem:[#allocation10 + $0xac0] sm:$0xff]
    %v3602 = vld [vmem:[#allocation10 + $0xac8] sm:$0xff]
    %v3603 = vld [vmem:[#allocation10 + $0xad0] sm:$0xff]
    %v3604 = vld [vmem:[#allocation10 + $0xad8] sm:$0xff]
    %v3605 = vld [vmem:[#allocation10 + $0xae0] sm:$0xff]
    %v3606 = vld [vmem:[#allocation10 + $0xae8] sm:$0xff]
    %v3607 = vld [vmem:[#allocation10 + $0xaf0] sm:$0xff]
    %v3608 = vld [vmem:[#allocation10 + $0xaf8] sm:$0xff]
    %v3609 = vld [vmem:[#allocation10 + $0xb00] sm:$0xff]
    %v3610 = vld [vmem:[#allocation10 + $0xb08] sm:$0xff]
    %v3611 = vld [vmem:[#allocation10 + $0xb10] sm:$0xff]
    %v3612 = vld [vmem:[#allocation10 + $0xb18] sm:$0xff]
    %v3613 = vld [vmem:[#allocation10 + $0xb20] sm:$0xff]
    %v3614 = vld [vmem:[#allocation10 + $0xb28] sm:$0xff]
    %v3615 = vld [vmem:[#allocation10 + $0xb30] sm:$0xff]
    %v3616 = vld [vmem:[#allocation10 + $0xb38] sm:$0xff]
    %v3617 = vld [vmem:[#allocation10 + $0xb40] sm:$0xff]
    %v3618 = vld [vmem:[#allocation10 + $0xb48] sm:$0xff]
    %v3619 = vld [vmem:[#allocation10 + $0xb50] sm:$0xff]
    %v3620 = vld [vmem:[#allocation10 + $0xb58] sm:$0xff]
    %v3621 = vld [vmem:[#allocation10 + $0xb60] sm:$0xff]
    %v3622 = vld [vmem:[#allocation10 + $0xb68] sm:$0xff]
    %v3623 = vld [vmem:[#allocation10 + $0xb70] sm:$0xff]
    %v3624 = vld [vmem:[#allocation10 + $0xb78] sm:$0xff]
    %v3625 = vld [vmem:[#allocation10 + $0xb80] sm:$0xff]
    %v3626 = vld [vmem:[#allocation10 + $0xb88] sm:$0xff]
    %v3627 = vld [vmem:[#allocation10 + $0xb90] sm:$0xff]
    %v3628 = vld [vmem:[#allocation10 + $0xb98] sm:$0xff]
    %v3629 = vld [vmem:[#allocation10 + $0xba0] sm:$0xff]
    %v3630 = vld [vmem:[#allocation10 + $0xba8] sm:$0xff]
    %v3631 = vld [vmem:[#allocation10 + $0xbb0] sm:$0xff]
    %v3632 = vld [vmem:[#allocation10 + $0xbb8] sm:$0xff]
    %v3633 = vld [vmem:[#allocation10 + $0xbc0] sm:$0xff]
    %v3634 = vld [vmem:[#allocation10 + $0xbc8] sm:$0xff]
    %v3635 = vld [vmem:[#allocation10 + $0xbd0] sm:$0xff]
    %v3636 = vld [vmem:[#allocation10 + $0xbd8] sm:$0xff]
    %v3637 = vld [vmem:[#allocation10 + $0xbe0] sm:$0xff]
    %v3638 = vld [vmem:[#allocation10 + $0xbe8] sm:$0xff]
    %v3639 = vld [vmem:[#allocation10 + $0xbf0] sm:$0xff]
    %v3640 = vld [vmem:[#allocation10 + $0xbf8] sm:$0xff]
    %v3642 = vrot.slane %v3020, 1
    %v3708 = vunpack.c.l.b16 %v3577
    %v3709 = vunpack.c.h.b16 %v3577
    %v3710 = vunpack.c.l.b16 %v3578
    %v3711 = vunpack.c.h.b16 %v3578
    %v3712 = vunpack.c.l.b16 %v3579
    %v3713 = vunpack.c.h.b16 %v3579
    %v3714 = vunpack.c.l.b16 %v3580
    %v3715 = vunpack.c.h.b16 %v3580
    %v3716 = vunpack.c.l.b16 %v3581
    %v3717 = vunpack.c.h.b16 %v3581
    %v3718 = vunpack.c.l.b16 %v3582
    %v3719 = vunpack.c.h.b16 %v3582
    %v3720 = vunpack.c.l.b16 %v3583
    %v3721 = vunpack.c.h.b16 %v3583
    %v3722 = vunpack.c.l.b16 %v3584
    %v3723 = vunpack.c.h.b16 %v3584
    %v3724 = vunpack.c.l.b16 %v3585
    %v3725 = vunpack.c.h.b16 %v3585
    %v3726 = vunpack.c.l.b16 %v3586
    %v3727 = vunpack.c.h.b16 %v3586
    %v3728 = vunpack.c.l.b16 %v3587
    %v3729 = vunpack.c.h.b16 %v3587
    %v3730 = vunpack.c.l.b16 %v3588
    %v3731 = vunpack.c.h.b16 %v3588
    %v3732 = vunpack.c.l.b16 %v3589
    %v3733 = vunpack.c.h.b16 %v3589
    %v3734 = vunpack.c.l.b16 %v3590
    %v3735 = vunpack.c.h.b16 %v3590
    %v3736 = vunpack.c.l.b16 %v3591
    %v3737 = vunpack.c.h.b16 %v3591
    %v3738 = vunpack.c.l.b16 %v3592
    %v3739 = vunpack.c.h.b16 %v3592
    %v3740 = vunpack.c.l.b16 %v3593
    %v3741 = vunpack.c.h.b16 %v3593
    %v3742 = vunpack.c.l.b16 %v3594
    %v3743 = vunpack.c.h.b16 %v3594
    %v3744 = vunpack.c.l.b16 %v3595
    %v3745 = vunpack.c.h.b16 %v3595
    %v3746 = vunpack.c.l.b16 %v3596
    %v3747 = vunpack.c.h.b16 %v3596
    %v3748 = vunpack.c.l.b16 %v3597
    %v3749 = vunpack.c.h.b16 %v3597
    %v3750 = vunpack.c.l.b16 %v3598
    %v3751 = vunpack.c.h.b16 %v3598
    %v3752 = vunpack.c.l.b16 %v3599
    %v3753 = vunpack.c.h.b16 %v3599
    %v3754 = vunpack.c.l.b16 %v3600
    %v3755 = vunpack.c.h.b16 %v3600
    %v3756 = vunpack.c.l.b16 %v3601
    %v3757 = vunpack.c.h.b16 %v3601
    %v3758 = vunpack.c.l.b16 %v3602
    %v3759 = vunpack.c.h.b16 %v3602
    %v3760 = vunpack.c.l.b16 %v3603
    %v3761 = vunpack.c.h.b16 %v3603
    %v3762 = vunpack.c.l.b16 %v3604
    %v3763 = vunpack.c.h.b16 %v3604
    %v3764 = vunpack.c.l.b16 %v3605
    %v3765 = vunpack.c.h.b16 %v3605
    %v3766 = vunpack.c.l.b16 %v3606
    %v3767 = vunpack.c.h.b16 %v3606
    %v3768 = vunpack.c.l.b16 %v3607
    %v3769 = vunpack.c.h.b16 %v3607
    %v3770 = vunpack.c.l.b16 %v3608
    %v3771 = vunpack.c.h.b16 %v3608
    %v3772 = vunpack.c.l.b16 %v3609
    %v3773 = vunpack.c.h.b16 %v3609
    %v3774 = vunpack.c.l.b16 %v3610
    %v3775 = vunpack.c.h.b16 %v3610
    %v3776 = vunpack.c.l.b16 %v3611
    %v3777 = vunpack.c.h.b16 %v3611
    %v3778 = vunpack.c.l.b16 %v3612
    %v3779 = vunpack.c.h.b16 %v3612
    %v3780 = vunpack.c.l.b16 %v3613
    %v3781 = vunpack.c.h.b16 %v3613
    %v3782 = vunpack.c.l.b16 %v3614
    %v3783 = vunpack.c.h.b16 %v3614
    %v3784 = vunpack.c.l.b16 %v3615
    %v3785 = vunpack.c.h.b16 %v3615
    %v3786 = vunpack.c.l.b16 %v3616
    %v3787 = vunpack.c.h.b16 %v3616
    %v3788 = vunpack.c.l.b16 %v3617
    %v3789 = vunpack.c.h.b16 %v3617
    %v3790 = vunpack.c.l.b16 %v3618
    %v3791 = vunpack.c.h.b16 %v3618
    %v3792 = vunpack.c.l.b16 %v3619
    %v3793 = vunpack.c.h.b16 %v3619
    %v3794 = vunpack.c.l.b16 %v3620
    %v3795 = vunpack.c.h.b16 %v3620
    %v3796 = vunpack.c.l.b16 %v3621
    %v3797 = vunpack.c.h.b16 %v3621
    %v3798 = vunpack.c.l.b16 %v3622
    %v3799 = vunpack.c.h.b16 %v3622
    %v3800 = vunpack.c.l.b16 %v3623
    %v3801 = vunpack.c.h.b16 %v3623
    %v3802 = vunpack.c.l.b16 %v3624
    %v3803 = vunpack.c.h.b16 %v3624
    %v3804 = vunpack.c.l.b16 %v3625
    %v3805 = vunpack.c.h.b16 %v3625
    %v3806 = vunpack.c.l.b16 %v3626
    %v3807 = vunpack.c.h.b16 %v3626
    %v3808 = vunpack.c.l.b16 %v3627
    %v3809 = vunpack.c.h.b16 %v3627
    %v3810 = vunpack.c.l.b16 %v3628
    %v3811 = vunpack.c.h.b16 %v3628
    %v3812 = vunpack.c.l.b16 %v3629
    %v3813 = vunpack.c.h.b16 %v3629
    %v3814 = vunpack.c.l.b16 %v3630
    %v3815 = vunpack.c.h.b16 %v3630
    %v3816 = vunpack.c.l.b16 %v3631
    %v3817 = vunpack.c.h.b16 %v3631
    %v3818 = vunpack.c.l.b16 %v3632
    %v3819 = vunpack.c.h.b16 %v3632
    %v3820 = vunpack.c.l.b16 %v3633
    %v3821 = vunpack.c.h.b16 %v3633
    %v3822 = vunpack.c.l.b16 %v3634
    %v3823 = vunpack.c.h.b16 %v3634
    %v3824 = vunpack.c.l.b16 %v3635
    %v3825 = vunpack.c.h.b16 %v3635
    %v3826 = vunpack.c.l.b16 %v3636
    %v3827 = vunpack.c.h.b16 %v3636
    %v3828 = vunpack.c.l.b16 %v3637
    %v3829 = vunpack.c.h.b16 %v3637
    %v3830 = vunpack.c.l.b16 %v3638
    %v3831 = vunpack.c.h.b16 %v3638
    %v3832 = vunpack.c.l.b16 %v3639
    %v3833 = vunpack.c.h.b16 %v3639
    %v3834 = vunpack.c.l.b16 %v3640
    %v3835 = vunpack.c.h.b16 %v3640
    %v3836 = vpack.c.b16 %v3716, %v3708
    %v3837 = vpack.c.b16 %v3717, %v3709
    %v3838 = vpack.c.b16 %v3718, %v3710
    %v3839 = vpack.c.b16 %v3719, %v3711
    %v3840 = vpack.c.b16 %v3720, %v3712
    %v3841 = vpack.c.b16 %v3721, %v3713
    %v3842 = vpack.c.b16 %v3722, %v3714
    %v3843 = vpack.c.b16 %v3723, %v3715
    %v3844 = vpack.c.b16 %v3732, %v3724
    %v3845 = vpack.c.b16 %v3733, %v3725
    %v3846 = vpack.c.b16 %v3734, %v3726
    %v3847 = vpack.c.b16 %v3735, %v3727
    %v3848 = vpack.c.b16 %v3736, %v3728
    %v3849 = vpack.c.b16 %v3737, %v3729
    %v3850 = vpack.c.b16 %v3738, %v3730
    %v3851 = vpack.c.b16 %v3739, %v3731
    %v3852 = vpack.c.b16 %v3748, %v3740
    %v3853 = vpack.c.b16 %v3749, %v3741
    %v3854 = vpack.c.b16 %v3750, %v3742
    %v3855 = vpack.c.b16 %v3751, %v3743
    %v3856 = vpack.c.b16 %v3752, %v3744
    %v3857 = vpack.c.b16 %v3753, %v3745
    %v3858 = vpack.c.b16 %v3754, %v3746
    %v3859 = vpack.c.b16 %v3755, %v3747
    %v3860 = vpack.c.b16 %v3764, %v3756
    %v3861 = vpack.c.b16 %v3765, %v3757
    %v3862 = vpack.c.b16 %v3766, %v3758
    %v3863 = vpack.c.b16 %v3767, %v3759
    %v3864 = vpack.c.b16 %v3768, %v3760
    %v3865 = vpack.c.b16 %v3769, %v3761
    %v3866 = vpack.c.b16 %v3770, %v3762
    %v3867 = vpack.c.b16 %v3771, %v3763
    %v3868 = vpack.c.b16 %v3780, %v3772
    %v3869 = vpack.c.b16 %v3781, %v3773
    %v3870 = vpack.c.b16 %v3782, %v3774
    %v3871 = vpack.c.b16 %v3783, %v3775
    %v3872 = vpack.c.b16 %v3784, %v3776
    %v3873 = vpack.c.b16 %v3785, %v3777
    %v3874 = vpack.c.b16 %v3786, %v3778
    %v3875 = vpack.c.b16 %v3787, %v3779
    %v3876 = vpack.c.b16 %v3796, %v3788
    %v3877 = vpack.c.b16 %v3797, %v3789
    %v3878 = vpack.c.b16 %v3798, %v3790
    %v3879 = vpack.c.b16 %v3799, %v3791
    %v3880 = vpack.c.b16 %v3800, %v3792
    %v3881 = vpack.c.b16 %v3801, %v3793
    %v3882 = vpack.c.b16 %v3802, %v3794
    %v3883 = vpack.c.b16 %v3803, %v3795
    %v3884 = vpack.c.b16 %v3812, %v3804
    %v3885 = vpack.c.b16 %v3813, %v3805
    %v3886 = vpack.c.b16 %v3814, %v3806
    %v3887 = vpack.c.b16 %v3815, %v3807
    %v3888 = vpack.c.b16 %v3816, %v3808
    %v3889 = vpack.c.b16 %v3817, %v3809
    %v3890 = vpack.c.b16 %v3818, %v3810
    %v3891 = vpack.c.b16 %v3819, %v3811
    %v3892 = vpack.c.b16 %v3828, %v3820
    %v3893 = vpack.c.b16 %v3829, %v3821
    %v3894 = vpack.c.b16 %v3830, %v3822
    %v3895 = vpack.c.b16 %v3831, %v3823
    %v3896 = vpack.c.b16 %v3832, %v3824
    %v3897 = vpack.c.b16 %v3833, %v3825
    %v3898 = vpack.c.b16 %v3834, %v3826
    %v3899 = vpack.c.b16 %v3835, %v3827
    %3964 = vmatprep.subr.bf16.mxu0 %v3837
    %3965 = vmatpush1.bf16.msra.mxu0 %v3836
    %3966 = vmatprep.subr.bf16.mxu0 %v3845
    %3967 = vmatpush1.bf16.msra.mxu0 %v3844
    %3968 = vmatprep.subr.bf16.mxu0 %v3853
    %3969 = vmatpush1.bf16.msra.mxu0 %v3852
    %3970 = vmatprep.subr.bf16.mxu0 %v3861
    %3971 = vmatpush1.bf16.msra.mxu0 %v3860
    %3972 = vmatprep.subr.bf16.mxu0 %v3869
    %3973 = vmatpush1.bf16.msra.mxu0 %v3868
    %3974 = vmatprep.subr.bf16.mxu0 %v3877
    %3975 = vmatpush1.bf16.msra.mxu0 %v3876
    %3976 = vmatprep.subr.bf16.mxu0 %v3885
    %3977 = vmatpush1.bf16.msra.mxu0 %v3884
    %3978 = vmatprep.subr.bf16.mxu0 %v3893
    %3979 = vmatpush1.bf16.msra.mxu0 %v3892
    %3980 = vmatprep.subr.bf16.mxu0 0
    %3981 = vmatpush1.bf16.msra.mxu0 0
    %3982 = vmatprep.subr.bf16.mxu0 0
    %3983 = vmatpush1.bf16.msra.mxu0 0
    %3984 = vmatprep.subr.bf16.mxu0 0
    %3985 = vmatpush1.bf16.msra.mxu0 0
    %3986 = vmatprep.subr.bf16.mxu0 0
    %3987 = vmatpush1.bf16.msra.mxu0 0
    %3988 = vmatprep.subr.bf16.mxu0 0
    %3989 = vmatpush1.bf16.msra.mxu0 0
    %3990 = vmatprep.subr.bf16.mxu0 0
    %3991 = vmatpush1.bf16.msra.mxu0 0
    %3992 = vmatprep.subr.bf16.mxu0 0
    %3993 = vmatpush1.bf16.msra.mxu0 0
    %3994 = vmatprep.subr.bf16.mxu0 0
    %3995 = vmatpush1.bf16.msra.mxu0 0
    %3996 = vmatprep.mubr.bf16.mxu0 0
    %3997 = vmatmul.mubr.bf16.gmra.mrb[0].mxu0 %v3642
    %v3998 = vpop.f32.mrb[0].mxu0
    %v3999 = vadd.f32 0.0, %v3998
    %v4000 = vpop.f32.mrb[0].mxu0
    %v4001 = vadd.f32 0.0, %v4000
    %v4002 = vpop.f32.mrb[0].mxu0
    %v4003 = vpop.f32.mrb[0].mxu0
    %4004 = vdwg.mxu0
    %4005 = vmatprep.subr.bf16.mxu0 %v3839
    %4006 = vmatpush1.bf16.msra.mxu0 %v3838
    %4007 = vmatprep.subr.bf16.mxu0 %v3847
    %4008 = vmatpush1.bf16.msra.mxu0 %v3846
    %4009 = vmatprep.subr.bf16.mxu0 %v3855
    %4010 = vmatpush1.bf16.msra.mxu0 %v3854
    %4011 = vmatprep.subr.bf16.mxu0 %v3863
    %4012 = vmatpush1.bf16.msra.mxu0 %v3862
    %4013 = vmatprep.subr.bf16.mxu0 %v3871
    %4014 = vmatpush1.bf16.msra.mxu0 %v3870
    %4015 = vmatprep.subr.bf16.mxu0 %v3879
    %4016 = vmatpush1.bf16.msra.mxu0 %v3878
    %4017 = vmatprep.subr.bf16.mxu0 %v3887
    %4018 = vmatpush1.bf16.msra.mxu0 %v3886
    %4019 = vmatprep.subr.bf16.mxu0 %v3895
    %4020 = vmatpush1.bf16.msra.mxu0 %v3894
    %4021 = vmatprep.subr.bf16.mxu0 0
    %4022 = vmatpush1.bf16.msra.mxu0 0
    %4023 = vmatprep.subr.bf16.mxu0 0
    %4024 = vmatpush1.bf16.msra.mxu0 0
    %4025 = vmatprep.subr.bf16.mxu0 0
    %4026 = vmatpush1.bf16.msra.mxu0 0
    %4027 = vmatprep.subr.bf16.mxu0 0
    %4028 = vmatpush1.bf16.msra.mxu0 0
    %4029 = vmatprep.subr.bf16.mxu0 0
    %4030 = vmatpush1.bf16.msra.mxu0 0
    %4031 = vmatprep.subr.bf16.mxu0 0
    %4032 = vmatpush1.bf16.msra.mxu0 0
    %4033 = vmatprep.subr.bf16.mxu0 0
    %4034 = vmatpush1.bf16.msra.mxu0 0
    %4035 = vmatprep.subr.bf16.mxu0 0
    %4036 = vmatpush1.bf16.msra.mxu0 0
    %4037 = vmatprep.mubr.bf16.mxu0 0
    %4038 = vmatmul.mubr.bf16.gmra.mrb[0].mxu0 %v3642
    %v4039 = vpop.f32.mrb[0].mxu0
    %v4040 = vadd.f32 0.0, %v4039
    %v4041 = vpop.f32.mrb[0].mxu0
    %v4042 = vadd.f32 0.0, %v4041
    %v4043 = vpop.f32.mrb[0].mxu0
    %v4044 = vpop.f32.mrb[0].mxu0
    %4045 = vdwg.mxu0
    %4046 = vmatprep.subr.bf16.mxu0 %v3841
    %4047 = vmatpush1.bf16.msra.mxu0 %v3840
    %4048 = vmatprep.subr.bf16.mxu0 %v3849
    %4049 = vmatpush1.bf16.msra.mxu0 %v3848
    %4050 = vmatprep.subr.bf16.mxu0 %v3857
    %4051 = vmatpush1.bf16.msra.mxu0 %v3856
    %4052 = vmatprep.subr.bf16.mxu0 %v3865
    %4053 = vmatpush1.bf16.msra.mxu0 %v3864
    %4054 = vmatprep.subr.bf16.mxu0 %v3873
    %4055 = vmatpush1.bf16.msra.mxu0 %v3872
    %4056 = vmatprep.subr.bf16.mxu0 %v3881
    %4057 = vmatpush1.bf16.msra.mxu0 %v3880
    %4058 = vmatprep.subr.bf16.mxu0 %v3889
    %4059 = vmatpush1.bf16.msra.mxu0 %v3888
    %4060 = vmatprep.subr.bf16.mxu0 %v3897
    %4061 = vmatpush1.bf16.msra.mxu0 %v3896
    %4062 = vmatprep.subr.bf16.mxu0 0
    %4063 = vmatpush1.bf16.msra.mxu0 0
    %4064 = vmatprep.subr.bf16.mxu0 0
    %4065 = vmatpush1.bf16.msra.mxu0 0
    %4066 = vmatprep.subr.bf16.mxu0 0
    %4067 = vmatpush1.bf16.msra.mxu0 0
    %4068 = vmatprep.subr.bf16.mxu0 0
    %4069 = vmatpush1.bf16.msra.mxu0 0
    %4070 = vmatprep.subr.bf16.mxu0 0
    %4071 = vmatpush1.bf16.msra.mxu0 0
    %4072 = vmatprep.subr.bf16.mxu0 0
    %4073 = vmatpush1.bf16.msra.mxu0 0
    %4074 = vmatprep.subr.bf16.mxu0 0
    %4075 = vmatpush1.bf16.msra.mxu0 0
    %4076 = vmatprep.subr.bf16.mxu0 0
    %4077 = vmatpush1.bf16.msra.mxu0 0
    %4078 = vmatprep.mubr.bf16.mxu0 0
    %4079 = vmatmul.mubr.bf16.gmra.mrb[0].mxu0 %v3642
    %v4080 = vpop.f32.mrb[0].mxu0
    %v4081 = vadd.f32 0.0, %v4080
    %v4082 = vpop.f32.mrb[0].mxu0
    %v4083 = vadd.f32 0.0, %v4082
    %v4084 = vpop.f32.mrb[0].mxu0
    %v4085 = vpop.f32.mrb[0].mxu0
    %4086 = vdwg.mxu0
    %4087 = vmatprep.subr.bf16.mxu0 %v3843
    %4088 = vmatpush1.bf16.msra.mxu0 %v3842
    %4089 = vmatprep.subr.bf16.mxu0 %v3851
    %4090 = vmatpush1.bf16.msra.mxu0 %v3850
    %4091 = vmatprep.subr.bf16.mxu0 %v3859
    %4092 = vmatpush1.bf16.msra.mxu0 %v3858
    %4093 = vmatprep.subr.bf16.mxu0 %v3867
    %4094 = vmatpush1.bf16.msra.mxu0 %v3866
    %4095 = vmatprep.subr.bf16.mxu0 %v3875
    %4096 = vmatpush1.bf16.msra.mxu0 %v3874
    %4097 = vmatprep.subr.bf16.mxu0 %v3883
    %4098 = vmatpush1.bf16.msra.mxu0 %v3882
    %4099 = vmatprep.subr.bf16.mxu0 %v3891
    %4100 = vmatpush1.bf16.msra.mxu0 %v3890
    %4101 = vmatprep.subr.bf16.mxu0 %v3899
    %4102 = vmatpush1.bf16.msra.mxu0 %v3898
    %4103 = vmatprep.subr.bf16.mxu0 0
    %4104 = vmatpush1.bf16.msra.mxu0 0
    %4105 = vmatprep.subr.bf16.mxu0 0
    %4106 = vmatpush1.bf16.msra.mxu0 0
    %4107 = vmatprep.subr.bf16.mxu0 0
    %4108 = vmatpush1.bf16.msra.mxu0 0
    %4109 = vmatprep.subr.bf16.mxu0 0
    %4110 = vmatpush1.bf16.msra.mxu0 0
    %4111 = vmatprep.subr.bf16.mxu0 0
    %4112 = vmatpush1.bf16.msra.mxu0 0
    %4113 = vmatprep.subr.bf16.mxu0 0
    %4114 = vmatpush1.bf16.msra.mxu0 0
    %4115 = vmatprep.subr.bf16.mxu0 0
    %4116 = vmatpush1.bf16.msra.mxu0 0
    %4117 = vmatprep.subr.bf16.mxu0 0
    %4118 = vmatpush1.bf16.msra.mxu0 0
    %4119 = vmatprep.mubr.bf16.mxu0 0
    %4120 = vmatmul.mubr.bf16.gmra.mrb[0].mxu0 %v3642
    %v4121 = vpop.f32.mrb[0].mxu0
    %v4122 = vadd.f32 0.0, %v4121
    %v4123 = vpop.f32.mrb[0].mxu0
    %v4124 = vadd.f32 0.0, %v4123
    %v4125 = vpop.f32.mrb[0].mxu0
    %v4126 = vpop.f32.mrb[0].mxu0
    %4127 = vdwg.mxu0
    %v4128 = vadd.f32 %v3569, %v3999
    %v4129 = vadd.f32 %v3570, %v4001
    %v4130 = vadd.f32 %v3571, %v4040
    %v4131 = vadd.f32 %v3572, %v4042
    %v4132 = vadd.f32 %v3573, %v4081
    %v4133 = vadd.f32 %v3574, %v4083
    %v4134 = vadd.f32 %v3575, %v4122
    %v4135 = vadd.f32 %v3576, %v4124
    %v4136 = vmax.f32 %v4128, 0.0
    %v4137 = vmax.f32 %v4129, 0.0
    %v4138 = vmax.f32 %v4130, 0.0
    %v4139 = vmax.f32 %v4131, 0.0
    %v4140 = vmax.f32 %v4132, 0.0
    %v4141 = vmax.f32 %v4133, 0.0
    %v4142 = vmax.f32 %v4134, 0.0
    %v4143 = vmax.f32 %v4135, 0.0
    %v4144 = vld [vmem:[%s8] sm:$0xff]
    %v4145 = vld [vmem:[%s8 + $0x8] sm:$0xff]
    %v4146 = vld [vmem:[%s8 + $0x10] sm:$0xff]
    %v4147 = vld [vmem:[%s8 + $0x18] sm:$0xff]
    %v4148 = vld [vmem:[%s8 + $0x20] sm:$0xff]
    %v4149 = vld [vmem:[%s8 + $0x28] sm:$0xff]
    %v4150 = vld [vmem:[%s8 + $0x30] sm:$0xff]
    %v4151 = vld [vmem:[%s8 + $0x38] sm:$0xff]
    %v4152 = vld [vmem:[%s8 + $0x40] sm:$0xff]
    %v4153 = vld [vmem:[%s8 + $0x48] sm:$0xff]
    %v4154 = vld [vmem:[%s8 + $0x50] sm:$0xff]
    %v4155 = vld [vmem:[%s8 + $0x58] sm:$0xff]
    %v4156 = vld [vmem:[%s8 + $0x60] sm:$0xff]
    %v4157 = vld [vmem:[%s8 + $0x68] sm:$0xff]
    %v4158 = vld [vmem:[%s8 + $0x70] sm:$0xff]
    %v4159 = vld [vmem:[%s8 + $0x78] sm:$0xff]
    %v4160 = vld [vmem:[%s8 + $0x80] sm:$0xff]
    %v4161 = vld [vmem:[%s8 + $0x88] sm:$0xff]
    %v4162 = vld [vmem:[%s8 + $0x90] sm:$0xff]
    %v4163 = vld [vmem:[%s8 + $0x98] sm:$0xff]
    %v4164 = vld [vmem:[%s8 + $0xa0] sm:$0xff]
    %v4165 = vld [vmem:[%s8 + $0xa8] sm:$0xff]
    %v4166 = vld [vmem:[%s8 + $0xb0] sm:$0xff]
    %v4167 = vld [vmem:[%s8 + $0xb8] sm:$0xff]
    %v4168 = vld [vmem:[%s8 + $0xc0] sm:$0xff]
    %v4169 = vld [vmem:[%s8 + $0xc8] sm:$0xff]
    %v4170 = vld [vmem:[%s8 + $0xd0] sm:$0xff]
    %v4171 = vld [vmem:[%s8 + $0xd8] sm:$0xff]
    %v4172 = vld [vmem:[%s8 + $0xe0] sm:$0xff]
    %v4173 = vld [vmem:[%s8 + $0xe8] sm:$0xff]
    %v4174 = vld [vmem:[%s8 + $0xf0] sm:$0xff]
    %v4175 = vld [vmem:[%s8 + $0xf8] sm:$0xff]
    %v4176 = vld [vmem:[%s8 + $0x100] sm:$0xff]
    %v4177 = vld [vmem:[%s8 + $0x108] sm:$0xff]
    %v4178 = vld [vmem:[%s8 + $0x110] sm:$0xff]
    %v4179 = vld [vmem:[%s8 + $0x118] sm:$0xff]
    %v4180 = vld [vmem:[%s8 + $0x120] sm:$0xff]
    %v4181 = vld [vmem:[%s8 + $0x128] sm:$0xff]
    %v4182 = vld [vmem:[%s8 + $0x130] sm:$0xff]
    %v4183 = vld [vmem:[%s8 + $0x138] sm:$0xff]
    %v4184 = vld [vmem:[%s8 + $0x140] sm:$0xff]
    %v4185 = vld [vmem:[%s8 + $0x148] sm:$0xff]
    %v4186 = vld [vmem:[%s8 + $0x150] sm:$0xff]
    %v4187 = vld [vmem:[%s8 + $0x158] sm:$0xff]
    %v4188 = vld [vmem:[%s8 + $0x160] sm:$0xff]
    %v4189 = vld [vmem:[%s8 + $0x168] sm:$0xff]
    %v4190 = vld [vmem:[%s8 + $0x170] sm:$0xff]
    %v4191 = vld [vmem:[%s8 + $0x178] sm:$0xff]
    %v4192 = vld [vmem:[%s8 + $0x180] sm:$0xff]
    %v4193 = vld [vmem:[%s8 + $0x188] sm:$0xff]
    %v4194 = vld [vmem:[%s8 + $0x190] sm:$0xff]
    %v4195 = vld [vmem:[%s8 + $0x198] sm:$0xff]
    %v4196 = vld [vmem:[%s8 + $0x1a0] sm:$0xff]
    %v4197 = vld [vmem:[%s8 + $0x1a8] sm:$0xff]
    %v4198 = vld [vmem:[%s8 + $0x1b0] sm:$0xff]
    %v4199 = vld [vmem:[%s8 + $0x1b8] sm:$0xff]
    %v4200 = vld [vmem:[%s8 + $0x1c0] sm:$0xff]
    %v4201 = vld [vmem:[%s8 + $0x1c8] sm:$0xff]
    %v4202 = vld [vmem:[%s8 + $0x1d0] sm:$0xff]
    %v4203 = vld [vmem:[%s8 + $0x1d8] sm:$0xff]
    %v4204 = vld [vmem:[%s8 + $0x1e0] sm:$0xff]
    %v4205 = vld [vmem:[%s8 + $0x1e8] sm:$0xff]
    %v4206 = vld [vmem:[%s8 + $0x1f0] sm:$0xff]
    %v4207 = vld [vmem:[%s8 + $0x1f8] sm:$0xff]
    %v4208 = vld [vmem:[%s8 + $0x200] sm:$0xff]
    %v4209 = vld [vmem:[%s8 + $0x208] sm:$0xff]
    %v4210 = vld [vmem:[%s8 + $0x210] sm:$0xff]
    %v4211 = vld [vmem:[%s8 + $0x218] sm:$0xff]
    %v4212 = vld [vmem:[%s8 + $0x220] sm:$0xff]
    %v4213 = vld [vmem:[%s8 + $0x228] sm:$0xff]
    %v4214 = vld [vmem:[%s8 + $0x230] sm:$0xff]
    %v4215 = vld [vmem:[%s8 + $0x238] sm:$0xff]
    %v4216 = vld [vmem:[%s8 + $0x240] sm:$0xff]
    %v4217 = vld [vmem:[%s8 + $0x248] sm:$0xff]
    %v4218 = vld [vmem:[%s8 + $0x250] sm:$0xff]
    %v4219 = vld [vmem:[%s8 + $0x258] sm:$0xff]
    %v4220 = vld [vmem:[%s8 + $0x260] sm:$0xff]
    %v4221 = vld [vmem:[%s8 + $0x268] sm:$0xff]
    %v4222 = vld [vmem:[%s8 + $0x270] sm:$0xff]
    %v4223 = vld [vmem:[%s8 + $0x278] sm:$0xff]
    %v4224 = vld [vmem:[%s8 + $0x280] sm:$0xff]
    %v4225 = vld [vmem:[%s8 + $0x288] sm:$0xff]
    %v4226 = vld [vmem:[%s8 + $0x290] sm:$0xff]
    %v4227 = vld [vmem:[%s8 + $0x298] sm:$0xff]
    %v4228 = vld [vmem:[%s8 + $0x2a0] sm:$0xff]
    %v4229 = vld [vmem:[%s8 + $0x2a8] sm:$0xff]
    %v4230 = vld [vmem:[%s8 + $0x2b0] sm:$0xff]
    %v4231 = vld [vmem:[%s8 + $0x2b8] sm:$0xff]
    %v4232 = vld [vmem:[%s8 + $0x2c0] sm:$0xff]
    %v4233 = vld [vmem:[%s8 + $0x2c8] sm:$0xff]
    %v4234 = vld [vmem:[%s8 + $0x2d0] sm:$0xff]
    %v4235 = vld [vmem:[%s8 + $0x2d8] sm:$0xff]
    %v4236 = vld [vmem:[%s8 + $0x2e0] sm:$0xff]
    %v4237 = vld [vmem:[%s8 + $0x2e8] sm:$0xff]
    %v4238 = vld [vmem:[%s8 + $0x2f0] sm:$0xff]
    %v4239 = vld [vmem:[%s8 + $0x2f8] sm:$0xff]
    %v4240 = vld [vmem:[%s8 + $0x300] sm:$0xff]
    %v4241 = vld [vmem:[%s8 + $0x308] sm:$0xff]
    %v4242 = vld [vmem:[%s8 + $0x310] sm:$0xff]
    %v4243 = vld [vmem:[%s8 + $0x318] sm:$0xff]
    %v4244 = vld [vmem:[%s8 + $0x320] sm:$0xff]
    %v4245 = vld [vmem:[%s8 + $0x328] sm:$0xff]
    %v4246 = vld [vmem:[%s8 + $0x330] sm:$0xff]
    %v4247 = vld [vmem:[%s8 + $0x338] sm:$0xff]
    %v4248 = vld [vmem:[%s8 + $0x340] sm:$0xff]
    %v4249 = vld [vmem:[%s8 + $0x348] sm:$0xff]
    %v4250 = vld [vmem:[%s8 + $0x350] sm:$0xff]
    %v4251 = vld [vmem:[%s8 + $0x358] sm:$0xff]
    %v4252 = vld [vmem:[%s8 + $0x360] sm:$0xff]
    %v4253 = vld [vmem:[%s8 + $0x368] sm:$0xff]
    %v4254 = vld [vmem:[%s8 + $0x370] sm:$0xff]
    %v4255 = vld [vmem:[%s8 + $0x378] sm:$0xff]
    %v4256 = vld [vmem:[%s8 + $0x380] sm:$0xff]
    %v4257 = vld [vmem:[%s8 + $0x388] sm:$0xff]
    %v4258 = vld [vmem:[%s8 + $0x390] sm:$0xff]
    %v4259 = vld [vmem:[%s8 + $0x398] sm:$0xff]
    %v4260 = vld [vmem:[%s8 + $0x3a0] sm:$0xff]
    %v4261 = vld [vmem:[%s8 + $0x3a8] sm:$0xff]
    %v4262 = vld [vmem:[%s8 + $0x3b0] sm:$0xff]
    %v4263 = vld [vmem:[%s8 + $0x3b8] sm:$0xff]
    %v4264 = vld [vmem:[%s8 + $0x3c0] sm:$0xff]
    %v4265 = vld [vmem:[%s8 + $0x3c8] sm:$0xff]
    %v4266 = vld [vmem:[%s8 + $0x3d0] sm:$0xff]
    %v4267 = vld [vmem:[%s8 + $0x3d8] sm:$0xff]
    %v4268 = vld [vmem:[%s8 + $0x3e0] sm:$0xff]
    %v4269 = vld [vmem:[%s8 + $0x3e8] sm:$0xff]
    %v4270 = vld [vmem:[%s8 + $0x3f0] sm:$0xff]
    %v4271 = vld [vmem:[%s8 + $0x3f8] sm:$0xff]
    %v4272 = vld [vmem:[#allocation14] sm:$0x1]
    %v4274 = vlaneseq
    %v4275 = vshrl.u32 %v4274, 7
    %v4276 = vsub.s32 0, %v4275
    %v4277 = vrot.slane %v4272, %v4276
    %4279 = vmatprep.subr.mxu0 0.0
    %4280 = vmatpush1.msra.mxu0 %v4144
    %4281 = vmatprep.subr.mxu0 0.0
    %4282 = vmatpush1.msra.mxu0 %v4145
    %4283 = vmatprep.subr.mxu0 0.0
    %4284 = vmatpush1.msra.mxu0 %v4146
    %4285 = vmatprep.subr.mxu0 0.0
    %4286 = vmatpush1.msra.mxu0 %v4147
    %4287 = vmatprep.subr.mxu0 0.0
    %4288 = vmatpush1.msra.mxu0 %v4148
    %4289 = vmatprep.subr.mxu0 0.0
    %4290 = vmatpush1.msra.mxu0 %v4149
    %4291 = vmatprep.subr.mxu0 0.0
    %4292 = vmatpush1.msra.mxu0 %v4150
    %4293 = vmatprep.subr.mxu0 0.0
    %4294 = vmatpush1.msra.mxu0 %v4151
    %4295 = vmatprep.subr.mxu0 0.0
    %4296 = vmatpush1.msra.mxu0 %v4152
    %4297 = vmatprep.subr.mxu0 0.0
    %4298 = vmatpush1.msra.mxu0 %v4153
    %4299 = vmatprep.subr.mxu0 0.0
    %4300 = vmatpush1.msra.mxu0 %v4154
    %4301 = vmatprep.subr.mxu0 0.0
    %4302 = vmatpush1.msra.mxu0 %v4155
    %4303 = vmatprep.subr.mxu0 0.0
    %4304 = vmatpush1.msra.mxu0 %v4156
    %4305 = vmatprep.subr.mxu0 0.0
    %4306 = vmatpush1.msra.mxu0 %v4157
    %4307 = vmatprep.subr.mxu0 0.0
    %4308 = vmatpush1.msra.mxu0 %v4158
    %4309 = vmatprep.subr.mxu0 0.0
    %4310 = vmatpush1.msra.mxu0 %v4159
    %4311 = vmatprep.subr.mxu0 0.0
    %4312 = vmatpush1.msra.mxu0 %v4160
    %4313 = vmatprep.subr.mxu0 0.0
    %4314 = vmatpush1.msra.mxu0 %v4161
    %4315 = vmatprep.subr.mxu0 0.0
    %4316 = vmatpush1.msra.mxu0 %v4162
    %4317 = vmatprep.subr.mxu0 0.0
    %4318 = vmatpush1.msra.mxu0 %v4163
    %4319 = vmatprep.subr.mxu0 0.0
    %4320 = vmatpush1.msra.mxu0 %v4164
    %4321 = vmatprep.subr.mxu0 0.0
    %4322 = vmatpush1.msra.mxu0 %v4165
    %4323 = vmatprep.subr.mxu0 0.0
    %4324 = vmatpush1.msra.mxu0 %v4166
    %4325 = vmatprep.subr.mxu0 0.0
    %4326 = vmatpush1.msra.mxu0 %v4167
    %4327 = vmatprep.subr.mxu0 0.0
    %4328 = vmatpush1.msra.mxu0 %v4168
    %4329 = vmatprep.subr.mxu0 0.0
    %4330 = vmatpush1.msra.mxu0 %v4169
    %4331 = vmatprep.subr.mxu0 0.0
    %4332 = vmatpush1.msra.mxu0 %v4170
    %4333 = vmatprep.subr.mxu0 0.0
    %4334 = vmatpush1.msra.mxu0 %v4171
    %4335 = vmatprep.subr.mxu0 0.0
    %4336 = vmatpush1.msra.mxu0 %v4172
    %4337 = vmatprep.subr.mxu0 0.0
    %4338 = vmatpush1.msra.mxu0 %v4173
    %4339 = vmatprep.subr.mxu0 0.0
    %4340 = vmatpush1.msra.mxu0 %v4174
    %4341 = vmatprep.subr.mxu0 0.0
    %4342 = vmatpush1.msra.mxu0 %v4175
    %4343 = vmatprep.mubr.f32.mxu0 %v4137
    %4344 = vmatmul.mubr.f32.gmra.mrb[0].mxu0 %v4136
    %v4345 = vpop.f32.mrb[0].mxu0
    %v4346 = vadd.f32 %v4277, %v4345
    %v4347 = vpop.f32.mrb[0].mxu0
    %4348 = vdwg.mxu0
    %4349 = vmatprep.subr.mxu0 0.0
    %4350 = vmatpush1.msra.mxu0 %v4176
    %4351 = vmatprep.subr.mxu0 0.0
    %4352 = vmatpush1.msra.mxu0 %v4177
    %4353 = vmatprep.subr.mxu0 0.0
    %4354 = vmatpush1.msra.mxu0 %v4178
    %4355 = vmatprep.subr.mxu0 0.0
    %4356 = vmatpush1.msra.mxu0 %v4179
    %4357 = vmatprep.subr.mxu0 0.0
    %4358 = vmatpush1.msra.mxu0 %v4180
    %4359 = vmatprep.subr.mxu0 0.0
    %4360 = vmatpush1.msra.mxu0 %v4181
    %4361 = vmatprep.subr.mxu0 0.0
    %4362 = vmatpush1.msra.mxu0 %v4182
    %4363 = vmatprep.subr.mxu0 0.0
    %4364 = vmatpush1.msra.mxu0 %v4183
    %4365 = vmatprep.subr.mxu0 0.0
    %4366 = vmatpush1.msra.mxu0 %v4184
    %4367 = vmatprep.subr.mxu0 0.0
    %4368 = vmatpush1.msra.mxu0 %v4185
    %4369 = vmatprep.subr.mxu0 0.0
    %4370 = vmatpush1.msra.mxu0 %v4186
    %4371 = vmatprep.subr.mxu0 0.0
    %4372 = vmatpush1.msra.mxu0 %v4187
    %4373 = vmatprep.subr.mxu0 0.0
    %4374 = vmatpush1.msra.mxu0 %v4188
    %4375 = vmatprep.subr.mxu0 0.0
    %4376 = vmatpush1.msra.mxu0 %v4189
    %4377 = vmatprep.subr.mxu0 0.0
    %4378 = vmatpush1.msra.mxu0 %v4190
    %4379 = vmatprep.subr.mxu0 0.0
    %4380 = vmatpush1.msra.mxu0 %v4191
    %4381 = vmatprep.subr.mxu0 0.0
    %4382 = vmatpush1.msra.mxu0 %v4192
    %4383 = vmatprep.subr.mxu0 0.0
    %4384 = vmatpush1.msra.mxu0 %v4193
    %4385 = vmatprep.subr.mxu0 0.0
    %4386 = vmatpush1.msra.mxu0 %v4194
    %4387 = vmatprep.subr.mxu0 0.0
    %4388 = vmatpush1.msra.mxu0 %v4195
    %4389 = vmatprep.subr.mxu0 0.0
    %4390 = vmatpush1.msra.mxu0 %v4196
    %4391 = vmatprep.subr.mxu0 0.0
    %4392 = vmatpush1.msra.mxu0 %v4197
    %4393 = vmatprep.subr.mxu0 0.0
    %4394 = vmatpush1.msra.mxu0 %v4198
    %4395 = vmatprep.subr.mxu0 0.0
    %4396 = vmatpush1.msra.mxu0 %v4199
    %4397 = vmatprep.subr.mxu0 0.0
    %4398 = vmatpush1.msra.mxu0 %v4200
    %4399 = vmatprep.subr.mxu0 0.0
    %4400 = vmatpush1.msra.mxu0 %v4201
    %4401 = vmatprep.subr.mxu0 0.0
    %4402 = vmatpush1.msra.mxu0 %v4202
    %4403 = vmatprep.subr.mxu0 0.0
    %4404 = vmatpush1.msra.mxu0 %v4203
    %4405 = vmatprep.subr.mxu0 0.0
    %4406 = vmatpush1.msra.mxu0 %v4204
    %4407 = vmatprep.subr.mxu0 0.0
    %4408 = vmatpush1.msra.mxu0 %v4205
    %4409 = vmatprep.subr.mxu0 0.0
    %4410 = vmatpush1.msra.mxu0 %v4206
    %4411 = vmatprep.subr.mxu0 0.0
    %4412 = vmatpush1.msra.mxu0 %v4207
    %4413 = vmatprep.mubr.f32.mxu0 %v4139
    %4414 = vmatmul.mubr.f32.gmra.mrb[0].mxu0 %v4138
    %v4415 = vpop.f32.mrb[0].mxu0
    %v4416 = vadd.f32 %v4346, %v4415
    %v4417 = vpop.f32.mrb[0].mxu0
    %4418 = vdwg.mxu0
    %4419 = vmatprep.subr.mxu0 0.0
    %4420 = vmatpush1.msra.mxu0 %v4208
    %4421 = vmatprep.subr.mxu0 0.0
    %4422 = vmatpush1.msra.mxu0 %v4209
    %4423 = vmatprep.subr.mxu0 0.0
    %4424 = vmatpush1.msra.mxu0 %v4210
    %4425 = vmatprep.subr.mxu0 0.0
    %4426 = vmatpush1.msra.mxu0 %v4211
    %4427 = vmatprep.subr.mxu0 0.0
    %4428 = vmatpush1.msra.mxu0 %v4212
    %4429 = vmatprep.subr.mxu0 0.0
    %4430 = vmatpush1.msra.mxu0 %v4213
    %4431 = vmatprep.subr.mxu0 0.0
    %4432 = vmatpush1.msra.mxu0 %v4214
    %4433 = vmatprep.subr.mxu0 0.0
    %4434 = vmatpush1.msra.mxu0 %v4215
    %4435 = vmatprep.subr.mxu0 0.0
    %4436 = vmatpush1.msra.mxu0 %v4216
    %4437 = vmatprep.subr.mxu0 0.0
    %4438 = vmatpush1.msra.mxu0 %v4217
    %4439 = vmatprep.subr.mxu0 0.0
    %4440 = vmatpush1.msra.mxu0 %v4218
    %4441 = vmatprep.subr.mxu0 0.0
    %4442 = vmatpush1.msra.mxu0 %v4219
    %4443 = vmatprep.subr.mxu0 0.0
    %4444 = vmatpush1.msra.mxu0 %v4220
    %4445 = vmatprep.subr.mxu0 0.0
    %4446 = vmatpush1.msra.mxu0 %v4221
    %4447 = vmatprep.subr.mxu0 0.0
    %4448 = vmatpush1.msra.mxu0 %v4222
    %4449 = vmatprep.subr.mxu0 0.0
    %4450 = vmatpush1.msra.mxu0 %v4223
    %4451 = vmatprep.subr.mxu0 0.0
    %4452 = vmatpush1.msra.mxu0 %v4224
    %4453 = vmatprep.subr.mxu0 0.0
    %4454 = vmatpush1.msra.mxu0 %v4225
    %4455 = vmatprep.subr.mxu0 0.0
    %4456 = vmatpush1.msra.mxu0 %v4226
    %4457 = vmatprep.subr.mxu0 0.0
    %4458 = vmatpush1.msra.mxu0 %v4227
    %4459 = vmatprep.subr.mxu0 0.0
    %4460 = vmatpush1.msra.mxu0 %v4228
    %4461 = vmatprep.subr.mxu0 0.0
    %4462 = vmatpush1.msra.mxu0 %v4229
    %4463 = vmatprep.subr.mxu0 0.0
    %4464 = vmatpush1.msra.mxu0 %v4230
    %4465 = vmatprep.subr.mxu0 0.0
    %4466 = vmatpush1.msra.mxu0 %v4231
    %4467 = vmatprep.subr.mxu0 0.0
    %4468 = vmatpush1.msra.mxu0 %v4232
    %4469 = vmatprep.subr.mxu0 0.0
    %4470 = vmatpush1.msra.mxu0 %v4233
    %4471 = vmatprep.subr.mxu0 0.0
    %4472 = vmatpush1.msra.mxu0 %v4234
    %4473 = vmatprep.subr.mxu0 0.0
    %4474 = vmatpush1.msra.mxu0 %v4235
    %4475 = vmatprep.subr.mxu0 0.0
    %4476 = vmatpush1.msra.mxu0 %v4236
    %4477 = vmatprep.subr.mxu0 0.0
    %4478 = vmatpush1.msra.mxu0 %v4237
    %4479 = vmatprep.subr.mxu0 0.0
    %4480 = vmatpush1.msra.mxu0 %v4238
    %4481 = vmatprep.subr.mxu0 0.0
    %4482 = vmatpush1.msra.mxu0 %v4239
    %4483 = vmatprep.mubr.f32.mxu0 %v4141
    %4484 = vmatmul.mubr.f32.gmra.mrb[0].mxu0 %v4140
    %v4485 = vpop.f32.mrb[0].mxu0
    %v4486 = vadd.f32 %v4416, %v4485
    %v4487 = vpop.f32.mrb[0].mxu0
    %4488 = vdwg.mxu0
    %4489 = vmatprep.subr.mxu0 0.0
    %4490 = vmatpush1.msra.mxu0 %v4240
    %4491 = vmatprep.subr.mxu0 0.0
    %4492 = vmatpush1.msra.mxu0 %v4241
    %4493 = vmatprep.subr.mxu0 0.0
    %4494 = vmatpush1.msra.mxu0 %v4242
    %4495 = vmatprep.subr.mxu0 0.0
    %4496 = vmatpush1.msra.mxu0 %v4243
    %4497 = vmatprep.subr.mxu0 0.0
    %4498 = vmatpush1.msra.mxu0 %v4244
    %4499 = vmatprep.subr.mxu0 0.0
    %4500 = vmatpush1.msra.mxu0 %v4245
    %4501 = vmatprep.subr.mxu0 0.0
    %4502 = vmatpush1.msra.mxu0 %v4246
    %4503 = vmatprep.subr.mxu0 0.0
    %4504 = vmatpush1.msra.mxu0 %v4247
    %4505 = vmatprep.subr.mxu0 0.0
    %4506 = vmatpush1.msra.mxu0 %v4248
    %4507 = vmatprep.subr.mxu0 0.0
    %4508 = vmatpush1.msra.mxu0 %v4249
    %4509 = vmatprep.subr.mxu0 0.0
    %4510 = vmatpush1.msra.mxu0 %v4250
    %4511 = vmatprep.subr.mxu0 0.0
    %4512 = vmatpush1.msra.mxu0 %v4251
    %4513 = vmatprep.subr.mxu0 0.0
    %4514 = vmatpush1.msra.mxu0 %v4252
    %4515 = vmatprep.subr.mxu0 0.0
    %4516 = vmatpush1.msra.mxu0 %v4253
    %4517 = vmatprep.subr.mxu0 0.0
    %4518 = vmatpush1.msra.mxu0 %v4254
    %4519 = vmatprep.subr.mxu0 0.0
    %4520 = vmatpush1.msra.mxu0 %v4255
    %4521 = vmatprep.subr.mxu0 0.0
    %4522 = vmatpush1.msra.mxu0 %v4256
    %4523 = vmatprep.subr.mxu0 0.0
    %4524 = vmatpush1.msra.mxu0 %v4257
    %4525 = vmatprep.subr.mxu0 0.0
    %4526 = vmatpush1.msra.mxu0 %v4258
    %4527 = vmatprep.subr.mxu0 0.0
    %4528 = vmatpush1.msra.mxu0 %v4259
    %4529 = vmatprep.subr.mxu0 0.0
    %4530 = vmatpush1.msra.mxu0 %v4260
    %4531 = vmatprep.subr.mxu0 0.0
    %4532 = vmatpush1.msra.mxu0 %v4261
    %4533 = vmatprep.subr.mxu0 0.0
    %4534 = vmatpush1.msra.mxu0 %v4262
    %4535 = vmatprep.subr.mxu0 0.0
    %4536 = vmatpush1.msra.mxu0 %v4263
    %4537 = vmatprep.subr.mxu0 0.0
    %4538 = vmatpush1.msra.mxu0 %v4264
    %4539 = vmatprep.subr.mxu0 0.0
    %4540 = vmatpush1.msra.mxu0 %v4265
    %4541 = vmatprep.subr.mxu0 0.0
    %4542 = vmatpush1.msra.mxu0 %v4266
    %4543 = vmatprep.subr.mxu0 0.0
    %4544 = vmatpush1.msra.mxu0 %v4267
    %4545 = vmatprep.subr.mxu0 0.0
    %4546 = vmatpush1.msra.mxu0 %v4268
    %4547 = vmatprep.subr.mxu0 0.0
    %4548 = vmatpush1.msra.mxu0 %v4269
    %4549 = vmatprep.subr.mxu0 0.0
    %4550 = vmatpush1.msra.mxu0 %v4270
    %4551 = vmatprep.subr.mxu0 0.0
    %4552 = vmatpush1.msra.mxu0 %v4271
    %4553 = vmatprep.mubr.f32.mxu0 %v4143
    %4554 = vmatmul.mubr.f32.gmra.mrb[0].mxu0 %v4142
    %v4555 = vpop.f32.mrb[0].mxu0
    %v4556 = vadd.f32 %v4486, %v4555
    %v4557 = vpop.f32.mrb[0].mxu0
    %4558 = vdwg.mxu0
    %4560 = vrot.lane.b32.xlu0 %v4556, 127
    %v4561 = vpop.permute.xlu0 %4560
    %vm4563 = vcmask 17408
    %v4564 = vsel %vm4563, %v4561, 0.0
    %4565 = vadd.xlane.f32.xlu0 %v4564
    %v4566 = vpop.xlane.xlu0 %4565
    %v4567 = vrcp.pop 3.0
    %v4568 = vmul.f32 %v4566, %v4567
    %v4569 = vsub.f32 %v4556, %v4568
    %4570 = vset.pattern.permute.xlu0 0
    %4571 = vperm.xlu0 %4570, %v4556
    %v4572 = vpop.permute.xlu0 %4571
    %v4574 = vadd.f32 %v4572, %v4569
    %4576 = vrot.lane.b32.xlu0 %v4574, 127
    %v4577 = vpop.permute.xlu0 %4576
    %4579 = vst.msk [vmem:[#allocation16] sm:$0x3] %vm4563, %v4577
    // Predicated region
    $region82: #{dqn_conv2d_forward.1} parent=1 // pred_check
      _
    $region83: #{dqn_conv2d_forward.1} parent=1 // pred_check_branch
      %4581 = sbr.rel (0) target = $region85
    $region84: #{dqn_conv2d_forward.1} parent=1 // pred_region
      %s4583 = ssub.s32 32, 32
      %4584 = vsyncadd [#allocation4], %s4583
      %s4586 = sshll.u32 [#allocation16], 4
      %s4587 = int_to_ptr.vmem [resolvable:$true] %s4586
      %4589 = dma.vmem_to_hbm [thread:$0]  %s4587, 32, %s12, [#allocation4]
    $region85: #{dqn_conv2d_forward.1} parent=1 // pred_fallthru
      _
    // Predicated region
    $region86: #{dqn_conv2d_forward.1} parent=1 // pred_check
      _
    $region87: #{dqn_conv2d_forward.1} parent=1 // pred_check_branch
      %4591 = sbr.rel (0) target = $region89
    $region88: #{dqn_conv2d_forward.1} parent=1 // pred_region
      %4592 = dma.done [#allocation4], 32
    $region89: #{dqn_conv2d_forward.1} parent=1 // pred_fallthru
      _
    %4593 = vsyncpa [#allocation3], 1
    %4594 = vsyncpa [#allocation6], 1
    %4595 = vsyncpa [#allocation9], 1
    %4596 = vsyncpa [#allocation12], 1
    %4597 = vsyncpa [#allocation15], 1
    %4598 = vsyncpa [#allocation4], 1

</llo_original>
